<compile_context>
chip_gen: v5e
topology: v5e:2x2
jax: 0.10.0
libtpu: 0.0.40
codegen_flags: <defaults>
</compile_context>

<pallas_src>
import functools
import math

import jax
import jax.numpy as jnp
from jax.experimental import pallas as pl
from jax.experimental.pallas import tpu as pltpu


OCTUPLE = 8


# ------------------------- in-kernel helpers (pure functions on values) -------------------------

def _gelu(x):
    # TODO(synk): fairseq uses the exact erf GELU; tanh approximation kept here
    # (small ~1e-3 drift, EUP-friendly on TPU).
    return 0.5 * x * (1.0 + jnp.tanh(0.7978845608028654 * (x + 0.044715 * x * x * x)))


def _layernorm(x, g, b, eps):
    mu = jnp.mean(x, axis=-1, keepdims=True)
    var = jnp.mean(jnp.square(x - mu), axis=-1, keepdims=True)
    return (x - mu) * jax.lax.rsqrt(var + eps) * g + b


# ------------------------- Pallas kernels -------------------------

def embed_kernel(emb8_ref, down_w_ref, down_b_ref, pos_ref, g_ref, b_ref, o_ref, *, eps):
    # Octuple compression: (G, 8H) bf16 @ (8H, H) bf16 -> f32, + bias + pos, LN.
    x = jnp.dot(emb8_ref[...], down_w_ref[...], preferred_element_type=jnp.float32)
    x = x + down_b_ref[...] + pos_ref[...]
    o_ref[...] = _layernorm(x, g_ref[...], b_ref[...], eps)


def encoder_stack_kernel(x_ref, wqkv_ref, bqkv_ref, wo_ref, bo_ref,
                         ln1_g_ref, ln1_b_ref,
                         fc1_w_ref, fc1_b_ref, fc2_w_ref, fc2_b_ref,
                         ln2_g_ref, ln2_b_ref,
                         o_ref, res_ref, *, num_heads, eps):
    # One grid step == one fully fused post-LN transformer layer.  The residual
    # stream lives in a persistent VMEM scratch across the layer grid axis.
    l = pl.program_id(0)

    @pl.when(l == 0)
    def _():
        res_ref[...] = x_ref[...]

    x = res_ref[...]                                   # (G, H) f32 residual stream
    G, H = x.shape
    hd = H // num_heads
    scale = 1.0 / math.sqrt(hd)

    xb = x.astype(jnp.bfloat16)
    qkv = jnp.dot(xb, wqkv_ref[...], preferred_element_type=jnp.float32) + bqkv_ref[...]

    # Per-head attention; each head's context is folded straight into the
    # matching hd-row slab of Wo (no lane concat of head outputs).
    # TODO(synk): for long sequences switch to a flash-style K-tiled online
    # softmax so only one K-tile of scores is live per head.
    dn = (((1,), (1,)), ((), ()))                      # contract last dims, no batch
    attn = jnp.zeros((G, H), jnp.float32)
    for h in range(num_heads):
        lo = h * hd
        qh = qkv[:, lo:lo + hd].astype(jnp.bfloat16)
        kh = qkv[:, H + lo:H + lo + hd].astype(jnp.bfloat16)
        vh = qkv[:, 2 * H + lo:2 * H + lo + hd].astype(jnp.bfloat16)
        s = jax.lax.dot_general(qh, kh, dn, preferred_element_type=jnp.float32) * scale
        m = jnp.max(s, axis=-1, keepdims=True)
        p = jnp.exp(s - m)                                              # f32 softmax
        p = p * pl.reciprocal(jnp.sum(p, axis=-1, keepdims=True), approx=True)
        ctx = jnp.dot(p.astype(jnp.bfloat16), vh, preferred_element_type=jnp.float32)
        attn = attn + jnp.dot(ctx.astype(jnp.bfloat16), wo_ref[lo:lo + hd, :],
                              preferred_element_type=jnp.float32)

    x = _layernorm(x + attn + bo_ref[...], ln1_g_ref[...], ln1_b_ref[...], eps)

    h1 = jnp.dot(x.astype(jnp.bfloat16), fc1_w_ref[...],
                 preferred_element_type=jnp.float32) + fc1_b_ref[...]
    h1 = _gelu(h1)
    h2 = jnp.dot(h1.astype(jnp.bfloat16), fc2_w_ref[...],
                 preferred_element_type=jnp.float32) + fc2_b_ref[...]
    x = _layernorm(x + h2, ln2_g_ref[...], ln2_b_ref[...], eps)

    res_ref[...] = x

    @pl.when(l == pl.num_programs(0) - 1)
    def _():
        o_ref[...] = x


def lm_head_kernel(x_ref, up_w_ref, up_b_ref, dw_ref, db_ref,
                   g_ref, b_ref, ow_ref, ob_ref, o_ref, *, eps):
    # Fused octuple up-projection + LM head (dense + GELU + LN + tied projection).
    # Per group tile, each octuple position j uses the j-th H-column slab of up_w;
    # logits for position j land in o_ref[:, j, :] (lane-dense V columns).
    xb = x_ref[...].astype(jnp.bfloat16)               # (tg, H)
    H = xb.shape[1]
    for j in range(OCTUPLE):
        up = jnp.dot(xb, up_w_ref[:, j * H:(j + 1) * H],
                     preferred_element_type=jnp.float32) + up_b_ref[:, j * H:(j + 1) * H]
        h = jnp.dot(up.astype(jnp.bfloat16), dw_ref[...],
                    preferred_element_type=jnp.float32) + db_ref[...]
        h = _layernorm(_gelu(h), g_ref[...], b_ref[...], eps)
        o_ref[:, j, :] = (jnp.dot(h.astype(jnp.bfloat16), ow_ref[...],
                                  preferred_element_type=jnp.float32) + ob_ref[...])


# ------------------------- Pallas wrappers -------------------------

def _full_spec(shape):
    n = len(shape)
    return pl.BlockSpec(shape, lambda *_: (0,) * n)


def _nbytes(*arrs):
    return int(sum(a.size * a.dtype.itemsize for a in arrs))


def _pick_group_tile(g):
    # Largest group tile that divides G (single-TC friendly: fewer grid steps,
    # bigger lane/sublane-dense blocks).  TODO(synk): on v7x (2 TensorCores)
    # prefer >=2 tiles so the "parallel" axis shards across cores, and add a
    # vocab-column grid axis at real vocab sizes to bound VMEM.
    for t in (128, 64, 32, 16, 8, 4, 2, 1):
        if t <= g and g % t == 0:
            return t
    return g


def embed_stage(emb8, down_w, down_b, pos, g, b, eps=1e-5):
    G, H = pos.shape
    args = (emb8, down_w, down_b, pos, g, b)
    return pl.pallas_call(
        functools.partial(embed_kernel, eps=eps),
        out_shape=jax.ShapeDtypeStruct((G, H), jnp.float32),
        grid=(1,),
        in_specs=[_full_spec(a.shape) for a in args],
        out_specs=_full_spec((G, H)),
        compiler_params=pltpu.CompilerParams(dimension_semantics=("arbitrary",)),
    )(*args)


def encoder_stack(x, lp, num_heads, eps=1e-5):
    G, H = x.shape
    L = lp["wqkv"].shape[0]
    F = lp["fc1_w"].shape[-1]

    names = ("wqkv", "bqkv", "wo", "bo", "ln1_g", "ln1_b",
             "fc1_w", "fc1_b", "fc2_w", "fc2_b", "ln2_g", "ln2_b")
    args = (x,) + tuple(lp[n] for n in names)

    def stacked_spec(a):
        # Leading dim is the layer axis: squeeze it out, index it by the grid step.
        return pl.BlockSpec((None,) + a.shape[1:], lambda l: (l, 0, 0))

    in_specs = [pl.BlockSpec((G, H), lambda l: (0, 0))] + [stacked_spec(lp[n]) for n in names]

    # Rough scheduler hints + an explicit VMEM budget (double-buffered per-layer
    # weights + live activations + slack), clamped for the 64 MiB v7x part.
    per_layer_w_bytes = int(sum(lp[n].size // L * lp[n].dtype.itemsize for n in names))
    act_bytes = G * (6 * H + 2 * F) * 4
    vmem_bytes = int(min(48 * 2**20, max(32 * 2**20,
                                         2 * per_layer_w_bytes + 2 * act_bytes + (4 << 20))))
    flops_layer = 2 * G * H * 3 * H + 4 * G * G * H + 2 * G * H * H + 4 * G * H * F
    cost = pl.CostEstimate(
        flops=int(L * flops_layer),
        transcendentals=int(L * (num_heads * G * G + G * F)),
        bytes_accessed=_nbytes(*args) + G * H * 4,
    )

    return pl.pallas_call(
        functools.partial(encoder_stack_kernel, num_heads=num_heads, eps=eps),
        out_shape=jax.ShapeDtypeStruct((G, H), jnp.float32),
        grid=(L,),
        in_specs=in_specs,
        out_specs=pl.BlockSpec((G, H), lambda l: (0, 0)),
        scratch_shapes=[pltpu.VMEM((G, H), jnp.float32)],
        compiler_params=pltpu.CompilerParams(
            dimension_semantics=("arbitrary",),
            vmem_limit_bytes=vmem_bytes,
        ),
        cost_estimate=cost,
    )(*args)


def lm_head_stage(x, up_w, up_b, dw, db, g, b, ow, ob, eps=1e-5):
    G, H = x.shape
    V = ow.shape[1]
    tg = _pick_group_tile(G)

    args = (x, up_w, up_b, dw, db, g, b, ow, ob)
    cost = pl.CostEstimate(
        flops=int(G * OCTUPLE * (4 * H * H + 2 * H * V)),
        transcendentals=int(G * OCTUPLE * H),
        bytes_accessed=_nbytes(*args) + G * OCTUPLE * V * 4,
    )

    out = pl.pallas_call(
        functools.partial(lm_head_kernel, eps=eps),
        out_shape=jax.ShapeDtypeStruct((G, OCTUPLE, V), jnp.float32),
        grid=(G // tg,),
        in_specs=[
            pl.BlockSpec((tg, H), lambda i: (i, 0)),
            _full_spec(up_w.shape), _full_spec(up_b.shape),
            _full_spec(dw.shape), _full_spec(db.shape),
            _full_spec(g.shape), _full_spec(b.shape),
            _full_spec(ow.shape), _full_spec(ob.shape),
        ],
        out_specs=pl.BlockSpec((tg, OCTUPLE, V), lambda i: (i, 0, 0)),
        compiler_params=pltpu.CompilerParams(dimension_semantics=("parallel",)),
        cost_estimate=cost,
    )(*args)
    # (G, 8, V) -> (S, V): merges leading dims only, layout-trivial (sublane/lane
    # tiling of the last two dims is unchanged).
    return out.reshape(G * OCTUPLE, V)


# ------------------------- Model (glue in plain JAX) -------------------------

@functools.partial(jax.jit, static_argnames=("num_heads",))
def musicbert_forward(params, src_tokens, *, num_heads):
    B, S = src_tokens.shape
    assert B == 1 and S % OCTUPLE == 0, "octuple encoding requires seq_len % 8 == 0"
    G = S // OCTUPLE
    H = params["pos_emb"].shape[1]

    # TODO(synk): data-dependent embedding gather kept in plain XLA; could be
    # fused into embed_stage via PrefetchScalarGridSpec + per-row DMA gather.
    emb = jnp.take(params["embed_tokens"], src_tokens[0], axis=0)      # (S, H) bf16
    emb8 = emb.reshape(G, OCTUPLE * H)                                 # octuple pack

    # Fused: down-projection + positional embedding + embedding layernorm.
    x = embed_stage(emb8, params["down_w"], params["down_b"],
                    params["pos_emb"][:G], params["emb_ln_g"], params["emb_ln_b"])

    # Whole encoder stack as one pallas_call with grid over layers.
    x = encoder_stack(x, params["layers"], num_heads)

    # Fused octuple up-projection + LM head with tied (pre-transposed) weights.
    logits = lm_head_stage(x, params["up_w"], params["up_b"],
                           params["lm_dense_w"], params["lm_dense_b"],
                           params["lm_ln_g"], params["lm_ln_b"],
                           params["lm_out_w"], params["lm_out_b"])
    return logits[None]                                                # (1, S, V)


def init_params(key, *, vocab, hidden, ffn, layers, max_groups):
    H, F, L = hidden, ffn, layers
    keys = iter(jax.random.split(key, 64))

    def nrm(shape, scale=0.02):
        return scale * jax.random.normal(next(keys), shape, dtype=jnp.float32)

    def bf(x):
        return x.astype(jnp.bfloat16)

    embed = nrm((vocab, H))
    params = {
        # Weights feeding the MXU are stored in bf16; biases/LN params in f32,
        # pre-reshaped to (1, N) once at init.
        "embed_tokens": bf(embed),
        "lm_out_w": bf(embed.T),            # tied LM weights, pre-transposed once
        "pos_emb": nrm((max_groups, H)),
        "down_w": bf(nrm((OCTUPLE * H, H))), "down_b": jnp.zeros((1, H), jnp.float32),
        "emb_ln_g": jnp.ones((1, H), jnp.float32), "emb_ln_b": jnp.zeros((1, H), jnp.float32),
        "up_w": bf(nrm((H, OCTUPLE * H))), "up_b": jnp.zeros((1, OCTUPLE * H), jnp.float32),
        "lm_dense_w": bf(nrm((H, H))), "lm_dense_b": jnp.zeros((1, H), jnp.float32),
        "lm_ln_g": jnp.ones((1, H), jnp.float32), "lm_ln_b": jnp.zeros((1, H), jnp.float32),
        "lm_out_b": jnp.zeros((1, vocab), jnp.float32),
        # Stacked per-layer params (leading dim = L) consumed by the grid-over-L kernel.
        "layers": {
            "wqkv": bf(nrm((L, H, 3 * H))), "bqkv": jnp.zeros((L, 1, 3 * H), jnp.float32),
            "wo": bf(nrm((L, H, H))), "bo": jnp.zeros((L, 1, H), jnp.float32),
            "ln1_g": jnp.ones((L, 1, H), jnp.float32), "ln1_b": jnp.zeros((L, 1, H), jnp.float32),
            "fc1_w": bf(nrm((L, H, F))), "fc1_b": jnp.zeros((L, 1, F), jnp.float32),
            "fc2_w": bf(nrm((L, F, H))), "fc2_b": jnp.zeros((L, 1, H), jnp.float32),
            "ln2_g": jnp.ones((L, 1, H), jnp.float32), "ln2_b": jnp.zeros((L, 1, H), jnp.float32),
        },
    }
    return params


# ------------------------- Standalone wrapper (mirrors the PyTorch module) -------------------------

class SimpleDictionary:
    def __init__(self, symbols):
        self.symbols = list(symbols)
        self._idx = {s: i for i, s in enumerate(self.symbols)}
        self.unk_index = self._idx["<unk>"]

    def index(self, token):
        return self._idx.get(token, self.unk_index)


class StandaloneMusicBERTModel:
    """JAX/Pallas re-implementation of the PyTorch StandaloneMusicBERTModel forward."""

    def __init__(self, params, dictionary, num_heads):
        self.params = params
        self.dictionary = dictionary
        self.num_heads = num_heads

    def __call__(self, grouped_input_tokens):
        token_ids = []
        for token_group in grouped_input_tokens:
            if len(token_group) != 8:
                raise ValueError("Each token group must contain exactly 8 tokens.")
            group_ids = [self.dictionary.index(token) for token in token_group]
            token_ids.extend(group_ids)
        input_tensor = jnp.asarray(token_ids, dtype=jnp.int32)[None, :]   # src_tokens (1, S)
        return musicbert_forward(self.params, input_tensor, num_heads=self.num_heads)


if __name__ == "__main__":
    VOCAB, HIDDEN, FFN, LAYERS, HEADS, MAX_GROUPS = 128, 128, 256, 2, 4, 16

    symbols = ["<s>", "<pad>", "</s>", "<unk>"] + [f"tok_{i}" for i in range(VOCAB - 4)]
    dictionary = SimpleDictionary(symbols)

    params = init_params(jax.random.PRNGKey(0), vocab=VOCAB, hidden=HIDDEN,
                         ffn=FFN, layers=LAYERS, max_groups=MAX_GROUPS)
    model = StandaloneMusicBERTModel(params, dictionary, num_heads=HEADS)

    # 8 octuple groups of 8 symbolic tokens each -> src_tokens of shape (1, 64).
    grouped_input_tokens = [
        [f"tok_{(3 * g + j) % (VOCAB - 4)}" for j in range(8)] for g in range(8)
    ]

    out = model(grouped_input_tokens)          # (1, 64, VOCAB) vocab logits per token
    jax.block_until_ready(out)
    assert out.shape == (1, 64, VOCAB)
    assert bool(jnp.all(jnp.isfinite(out)))
    print("KERNEL_OK")
</pallas_src>

<mosaic_0001>
module attributes {stable_mosaic.version = 11 : i64} {
  func.func @embed_kernel(%arg0: i32, %arg1: memref<8x1024xbf16, #tpu.memory_space<vmem>>, %arg2: memref<1024x128xbf16, #tpu.memory_space<vmem>>, %arg3: memref<1x128xf32, #tpu.memory_space<vmem>>, %arg4: memref<8x128xf32, #tpu.memory_space<vmem>>, %arg5: memref<1x128xf32, #tpu.memory_space<vmem>>, %arg6: memref<1x128xf32, #tpu.memory_space<vmem>>, %arg7: memref<8x128xf32, #tpu.memory_space<vmem>>) attributes {dimension_semantics = [#tpu.dimension_semantics<arbitrary>], iteration_bounds = array<i64: 1>, scalar_prefetch = 0 : i64, scratch_operands = 0 : i64, tpu.core_type = #tpu.core_type<tc>, window_params = [{pipeline_mode = #tpu.pipeline_mode<synchronous>, transform_indices = @transform_0, window_bounds = array<i64: 8, 1024>}, {pipeline_mode = #tpu.pipeline_mode<synchronous>, transform_indices = @transform_1, window_bounds = array<i64: 1024, 128>}, {pipeline_mode = #tpu.pipeline_mode<synchronous>, transform_indices = @transform_2, window_bounds = array<i64: 1, 128>}, {pipeline_mode = #tpu.pipeline_mode<synchronous>, transform_indices = @transform_3, window_bounds = array<i64: 8, 128>}, {pipeline_mode = #tpu.pipeline_mode<synchronous>, transform_indices = @transform_4, window_bounds = array<i64: 1, 128>}, {pipeline_mode = #tpu.pipeline_mode<synchronous>, transform_indices = @transform_5, window_bounds = array<i64: 1, 128>}, {pipeline_mode = #tpu.pipeline_mode<synchronous>, transform_indices = @transform_6, window_bounds = array<i64: 8, 128>}]} {
    %c0 = arith.constant 0 : index
    %c0_0 = arith.constant 0 : index
    %0 = vector.load %arg1[%c0, %c0_0] : memref<8x1024xbf16, #tpu.memory_space<vmem>>, vector<8x1024xbf16>
    %c0_1 = arith.constant 0 : index
    %c0_2 = arith.constant 0 : index
    %1 = vector.load %arg2[%c0_1, %c0_2] : memref<1024x128xbf16, #tpu.memory_space<vmem>>, vector<1024x128xbf16>
    %cst = arith.constant dense<0.000000e+00> : vector<8x128xf32>
    %2 = tpu.matmul %0, %1, %cst {dimension_numbers = #tpu.dot_dimension_numbers<[1], [0], [0], [1], [0, 0, 1, 1], [], []>} : vector<8x1024xbf16>, vector<1024x128xbf16>, vector<8x128xf32> -> vector<8x128xf32>
    %c0_3 = arith.constant 0 : index
    %c0_4 = arith.constant 0 : index
    %3 = vector.load %arg3[%c0_3, %c0_4] : memref<1x128xf32, #tpu.memory_space<vmem>>, vector<1x128xf32>
    %4 = vector.broadcast %3 : vector<1x128xf32> to vector<8x128xf32>
    %5 = arith.addf %2, %4 : vector<8x128xf32>
    %c0_5 = arith.constant 0 : index
    %c0_6 = arith.constant 0 : index
    %6 = vector.load %arg4[%c0_5, %c0_6] : memref<8x128xf32, #tpu.memory_space<vmem>>, vector<8x128xf32>
    %7 = arith.addf %5, %6 : vector<8x128xf32>
    %c0_7 = arith.constant 0 : index
    %c0_8 = arith.constant 0 : index
    %8 = vector.load %arg5[%c0_7, %c0_8] : memref<1x128xf32, #tpu.memory_space<vmem>>, vector<1x128xf32>
    %c0_9 = arith.constant 0 : index
    %c0_10 = arith.constant 0 : index
    %9 = vector.load %arg6[%c0_9, %c0_10] : memref<1x128xf32, #tpu.memory_space<vmem>>, vector<1x128xf32>
    %cst_11 = arith.constant dense<0.000000e+00> : vector<8xf32>
    %10 = vector.multi_reduction <add>, %7, %cst_11 [1] : vector<8x128xf32> to vector<8xf32>
    %11 = vector.shape_cast %10 : vector<8xf32> to vector<8x1xf32>
    %cst_12 = arith.constant 1.280000e+02 : f32
    %12 = vector.broadcast %cst_12 : f32 to vector<8x1xf32>
    %13 = arith.divf %11, %12 : vector<8x1xf32>
    %14 = vector.broadcast %13 : vector<8x1xf32> to vector<8x128xf32>
    %15 = arith.subf %7, %14 : vector<8x128xf32>
    %16 = arith.mulf %15, %15 : vector<8x128xf32>
    %cst_13 = arith.constant dense<0.000000e+00> : vector<8xf32>
    %17 = vector.multi_reduction <add>, %16, %cst_13 [1] : vector<8x128xf32> to vector<8xf32>
    %18 = vector.shape_cast %17 : vector<8xf32> to vector<8x1xf32>
    %cst_14 = arith.constant 1.280000e+02 : f32
    %19 = vector.broadcast %cst_14 : f32 to vector<8x1xf32>
    %20 = arith.divf %18, %19 : vector<8x1xf32>
    %21 = vector.broadcast %13 : vector<8x1xf32> to vector<8x128xf32>
    %22 = arith.subf %7, %21 : vector<8x128xf32>
    %cst_15 = arith.constant 9.99999974E-6 : f32
    %23 = vector.broadcast %cst_15 : f32 to vector<8x1xf32>
    %24 = arith.addf %20, %23 : vector<8x1xf32>
    %25 = math.rsqrt %24 : vector<8x1xf32>
    %26 = vector.broadcast %25 : vector<8x1xf32> to vector<8x128xf32>
    %27 = arith.mulf %22, %26 : vector<8x128xf32>
    %28 = vector.broadcast %8 : vector<1x128xf32> to vector<8x128xf32>
    %29 = arith.mulf %27, %28 : vector<8x128xf32>
    %30 = vector.broadcast %9 : vector<1x128xf32> to vector<8x128xf32>
    %31 = arith.addf %29, %30 : vector<8x128xf32>
    %c0_16 = arith.constant 0 : index
    %c0_17 = arith.constant 0 : index
    %32 = vector.load %arg7[%c0_16, %c0_17] : memref<8x128xf32, #tpu.memory_space<vmem>>, vector<8x128xf32>
    tpu.vector_store %arg7[%c0_16, %c0_17], %31 {strides = array<i32>} : memref<8x128xf32, #tpu.memory_space<vmem>>, vector<8x128xf32>,
    return
  }
  func.func @transform_0(%arg0: i32) -> (i32, i32) {
    %c0_i32 = arith.constant 0 : i32
    %c0_i32_0 = arith.constant 0 : i32
    %c0_i32_1 = arith.constant 0 : i32
    return %c0_i32, %c0_i32_0 : i32, i32
  }
  func.func @transform_1(%arg0: i32) -> (i32, i32) {
    %c0_i32 = arith.constant 0 : i32
    %c0_i32_0 = arith.constant 0 : i32
    %c0_i32_1 = arith.constant 0 : i32
    return %c0_i32, %c0_i32_0 : i32, i32
  }
  func.func @transform_2(%arg0: i32) -> (i32, i32) {
    %c0_i32 = arith.constant 0 : i32
    %c0_i32_0 = arith.constant 0 : i32
    %c0_i32_1 = arith.constant 0 : i32
    return %c0_i32, %c0_i32_0 : i32, i32
  }
  func.func @transform_3(%arg0: i32) -> (i32, i32) {
    %c0_i32 = arith.constant 0 : i32
    %c0_i32_0 = arith.constant 0 : i32
    %c0_i32_1 = arith.constant 0 : i32
    return %c0_i32, %c0_i32_0 : i32, i32
  }
  func.func @transform_4(%arg0: i32) -> (i32, i32) {
    %c0_i32 = arith.constant 0 : i32
    %c0_i32_0 = arith.constant 0 : i32
    %c0_i32_1 = arith.constant 0 : i32
    return %c0_i32, %c0_i32_0 : i32, i32
  }
  func.func @transform_5(%arg0: i32) -> (i32, i32) {
    %c0_i32 = arith.constant 0 : i32
    %c0_i32_0 = arith.constant 0 : i32
    %c0_i32_1 = arith.constant 0 : i32
    return %c0_i32, %c0_i32_0 : i32, i32
  }
  func.func @transform_6(%arg0: i32) -> (i32, i32) {
    %c0_i32 = arith.constant 0 : i32
    %c0_i32_0 = arith.constant 0 : i32
    %c0_i32_1 = arith.constant 0 : i32
    return %c0_i32, %c0_i32_0 : i32, i32
  }
}

module attributes {stable_mosaic.version = 11 : i64} {
  func.func @lm_head_kernel(%arg0: i32, %arg1: memref<8x128xf32, #tpu.memory_space<vmem>>, %arg2: memref<128x1024xbf16, #tpu.memory_space<vmem>>, %arg3: memref<1x1024xf32, #tpu.memory_space<vmem>>, %arg4: memref<128x128xbf16, #tpu.memory_space<vmem>>, %arg5: memref<1x128xf32, #tpu.memory_space<vmem>>, %arg6: memref<1x128xf32, #tpu.memory_space<vmem>>, %arg7: memref<1x128xf32, #tpu.memory_space<vmem>>, %arg8: memref<128x128xbf16, #tpu.memory_space<vmem>>, %arg9: memref<1x128xf32, #tpu.memory_space<vmem>>, %arg10: memref<8x8x128xf32, #tpu.memory_space<vmem>>) attributes {dimension_semantics = [#tpu.dimension_semantics<parallel>], iteration_bounds = array<i64: 1>, scalar_prefetch = 0 : i64, scratch_operands = 0 : i64, tpu.core_type = #tpu.core_type<tc>, window_params = [{transform_indices = @transform_0, window_bounds = array<i64: 8, 128>}, {pipeline_mode = #tpu.pipeline_mode<synchronous>, transform_indices = @transform_1, window_bounds = array<i64: 128, 1024>}, {pipeline_mode = #tpu.pipeline_mode<synchronous>, transform_indices = @transform_2, window_bounds = array<i64: 1, 1024>}, {pipeline_mode = #tpu.pipeline_mode<synchronous>, transform_indices = @transform_3, window_bounds = array<i64: 128, 128>}, {pipeline_mode = #tpu.pipeline_mode<synchronous>, transform_indices = @transform_4, window_bounds = array<i64: 1, 128>}, {pipeline_mode = #tpu.pipeline_mode<synchronous>, transform_indices = @transform_5, window_bounds = array<i64: 1, 128>}, {pipeline_mode = #tpu.pipeline_mode<synchronous>, transform_indices = @transform_6, window_bounds = array<i64: 1, 128>}, {pipeline_mode = #tpu.pipeline_mode<synchronous>, transform_indices = @transform_7, window_bounds = array<i64: 128, 128>}, {pipeline_mode = #tpu.pipeline_mode<synchronous>, transform_indices = @transform_8, window_bounds = array<i64: 1, 128>}, {transform_indices = @transform_9, window_bounds = array<i64: 8, 8, 128>}]} {
    %c0 = arith.constant 0 : index
    %c0_0 = arith.constant 0 : index
    %0 = vector.load %arg1[%c0, %c0_0] : memref<8x128xf32, #tpu.memory_space<vmem>>, vector<8x128xf32>
    %1 = arith.truncf %0 : vector<8x128xf32> to vector<8x128xbf16>
    %c0_1 = arith.constant 0 : index
    %c0_2 = arith.constant 0 : index
    %2 = vector.load %arg2[%c0_1, %c0_2] : memref<128x1024xbf16, #tpu.memory_space<vmem>>, vector<128x128xbf16>
    %cst = arith.constant dense<0.000000e+00> : vector<8x128xf32>
    %3 = tpu.matmul %1, %2, %cst {dimension_numbers = #tpu.dot_dimension_numbers<[1], [0], [0], [1], [0, 0, 1, 1], [], []>} : vector<8x128xbf16>, vector<128x128xbf16>, vector<8x128xf32> -> vector<8x128xf32>
    %c0_3 = arith.constant 0 : index
    %c0_4 = arith.constant 0 : index
    %4 = vector.load %arg3[%c0_3, %c0_4] : memref<1x1024xf32, #tpu.memory_space<vmem>>, vector<1x128xf32>
    %5 = vector.broadcast %4 : vector<1x128xf32> to vector<8x128xf32>
    %6 = arith.addf %3, %5 : vector<8x128xf32>
    %7 = arith.truncf %6 : vector<8x128xf32> to vector<8x128xbf16>
    %c0_5 = arith.constant 0 : index
    %c0_6 = arith.constant 0 : index
    %8 = vector.load %arg4[%c0_5, %c0_6] : memref<128x128xbf16, #tpu.memory_space<vmem>>, vector<128x128xbf16>
    %cst_7 = arith.constant dense<0.000000e+00> : vector<8x128xf32>
    %9 = tpu.matmul %7, %8, %cst_7 {dimension_numbers = #tpu.dot_dimension_numbers<[1], [0], [0], [1], [0, 0, 1, 1], [], []>} : vector<8x128xbf16>, vector<128x128xbf16>, vector<8x128xf32> -> vector<8x128xf32>
    %c0_8 = arith.constant 0 : index
    %c0_9 = arith.constant 0 : index
    %10 = vector.load %arg5[%c0_8, %c0_9] : memref<1x128xf32, #tpu.memory_space<vmem>>, vector<1x128xf32>
    %11 = vector.broadcast %10 : vector<1x128xf32> to vector<8x128xf32>
    %12 = arith.addf %9, %11 : vector<8x128xf32>
    %cst_10 = arith.constant 5.000000e-01 : f32
    %13 = vector.broadcast %cst_10 : f32 to vector<8x128xf32>
    %14 = arith.mulf %13, %12 : vector<8x128xf32>
    %cst_11 = arith.constant 4.471500e-02 : f32
    %15 = vector.broadcast %cst_11 : f32 to vector<8x128xf32>
    %16 = arith.mulf %15, %12 : vector<8x128xf32>
    %17 = arith.mulf %16, %12 : vector<8x128xf32>
    %18 = arith.mulf %17, %12 : vector<8x128xf32>
    %19 = arith.addf %12, %18 : vector<8x128xf32>
    %cst_12 = arith.constant 0.797884583 : f32
    %20 = vector.broadcast %cst_12 : f32 to vector<8x128xf32>
    %21 = arith.mulf %20, %19 : vector<8x128xf32>
    %22 = math.tanh %21 : vector<8x128xf32>
    %cst_13 = arith.constant 1.000000e+00 : f32
    %23 = vector.broadcast %cst_13 : f32 to vector<8x128xf32>
    %24 = arith.addf %23, %22 : vector<8x128xf32>
    %25 = arith.mulf %14, %24 : vector<8x128xf32>
    %c0_14 = arith.constant 0 : index
    %c0_15 = arith.constant 0 : index
    %26 = vector.load %arg6[%c0_14, %c0_15] : memref<1x128xf32, #tpu.memory_space<vmem>>, vector<1x128xf32>
    %c0_16 = arith.constant 0 : index
    %c0_17 = arith.constant 0 : index
    %27 = vector.load %arg7[%c0_16, %c0_17] : memref<1x128xf32, #tpu.memory_space<vmem>>, vector<1x128xf32>
    %cst_18 = arith.constant dense<0.000000e+00> : vector<8xf32>
    %28 = vector.multi_reduction <add>, %25, %cst_18 [1] : vector<8x128xf32> to vector<8xf32>
    %29 = vector.shape_cast %28 : vector<8xf32> to vector<8x1xf32>
    %cst_19 = arith.constant 1.280000e+02 : f32
    %30 = vector.broadcast %cst_19 : f32 to vector<8x1xf32>
    %31 = arith.divf %29, %30 : vector<8x1xf32>
    %32 = vector.broadcast %31 : vector<8x1xf32> to vector<8x128xf32>
    %33 = arith.subf %25, %32 : vector<8x128xf32>
    %34 = arith.mulf %33, %33 : vector<8x128xf32>
    %cst_20 = arith.constant dense<0.000000e+00> : vector<8xf32>
    %35 = vector.multi_reduction <add>, %34, %cst_20 [1] : vector<8x128xf32> to vector<8xf32>
    %36 = vector.shape_cast %35 : vector<8xf32> to vector<8x1xf32>
    %cst_21 = arith.constant 1.280000e+02 : f32
    %37 = vector.broadcast %cst_21 : f32 to vector<8x1xf32>
    %38 = arith.divf %36, %37 : vector<8x1xf32>
    %39 = vector.broadcast %31 : vector<8x1xf32> to vector<8x128xf32>
    %40 = arith.subf %25, %39 : vector<8x128xf32>
    %cst_22 = arith.constant 9.99999974E-6 : f32
    %41 = vector.broadcast %cst_22 : f32 to vector<8x1xf32>
    %42 = arith.addf %38, %41 : vector<8x1xf32>
    %43 = math.rsqrt %42 : vector<8x1xf32>
    %44 = vector.broadcast %43 : vector<8x1xf32> to vector<8x128xf32>
    %45 = arith.mulf %40, %44 : vector<8x128xf32>
    %46 = vector.broadcast %26 : vector<1x128xf32> to vector<8x128xf32>
    %47 = arith.mulf %45, %46 : vector<8x128xf32>
    %48 = vector.broadcast %27 : vector<1x128xf32> to vector<8x128xf32>
    %49 = arith.addf %47, %48 : vector<8x128xf32>
    %50 = arith.truncf %49 : vector<8x128xf32> to vector<8x128xbf16>
    %c0_23 = arith.constant 0 : index
    %c0_24 = arith.constant 0 : index
    %51 = vector.load %arg8[%c0_23, %c0_24] : memref<128x128xbf16, #tpu.memory_space<vmem>>, vector<128x128xbf16>
    %cst_25 = arith.constant dense<0.000000e+00> : vector<8x128xf32>
    %52 = tpu.matmul %50, %51, %cst_25 {dimension_numbers = #tpu.dot_dimension_numbers<[1], [0], [0], [1], [0, 0, 1, 1], [], []>} : vector<8x128xbf16>, vector<128x128xbf16>, vector<8x128xf32> -> vector<8x128xf32>
    %c0_26 = arith.constant 0 : index
    %c0_27 = arith.constant 0 : index
    %53 = vector.load %arg9[%c0_26, %c0_27] : memref<1x128xf32, #tpu.memory_space<vmem>>, vector<1x128xf32>
    %54 = vector.broadcast %53 : vector<1x128xf32> to vector<8x128xf32>
    %55 = arith.addf %52, %54 : vector<8x128xf32>
    %c0_28 = arith.constant 0 : index
    %c0_29 = arith.constant 0 : index
    %c0_30 = arith.constant 0 : index
    %56 = vector.load %arg10[%c0_28, %c0_29, %c0_30] : memref<8x8x128xf32, #tpu.memory_space<vmem>>, vector<8x1x128xf32>
    %57 = vector.shape_cast %56 : vector<8x1x128xf32> to vector<8x128xf32>
    %58 = vector.shape_cast %55 : vector<8x128xf32> to vector<8x1x128xf32>
    tpu.vector_store %arg10[%c0_28, %c0_29, %c0_30], %58 {strides = array<i32>} : memref<8x8x128xf32, #tpu.memory_space<vmem>>, vector<8x1x128xf32>,
    %c0_31 = arith.constant 0 : index
    %c128 = arith.constant 128 : index
    %59 = vector.load %arg2[%c0_31, %c128] : memref<128x1024xbf16, #tpu.memory_space<vmem>>, vector<128x128xbf16>
    %cst_32 = arith.constant dense<0.000000e+00> : vector<8x128xf32>
    %60 = tpu.matmul %1, %59, %cst_32 {dimension_numbers = #tpu.dot_dimension_numbers<[1], [0], [0], [1], [0, 0, 1, 1], [], []>} : vector<8x128xbf16>, vector<128x128xbf16>, vector<8x128xf32> -> vector<8x128xf32>
    %c0_33 = arith.constant 0 : index
    %c128_34 = arith.constant 128 : index
    %61 = vector.load %arg3[%c0_33, %c128_34] : memref<1x1024xf32, #tpu.memory_space<vmem>>, vector<1x128xf32>
    %62 = vector.broadcast %61 : vector<1x128xf32> to vector<8x128xf32>
    %63 = arith.addf %60, %62 : vector<8x128xf32>
    %64 = arith.truncf %63 : vector<8x128xf32> to vector<8x128xbf16>
    %c0_35 = arith.constant 0 : index
    %c0_36 = arith.constant 0 : index
    %65 = vector.load %arg4[%c0_35, %c0_36] : memref<128x128xbf16, #tpu.memory_space<vmem>>, vector<128x128xbf16>
    %cst_37 = arith.constant dense<0.000000e+00> : vector<8x128xf32>
    %66 = tpu.matmul %64, %65, %cst_37 {dimension_numbers = #tpu.dot_dimension_numbers<[1], [0], [0], [1], [0, 0, 1, 1], [], []>} : vector<8x128xbf16>, vector<128x128xbf16>, vector<8x128xf32> -> vector<8x128xf32>
    %c0_38 = arith.constant 0 : index
    %c0_39 = arith.constant 0 : index
    %67 = vector.load %arg5[%c0_38, %c0_39] : memref<1x128xf32, #tpu.memory_space<vmem>>, vector<1x128xf32>
    %68 = vector.broadcast %67 : vector<1x128xf32> to vector<8x128xf32>
    %69 = arith.addf %66, %68 : vector<8x128xf32>
    %cst_40 = arith.constant 5.000000e-01 : f32
    %70 = vector.broadcast %cst_40 : f32 to vector<8x128xf32>
    %71 = arith.mulf %70, %69 : vector<8x128xf32>
    %cst_41 = arith.constant 4.471500e-02 : f32
    %72 = vector.broadcast %cst_41 : f32 to vector<8x128xf32>
    %73 = arith.mulf %72, %69 : vector<8x128xf32>
    %74 = arith.mulf %73, %69 : vector<8x128xf32>
    %75 = arith.mulf %74, %69 : vector<8x128xf32>
    %76 = arith.addf %69, %75 : vector<8x128xf32>
    %cst_42 = arith.constant 0.797884583 : f32
    %77 = vector.broadcast %cst_42 : f32 to vector<8x128xf32>
    %78 = arith.mulf %77, %76 : vector<8x128xf32>
    %79 = math.tanh %78 : vector<8x128xf32>
    %cst_43 = arith.constant 1.000000e+00 : f32
    %80 = vector.broadcast %cst_43 : f32 to vector<8x128xf32>
    %81 = arith.addf %80, %79 : vector<8x128xf32>
    %82 = arith.mulf %71, %81 : vector<8x128xf32>
    %c0_44 = arith.constant 0 : index
    %c0_45 = arith.constant 0 : index
    %83 = vector.load %arg6[%c0_44, %c0_45] : memref<1x128xf32, #tpu.memory_space<vmem>>, vector<1x128xf32>
    %c0_46 = arith.constant 0 : index
    %c0_47 = arith.constant 0 : index
    %84 = vector.load %arg7[%c0_46, %c0_47] : memref<1x128xf32, #tpu.memory_space<vmem>>, vector<1x128xf32>
    %cst_48 = arith.constant dense<0.000000e+00> : vector<8xf32>
    %85 = vector.multi_reduction <add>, %82, %cst_48 [1] : vector<8x128xf32> to vector<8xf32>
    %86 = vector.shape_cast %85 : vector<8xf32> to vector<8x1xf32>
    %cst_49 = arith.constant 1.280000e+02 : f32
    %87 = vector.broadcast %cst_49 : f32 to vector<8x1xf32>
    %88 = arith.divf %86, %87 : vector<8x1xf32>
    %89 = vector.broadcast %88 : vector<8x1xf32> to vector<8x128xf32>
    %90 = arith.subf %82, %89 : vector<8x128xf32>
    %91 = arith.mulf %90, %90 : vector<8x128xf32>
    %cst_50 = arith.constant dense<0.000000e+00> : vector<8xf32>
    %92 = vector.multi_reduction <add>, %91, %cst_50 [1] : vector<8x128xf32> to vector<8xf32>
    %93 = vector.shape_cast %92 : vector<8xf32> to vector<8x1xf32>
    %cst_51 = arith.constant 1.280000e+02 : f32
    %94 = vector.broadcast %cst_51 : f32 to vector<8x1xf32>
    %95 = arith.divf %93, %94 : vector<8x1xf32>
    %96 = vector.broadcast %88 : vector<8x1xf32> to vector<8x128xf32>
    %97 = arith.subf %82, %96 : vector<8x128xf32>
    %cst_52 = arith.constant 9.99999974E-6 : f32
    %98 = vector.broadcast %cst_52 : f32 to vector<8x1xf32>
    %99 = arith.addf %95, %98 : vector<8x1xf32>
    %100 = math.rsqrt %99 : vector<8x1xf32>
    %101 = vector.broadcast %100 : vector<8x1xf32> to vector<8x128xf32>
    %102 = arith.mulf %97, %101 : vector<8x128xf32>
    %103 = vector.broadcast %83 : vector<1x128xf32> to vector<8x128xf32>
    %104 = arith.mulf %102, %103 : vector<8x128xf32>
    %105 = vector.broadcast %84 : vector<1x128xf32> to vector<8x128xf32>
    %106 = arith.addf %104, %105 : vector<8x128xf32>
    %107 = arith.truncf %106 : vector<8x128xf32> to vector<8x128xbf16>
    %c0_53 = arith.constant 0 : index
    %c0_54 = arith.constant 0 : index
    %108 = vector.load %arg8[%c0_53, %c0_54] : memref<128x128xbf16, #tpu.memory_space<vmem>>, vector<128x128xbf16>
    %cst_55 = arith.constant dense<0.000000e+00> : vector<8x128xf32>
    %109 = tpu.matmul %107, %108, %cst_55 {dimension_numbers = #tpu.dot_dimension_numbers<[1], [0], [0], [1], [0, 0, 1, 1], [], []>} : vector<8x128xbf16>, vector<128x128xbf16>, vector<8x128xf32> -> vector<8x128xf32>
    %c0_56 = arith.constant 0 : index
    %c0_57 = arith.constant 0 : index
    %110 = vector.load %arg9[%c0_56, %c0_57] : memref<1x128xf32, #tpu.memory_space<vmem>>, vector<1x128xf32>
    %111 = vector.broadcast %110 : vector<1x128xf32> to vector<8x128xf32>
    %112 = arith.addf %109, %111 : vector<8x128xf32>
    %c0_58 = arith.constant 0 : index
    %c1 = arith.constant 1 : index
    %c0_59 = arith.constant 0 : index
    %113 = vector.load %arg10[%c0_58, %c1, %c0_59] : memref<8x8x128xf32, #tpu.memory_space<vmem>>, vector<8x1x128xf32>
    %114 = vector.shape_cast %113 : vector<8x1x128xf32> to vector<8x128xf32>
    %115 = vector.shape_cast %112 : vector<8x128xf32> to vector<8x1x128xf32>
    tpu.vector_store %arg10[%c0_58, %c1, %c0_59], %115 {strides = array<i32>} : memref<8x8x128xf32, #tpu.memory_space<vmem>>, vector<8x1x128xf32>,
    %c0_60 = arith.constant 0 : index
    %c256 = arith.constant 256 : index
    %116 = vector.load %arg2[%c0_60, %c256] : memref<128x1024xbf16, #tpu.memory_space<vmem>>, vector<128x128xbf16>
    %cst_61 = arith.constant dense<0.000000e+00> : vector<8x128xf32>
    %117 = tpu.matmul %1, %116, %cst_61 {dimension_numbers = #tpu.dot_dimension_numbers<[1], [0], [0], [1], [0, 0, 1, 1], [], []>} : vector<8x128xbf16>, vector<128x128xbf16>, vector<8x128xf32> -> vector<8x128xf32>
    %c0_62 = arith.constant 0 : index
    %c256_63 = arith.constant 256 : index
    %118 = vector.load %arg3[%c0_62, %c256_63] : memref<1x1024xf32, #tpu.memory_space<vmem>>, vector<1x128xf32>
    %119 = vector.broadcast %118 : vector<1x128xf32> to vector<8x128xf32>
    %120 = arith.addf %117, %119 : vector<8x128xf32>
    %121 = arith.truncf %120 : vector<8x128xf32> to vector<8x128xbf16>
    %c0_64 = arith.constant 0 : index
    %c0_65 = arith.constant 0 : index
    %122 = vector.load %arg4[%c0_64, %c0_65] : memref<128x128xbf16, #tpu.memory_space<vmem>>, vector<128x128xbf16>
    %cst_66 = arith.constant dense<0.000000e+00> : vector<8x128xf32>
    %123 = tpu.matmul %121, %122, %cst_66 {dimension_numbers = #tpu.dot_dimension_numbers<[1], [0], [0], [1], [0, 0, 1, 1], [], []>} : vector<8x128xbf16>, vector<128x128xbf16>, vector<8x128xf32> -> vector<8x128xf32>
    %c0_67 = arith.constant 0 : index
    %c0_68 = arith.constant 0 : index
    %124 = vector.load %arg5[%c0_67, %c0_68] : memref<1x128xf32, #tpu.memory_space<vmem>>, vector<1x128xf32>
    %125 = vector.broadcast %124 : vector<1x128xf32> to vector<8x128xf32>
    %126 = arith.addf %123, %125 : vector<8x128xf32>
    %cst_69 = arith.constant 5.000000e-01 : f32
    %127 = vector.broadcast %cst_69 : f32 to vector<8x128xf32>
    %128 = arith.mulf %127, %126 : vector<8x128xf32>
    %cst_70 = arith.constant 4.471500e-02 : f32
    %129 = vector.broadcast %cst_70 : f32 to vector<8x128xf32>
    %130 = arith.mulf %129, %126 : vector<8x128xf32>
    %131 = arith.mulf %130, %126 : vector<8x128xf32>
    %132 = arith.mulf %131, %126 : vector<8x128xf32>
    %133 = arith.addf %126, %132 : vector<8x128xf32>
    %cst_71 = arith.constant 0.797884583 : f32
    %134 = vector.broadcast %cst_71 : f32 to vector<8x128xf32>
    %135 = arith.mulf %134, %133 : vector<8x128xf32>
    %136 = math.tanh %135 : vector<8x128xf32>
    %cst_72 = arith.constant 1.000000e+00 : f32
    %137 = vector.broadcast %cst_72 : f32 to vector<8x128xf32>
    %138 = arith.addf %137, %136 : vector<8x128xf32>
    %139 = arith.mulf %128, %138 : vector<8x128xf32>
    %c0_73 = arith.constant 0 : index
    %c0_74 = arith.constant 0 : index
    %140 = vector.load %arg6[%c0_73, %c0_74] : memref<1x128xf32, #tpu.memory_space<vmem>>, vector<1x128xf32>
    %c0_75 = arith.constant 0 : index
    %c0_76 = arith.constant 0 : index
    %141 = vector.load %arg7[%c0_75, %c0_76] : memref<1x128xf32, #tpu.memory_space<vmem>>, vector<1x128xf32>
    %cst_77 = arith.constant dense<0.000000e+00> : vector<8xf32>
    %142 = vector.multi_reduction <add>, %139, %cst_77 [1] : vector<8x128xf32> to vector<8xf32>
    %143 = vector.shape_cast %142 : vector<8xf32> to vector<8x1xf32>
    %cst_78 = arith.constant 1.280000e+02 : f32
    %144 = vector.broadcast %cst_78 : f32 to vector<8x1xf32>
    %145 = arith.divf %143, %144 : vector<8x1xf32>
    %146 = vector.broadcast %145 : vector<8x1xf32> to vector<8x128xf32>
    %147 = arith.subf %139, %146 : vector<8x128xf32>
    %148 = arith.mulf %147, %147 : vector<8x128xf32>
    %cst_79 = arith.constant dense<0.000000e+00> : vector<8xf32>
    %149 = vector.multi_reduction <add>, %148, %cst_79 [1] : vector<8x128xf32> to vector<8xf32>
    %150 = vector.shape_cast %149 : vector<8xf32> to vector<8x1xf32>
    %cst_80 = arith.constant 1.280000e+02 : f32
    %151 = vector.broadcast %cst_80 : f32 to vector<8x1xf32>
    %152 = arith.divf %150, %151 : vector<8x1xf32>
    %153 = vector.broadcast %145 : vector<8x1xf32> to vector<8x128xf32>
    %154 = arith.subf %139, %153 : vector<8x128xf32>
    %cst_81 = arith.constant 9.99999974E-6 : f32
    %155 = vector.broadcast %cst_81 : f32 to vector<8x1xf32>
    %156 = arith.addf %152, %155 : vector<8x1xf32>
    %157 = math.rsqrt %156 : vector<8x1xf32>
    %158 = vector.broadcast %157 : vector<8x1xf32> to vector<8x128xf32>
    %159 = arith.mulf %154, %158 : vector<8x128xf32>
    %160 = vector.broadcast %140 : vector<1x128xf32> to vector<8x128xf32>
    %161 = arith.mulf %159, %160 : vector<8x128xf32>
    %162 = vector.broadcast %141 : vector<1x128xf32> to vector<8x128xf32>
    %163 = arith.addf %161, %162 : vector<8x128xf32>
    %164 = arith.truncf %163 : vector<8x128xf32> to vector<8x128xbf16>
    %c0_82 = arith.constant 0 : index
    %c0_83 = arith.constant 0 : index
    %165 = vector.load %arg8[%c0_82, %c0_83] : memref<128x128xbf16, #tpu.memory_space<vmem>>, vector<128x128xbf16>
    %cst_84 = arith.constant dense<0.000000e+00> : vector<8x128xf32>
    %166 = tpu.matmul %164, %165, %cst_84 {dimension_numbers = #tpu.dot_dimension_numbers<[1], [0], [0], [1], [0, 0, 1, 1], [], []>} : vector<8x128xbf16>, vector<128x128xbf16>, vector<8x128xf32> -> vector<8x128xf32>
    %c0_85 = arith.constant 0 : index
    %c0_86 = arith.constant 0 : index
    %167 = vector.load %arg9[%c0_85, %c0_86] : memref<1x128xf32, #tpu.memory_space<vmem>>, vector<1x128xf32>
    %168 = vector.broadcast %167 : vector<1x128xf32> to vector<8x128xf32>
    %169 = arith.addf %166, %168 : vector<8x128xf32>
    %c0_87 = arith.constant 0 : index
    %c2 = arith.constant 2 : index
    %c0_88 = arith.constant 0 : index
    %170 = vector.load %arg10[%c0_87, %c2, %c0_88] : memref<8x8x128xf32, #tpu.memory_space<vmem>>, vector<8x1x128xf32>
    %171 = vector.shape_cast %170 : vector<8x1x128xf32> to vector<8x128xf32>
    %172 = vector.shape_cast %169 : vector<8x128xf32> to vector<8x1x128xf32>
    tpu.vector_store %arg10[%c0_87, %c2, %c0_88], %172 {strides = array<i32>} : memref<8x8x128xf32, #tpu.memory_space<vmem>>, vector<8x1x128xf32>,
    %c0_89 = arith.constant 0 : index
    %c384 = arith.constant 384 : index
    %173 = vector.load %arg2[%c0_89, %c384] : memref<128x1024xbf16, #tpu.memory_space<vmem>>, vector<128x128xbf16>
    %cst_90 = arith.constant dense<0.000000e+00> : vector<8x128xf32>
    %174 = tpu.matmul %1, %173, %cst_90 {dimension_numbers = #tpu.dot_dimension_numbers<[1], [0], [0], [1], [0, 0, 1, 1], [], []>} : vector<8x128xbf16>, vector<128x128xbf16>, vector<8x128xf32> -> vector<8x128xf32>
    %c0_91 = arith.constant 0 : index
    %c384_92 = arith.constant 384 : index
    %175 = vector.load %arg3[%c0_91, %c384_92] : memref<1x1024xf32, #tpu.memory_space<vmem>>, vector<1x128xf32>
    %176 = vector.broadcast %175 : vector<1x128xf32> to vector<8x128xf32>
    %177 = arith.addf %174, %176 : vector<8x128xf32>
    %178 = arith.truncf %177 : vector<8x128xf32> to vector<8x128xbf16>
    %c0_93 = arith.constant 0 : index
    %c0_94 = arith.constant 0 : index
    %179 = vector.load %arg4[%c0_93, %c0_94] : memref<128x128xbf16, #tpu.memory_space<vmem>>, vector<128x128xbf16>
    %cst_95 = arith.constant dense<0.000000e+00> : vector<8x128xf32>
    %180 = tpu.matmul %178, %179, %cst_95 {dimension_numbers = #tpu.dot_dimension_numbers<[1], [0], [0], [1], [0, 0, 1, 1], [], []>} : vector<8x128xbf16>, vector<128x128xbf16>, vector<8x128xf32> -> vector<8x128xf32>
    %c0_96 = arith.constant 0 : index
    %c0_97 = arith.constant 0 : index
    %181 = vector.load %arg5[%c0_96, %c0_97] : memref<1x128xf32, #tpu.memory_space<vmem>>, vector<1x128xf32>
    %182 = vector.broadcast %181 : vector<1x128xf32> to vector<8x128xf32>
    %183 = arith.addf %180, %182 : vector<8x128xf32>
    %cst_98 = arith.constant 5.000000e-01 : f32
    %184 = vector.broadcast %cst_98 : f32 to vector<8x128xf32>
    %185 = arith.mulf %184, %183 : vector<8x128xf32>
    %cst_99 = arith.constant 4.471500e-02 : f32
    %186 = vector.broadcast %cst_99 : f32 to vector<8x128xf32>
    %187 = arith.mulf %186, %183 : vector<8x128xf32>
    %188 = arith.mulf %187, %183 : vector<8x128xf32>
    %189 = arith.mulf %188, %183 : vector<8x128xf32>
    %190 = arith.addf %183, %189 : vector<8x128xf32>
    %cst_100 = arith.constant 0.797884583 : f32
    %191 = vector.broadcast %cst_100 : f32 to vector<8x128xf32>
    %192 = arith.mulf %191, %190 : vector<8x128xf32>
    %193 = math.tanh %192 : vector<8x128xf32>
    %cst_101 = arith.constant 1.000000e+00 : f32
    %194 = vector.broadcast %cst_101 : f32 to vector<8x128xf32>
    %195 = arith.addf %194, %193 : vector<8x128xf32>
    %196 = arith.mulf %185, %195 : vector<8x128xf32>
    %c0_102 = arith.constant 0 : index
    %c0_103 = arith.constant 0 : index
    %197 = vector.load %arg6[%c0_102, %c0_103] : memref<1x128xf32, #tpu.memory_space<vmem>>, vector<1x128xf32>
    %c0_104 = arith.constant 0 : index
    %c0_105 = arith.constant 0 : index
    %198 = vector.load %arg7[%c0_104, %c0_105] : memref<1x128xf32, #tpu.memory_space<vmem>>, vector<1x128xf32>
    %cst_106 = arith.constant dense<0.000000e+00> : vector<8xf32>
    %199 = vector.multi_reduction <add>, %196, %cst_106 [1] : vector<8x128xf32> to vector<8xf32>
    %200 = vector.shape_cast %199 : vector<8xf32> to vector<8x1xf32>
    %cst_107 = arith.constant 1.280000e+02 : f32
    %201 = vector.broadcast %cst_107 : f32 to vector<8x1xf32>
    %202 = arith.divf %200, %201 : vector<8x1xf32>
    %203 = vector.broadcast %202 : vector<8x1xf32> to vector<8x128xf32>
    %204 = arith.subf %196, %203 : vector<8x128xf32>
    %205 = arith.mulf %204, %204 : vector<8x128xf32>
    %cst_108 = arith.constant dense<0.000000e+00> : vector<8xf32>
    %206 = vector.multi_reduction <add>, %205, %cst_108 [1] : vector<8x128xf32> to vector<8xf32>
    %207 = vector.shape_cast %206 : vector<8xf32> to vector<8x1xf32>
    %cst_109 = arith.constant 1.280000e+02 : f32
    %208 = vector.broadcast %cst_109 : f32 to vector<8x1xf32>
    %209 = arith.divf %207, %208 : vector<8x1xf32>
    %210 = vector.broadcast %202 : vector<8x1xf32> to vector<8x128xf32>
    %211 = arith.subf %196, %210 : vector<8x128xf32>
    %cst_110 = arith.constant 9.99999974E-6 : f32
    %212 = vector.broadcast %cst_110 : f32 to vector<8x1xf32>
    %213 = arith.addf %209, %212 : vector<8x1xf32>
    %214 = math.rsqrt %213 : vector<8x1xf32>
    %215 = vector.broadcast %214 : vector<8x1xf32> to vector<8x128xf32>
    %216 = arith.mulf %211, %215 : vector<8x128xf32>
    %217 = vector.broadcast %197 : vector<1x128xf32> to vector<8x128xf32>
    %218 = arith.mulf %216, %217 : vector<8x128xf32>
    %219 = vector.broadcast %198 : vector<1x128xf32> to vector<8x128xf32>
    %220 = arith.addf %218, %219 : vector<8x128xf32>
    %221 = arith.truncf %220 : vector<8x128xf32> to vector<8x128xbf16>
    %c0_111 = arith.constant 0 : index
    %c0_112 = arith.constant 0 : index
    %222 = vector.load %arg8[%c0_111, %c0_112] : memref<128x128xbf16, #tpu.memory_space<vmem>>, vector<128x128xbf16>
    %cst_113 = arith.constant dense<0.000000e+00> : vector<8x128xf32>
    %223 = tpu.matmul %221, %222, %cst_113 {dimension_numbers = #tpu.dot_dimension_numbers<[1], [0], [0], [1], [0, 0, 1, 1], [], []>} : vector<8x128xbf16>, vector<128x128xbf16>, vector<8x128xf32> -> vector<8x128xf32>
    %c0_114 = arith.constant 0 : index
    %c0_115 = arith.constant 0 : index
    %224 = vector.load %arg9[%c0_114, %c0_115] : memref<1x128xf32, #tpu.memory_space<vmem>>, vector<1x128xf32>
    %225 = vector.broadcast %224 : vector<1x128xf32> to vector<8x128xf32>
    %226 = arith.addf %223, %225 : vector<8x128xf32>
    %c0_116 = arith.constant 0 : index
    %c3 = arith.constant 3 : index
    %c0_117 = arith.constant 0 : index
    %227 = vector.load %arg10[%c0_116, %c3, %c0_117] : memref<8x8x128xf32, #tpu.memory_space<vmem>>, vector<8x1x128xf32>
    %228 = vector.shape_cast %227 : vector<8x1x128xf32> to vector<8x128xf32>
    %229 = vector.shape_cast %226 : vector<8x128xf32> to vector<8x1x128xf32>
    tpu.vector_store %arg10[%c0_116, %c3, %c0_117], %229 {strides = array<i32>} : memref<8x8x128xf32, #tpu.memory_space<vmem>>, vector<8x1x128xf32>,
    %c0_118 = arith.constant 0 : index
    %c512 = arith.constant 512 : index
    %230 = vector.load %arg2[%c0_118, %c512] : memref<128x1024xbf16, #tpu.memory_space<vmem>>, vector<128x128xbf16>
    %cst_119 = arith.constant dense<0.000000e+00> : vector<8x128xf32>
    %231 = tpu.matmul %1, %230, %cst_119 {dimension_numbers = #tpu.dot_dimension_numbers<[1], [0], [0], [1], [0, 0, 1, 1], [], []>} : vector<8x128xbf16>, vector<128x128xbf16>, vector<8x128xf32> -> vector<8x128xf32>
    %c0_120 = arith.constant 0 : index
    %c512_121 = arith.constant 512 : index
    %232 = vector.load %arg3[%c0_120, %c512_121] : memref<1x1024xf32, #tpu.memory_space<vmem>>, vector<1x128xf32>
    %233 = vector.broadcast %232 : vector<1x128xf32> to vector<8x128xf32>
    %234 = arith.addf %231, %233 : vector<8x128xf32>
    %235 = arith.truncf %234 : vector<8x128xf32> to vector<8x128xbf16>
    %c0_122 = arith.constant 0 : index
    %c0_123 = arith.constant 0 : index
    %236 = vector.load %arg4[%c0_122, %c0_123] : memref<128x128xbf16, #tpu.memory_space<vmem>>, vector<128x128xbf16>
    %cst_124 = arith.constant dense<0.000000e+00> : vector<8x128xf32>
    %237 = tpu.matmul %235, %236, %cst_124 {dimension_numbers = #tpu.dot_dimension_numbers<[1], [0], [0], [1], [0, 0, 1, 1], [], []>} : vector<8x128xbf16>, vector<128x128xbf16>, vector<8x128xf32> -> vector<8x128xf32>
    %c0_125 = arith.constant 0 : index
    %c0_126 = arith.constant 0 : index
    %238 = vector.load %arg5[%c0_125, %c0_126] : memref<1x128xf32, #tpu.memory_space<vmem>>, vector<1x128xf32>
    %239 = vector.broadcast %238 : vector<1x128xf32> to vector<8x128xf32>
    %240 = arith.addf %237, %239 : vector<8x128xf32>
    %cst_127 = arith.constant 5.000000e-01 : f32
    %241 = vector.broadcast %cst_127 : f32 to vector<8x128xf32>
    %242 = arith.mulf %241, %240 : vector<8x128xf32>
    %cst_128 = arith.constant 4.471500e-02 : f32
    %243 = vector.broadcast %cst_128 : f32 to vector<8x128xf32>
    %244 = arith.mulf %243, %240 : vector<8x128xf32>
    %245 = arith.mulf %244, %240 : vector<8x128xf32>
    %246 = arith.mulf %245, %240 : vector<8x128xf32>
    %247 = arith.addf %240, %246 : vector<8x128xf32>
    %cst_129 = arith.constant 0.797884583 : f32
    %248 = vector.broadcast %cst_129 : f32 to vector<8x128xf32>
    %249 = arith.mulf %248, %247 : vector<8x128xf32>
    %250 = math.tanh %249 : vector<8x128xf32>
    %cst_130 = arith.constant 1.000000e+00 : f32
    %251 = vector.broadcast %cst_130 : f32 to vector<8x128xf32>
    %252 = arith.addf %251, %250 : vector<8x128xf32>
    %253 = arith.mulf %242, %252 : vector<8x128xf32>
    %c0_131 = arith.constant 0 : index
    %c0_132 = arith.constant 0 : index
    %254 = vector.load %arg6[%c0_131, %c0_132] : memref<1x128xf32, #tpu.memory_space<vmem>>, vector<1x128xf32>
    %c0_133 = arith.constant 0 : index
    %c0_134 = arith.constant 0 : index
    %255 = vector.load %arg7[%c0_133, %c0_134] : memref<1x128xf32, #tpu.memory_space<vmem>>, vector<1x128xf32>
    %cst_135 = arith.constant dense<0.000000e+00> : vector<8xf32>
    %256 = vector.multi_reduction <add>, %253, %cst_135 [1] : vector<8x128xf32> to vector<8xf32>
    %257 = vector.shape_cast %256 : vector<8xf32> to vector<8x1xf32>
    %cst_136 = arith.constant 1.280000e+02 : f32
    %258 = vector.broadcast %cst_136 : f32 to vector<8x1xf32>
    %259 = arith.divf %257, %258 : vector<8x1xf32>
    %260 = vector.broadcast %259 : vector<8x1xf32> to vector<8x128xf32>
    %261 = arith.subf %253, %260 : vector<8x128xf32>
    %262 = arith.mulf %261, %261 : vector<8x128xf32>
    %cst_137 = arith.constant dense<0.000000e+00> : vector<8xf32>
    %263 = vector.multi_reduction <add>, %262, %cst_137 [1] : vector<8x128xf32> to vector<8xf32>
    %264 = vector.shape_cast %263 : vector<8xf32> to vector<8x1xf32>
    %cst_138 = arith.constant 1.280000e+02 : f32
    %265 = vector.broadcast %cst_138 : f32 to vector<8x1xf32>
    %266 = arith.divf %264, %265 : vector<8x1xf32>
    %267 = vector.broadcast %259 : vector<8x1xf32> to vector<8x128xf32>
    %268 = arith.subf %253, %267 : vector<8x128xf32>
    %cst_139 = arith.constant 9.99999974E-6 : f32
    %269 = vector.broadcast %cst_139 : f32 to vector<8x1xf32>
    %270 = arith.addf %266, %269 : vector<8x1xf32>
    %271 = math.rsqrt %270 : vector<8x1xf32>
    %272 = vector.broadcast %271 : vector<8x1xf32> to vector<8x128xf32>
    %273 = arith.mulf %268, %272 : vector<8x128xf32>
    %274 = vector.broadcast %254 : vector<1x128xf32> to vector<8x128xf32>
    %275 = arith.mulf %273, %274 : vector<8x128xf32>
    %276 = vector.broadcast %255 : vector<1x128xf32> to vector<8x128xf32>
    %277 = arith.addf %275, %276 : vector<8x128xf32>
    %278 = arith.truncf %277 : vector<8x128xf32> to vector<8x128xbf16>
    %c0_140 = arith.constant 0 : index
    %c0_141 = arith.constant 0 : index
    %279 = vector.load %arg8[%c0_140, %c0_141] : memref<128x128xbf16, #tpu.memory_space<vmem>>, vector<128x128xbf16>
    %cst_142 = arith.constant dense<0.000000e+00> : vector<8x128xf32>
    %280 = tpu.matmul %278, %279, %cst_142 {dimension_numbers = #tpu.dot_dimension_numbers<[1], [0], [0], [1], [0, 0, 1, 1], [], []>} : vector<8x128xbf16>, vector<128x128xbf16>, vector<8x128xf32> -> vector<8x128xf32>
    %c0_143 = arith.constant 0 : index
    %c0_144 = arith.constant 0 : index
    %281 = vector.load %arg9[%c0_143, %c0_144] : memref<1x128xf32, #tpu.memory_space<vmem>>, vector<1x128xf32>
    %282 = vector.broadcast %281 : vector<1x128xf32> to vector<8x128xf32>
    %283 = arith.addf %280, %282 : vector<8x128xf32>
    %c0_145 = arith.constant 0 : index
    %c4 = arith.constant 4 : index
    %c0_146 = arith.constant 0 : index
    %284 = vector.load %arg10[%c0_145, %c4, %c0_146] : memref<8x8x128xf32, #tpu.memory_space<vmem>>, vector<8x1x128xf32>
    %285 = vector.shape_cast %284 : vector<8x1x128xf32> to vector<8x128xf32>
    %286 = vector.shape_cast %283 : vector<8x128xf32> to vector<8x1x128xf32>
    tpu.vector_store %arg10[%c0_145, %c4, %c0_146], %286 {strides = array<i32>} : memref<8x8x128xf32, #tpu.memory_space<vmem>>, vector<8x1x128xf32>,
    %c0_147 = arith.constant 0 : index
    %c640 = arith.constant 640 : index
    %287 = vector.load %arg2[%c0_147, %c640] : memref<128x1024xbf16, #tpu.memory_space<vmem>>, vector<128x128xbf16>
    %cst_148 = arith.constant dense<0.000000e+00> : vector<8x128xf32>
    %288 = tpu.matmul %1, %287, %cst_148 {dimension_numbers = #tpu.dot_dimension_numbers<[1], [0], [0], [1], [0, 0, 1, 1], [], []>} : vector<8x128xbf16>, vector<128x128xbf16>, vector<8x128xf32> -> vector<8x128xf32>
    %c0_149 = arith.constant 0 : index
    %c640_150 = arith.constant 640 : index
    %289 = vector.load %arg3[%c0_149, %c640_150] : memref<1x1024xf32, #tpu.memory_space<vmem>>, vector<1x128xf32>
    %290 = vector.broadcast %289 : vector<1x128xf32> to vector<8x128xf32>
    %291 = arith.addf %288, %290 : vector<8x128xf32>
    %292 = arith.truncf %291 : vector<8x128xf32> to vector<8x128xbf16>
    %c0_151 = arith.constant 0 : index
    %c0_152 = arith.constant 0 : index
    %293 = vector.load %arg4[%c0_151, %c0_152] : memref<128x128xbf16, #tpu.memory_space<vmem>>, vector<128x128xbf16>
    %cst_153 = arith.constant dense<0.000000e+00> : vector<8x128xf32>
    %294 = tpu.matmul %292, %293, %cst_153 {dimension_numbers = #tpu.dot_dimension_numbers<[1], [0], [0], [1], [0, 0, 1, 1], [], []>} : vector<8x128xbf16>, vector<128x128xbf16>, vector<8x128xf32> -> vector<8x128xf32>
    %c0_154 = arith.constant 0 : index
    %c0_155 = arith.constant 0 : index
    %295 = vector.load %arg5[%c0_154, %c0_155] : memref<1x128xf32, #tpu.memory_space<vmem>>, vector<1x128xf32>
    %296 = vector.broadcast %295 : vector<1x128xf32> to vector<8x128xf32>
    %297 = arith.addf %294, %296 : vector<8x128xf32>
    %cst_156 = arith.constant 5.000000e-01 : f32
    %298 = vector.broadcast %cst_156 : f32 to vector<8x128xf32>
    %299 = arith.mulf %298, %297 : vector<8x128xf32>
    %cst_157 = arith.constant 4.471500e-02 : f32
    %300 = vector.broadcast %cst_157 : f32 to vector<8x128xf32>
    %301 = arith.mulf %300, %297 : vector<8x128xf32>
    %302 = arith.mulf %301, %297 : vector<8x128xf32>
    %303 = arith.mulf %302, %297 : vector<8x128xf32>
    %304 = arith.addf %297, %303 : vector<8x128xf32>
    %cst_158 = arith.constant 0.797884583 : f32
    %305 = vector.broadcast %cst_158 : f32 to vector<8x128xf32>
    %306 = arith.mulf %305, %304 : vector<8x128xf32>
    %307 = math.tanh %306 : vector<8x128xf32>
    %cst_159 = arith.constant 1.000000e+00 : f32
    %308 = vector.broadcast %cst_159 : f32 to vector<8x128xf32>
    %309 = arith.addf %308, %307 : vector<8x128xf32>
    %310 = arith.mulf %299, %309 : vector<8x128xf32>
    %c0_160 = arith.constant 0 : index
    %c0_161 = arith.constant 0 : index
    %311 = vector.load %arg6[%c0_160, %c0_161] : memref<1x128xf32, #tpu.memory_space<vmem>>, vector<1x128xf32>
    %c0_162 = arith.constant 0 : index
    %c0_163 = arith.constant 0 : index
    %312 = vector.load %arg7[%c0_162, %c0_163] : memref<1x128xf32, #tpu.memory_space<vmem>>, vector<1x128xf32>
    %cst_164 = arith.constant dense<0.000000e+00> : vector<8xf32>
    %313 = vector.multi_reduction <add>, %310, %cst_164 [1] : vector<8x128xf32> to vector<8xf32>
    %314 = vector.shape_cast %313 : vector<8xf32> to vector<8x1xf32>
    %cst_165 = arith.constant 1.280000e+02 : f32
    %315 = vector.broadcast %cst_165 : f32 to vector<8x1xf32>
    %316 = arith.divf %314, %315 : vector<8x1xf32>
    %317 = vector.broadcast %316 : vector<8x1xf32> to vector<8x128xf32>
    %318 = arith.subf %310, %317 : vector<8x128xf32>
    %319 = arith.mulf %318, %318 : vector<8x128xf32>
    %cst_166 = arith.constant dense<0.000000e+00> : vector<8xf32>
    %320 = vector.multi_reduction <add>, %319, %cst_166 [1] : vector<8x128xf32> to vector<8xf32>
    %321 = vector.shape_cast %320 : vector<8xf32> to vector<8x1xf32>
    %cst_167 = arith.constant 1.280000e+02 : f32
    %322 = vector.broadcast %cst_167 : f32 to vector<8x1xf32>
    %323 = arith.divf %321, %322 : vector<8x1xf32>
    %324 = vector.broadcast %316 : vector<8x1xf32> to vector<8x128xf32>
    %325 = arith.subf %310, %324 : vector<8x128xf32>
    %cst_168 = arith.constant 9.99999974E-6 : f32
    %326 = vector.broadcast %cst_168 : f32 to vector<8x1xf32>
    %327 = arith.addf %323, %326 : vector<8x1xf32>
    %328 = math.rsqrt %327 : vector<8x1xf32>
    %329 = vector.broadcast %328 : vector<8x1xf32> to vector<8x128xf32>
    %330 = arith.mulf %325, %329 : vector<8x128xf32>
    %331 = vector.broadcast %311 : vector<1x128xf32> to vector<8x128xf32>
    %332 = arith.mulf %330, %331 : vector<8x128xf32>
    %333 = vector.broadcast %312 : vector<1x128xf32> to vector<8x128xf32>
    %334 = arith.addf %332, %333 : vector<8x128xf32>
    %335 = arith.truncf %334 : vector<8x128xf32> to vector<8x128xbf16>
    %c0_169 = arith.constant 0 : index
    %c0_170 = arith.constant 0 : index
    %336 = vector.load %arg8[%c0_169, %c0_170] : memref<128x128xbf16, #tpu.memory_space<vmem>>, vector<128x128xbf16>
    %cst_171 = arith.constant dense<0.000000e+00> : vector<8x128xf32>
    %337 = tpu.matmul %335, %336, %cst_171 {dimension_numbers = #tpu.dot_dimension_numbers<[1], [0], [0], [1], [0, 0, 1, 1], [], []>} : vector<8x128xbf16>, vector<128x128xbf16>, vector<8x128xf32> -> vector<8x128xf32>
    %c0_172 = arith.constant 0 : index
    %c0_173 = arith.constant 0 : index
    %338 = vector.load %arg9[%c0_172, %c0_173] : memref<1x128xf32, #tpu.memory_space<vmem>>, vector<1x128xf32>
    %339 = vector.broadcast %338 : vector<1x128xf32> to vector<8x128xf32>
    %340 = arith.addf %337, %339 : vector<8x128xf32>
    %c0_174 = arith.constant 0 : index
    %c5 = arith.constant 5 : index
    %c0_175 = arith.constant 0 : index
    %341 = vector.load %arg10[%c0_174, %c5, %c0_175] : memref<8x8x128xf32, #tpu.memory_space<vmem>>, vector<8x1x128xf32>
    %342 = vector.shape_cast %341 : vector<8x1x128xf32> to vector<8x128xf32>
    %343 = vector.shape_cast %340 : vector<8x128xf32> to vector<8x1x128xf32>
    tpu.vector_store %arg10[%c0_174, %c5, %c0_175], %343 {strides = array<i32>} : memref<8x8x128xf32, #tpu.memory_space<vmem>>, vector<8x1x128xf32>,
    %c0_176 = arith.constant 0 : index
    %c768 = arith.constant 768 : index
    %344 = vector.load %arg2[%c0_176, %c768] : memref<128x1024xbf16, #tpu.memory_space<vmem>>, vector<128x128xbf16>
    %cst_177 = arith.constant dense<0.000000e+00> : vector<8x128xf32>
    %345 = tpu.matmul %1, %344, %cst_177 {dimension_numbers = #tpu.dot_dimension_numbers<[1], [0], [0], [1], [0, 0, 1, 1], [], []>} : vector<8x128xbf16>, vector<128x128xbf16>, vector<8x128xf32> -> vector<8x128xf32>
    %c0_178 = arith.constant 0 : index
    %c768_179 = arith.constant 768 : index
    %346 = vector.load %arg3[%c0_178, %c768_179] : memref<1x1024xf32, #tpu.memory_space<vmem>>, vector<1x128xf32>
    %347 = vector.broadcast %346 : vector<1x128xf32> to vector<8x128xf32>
    %348 = arith.addf %345, %347 : vector<8x128xf32>
    %349 = arith.truncf %348 : vector<8x128xf32> to vector<8x128xbf16>
    %c0_180 = arith.constant 0 : index
    %c0_181 = arith.constant 0 : index
    %350 = vector.load %arg4[%c0_180, %c0_181] : memref<128x128xbf16, #tpu.memory_space<vmem>>, vector<128x128xbf16>
    %cst_182 = arith.constant dense<0.000000e+00> : vector<8x128xf32>
    %351 = tpu.matmul %349, %350, %cst_182 {dimension_numbers = #tpu.dot_dimension_numbers<[1], [0], [0], [1], [0, 0, 1, 1], [], []>} : vector<8x128xbf16>, vector<128x128xbf16>, vector<8x128xf32> -> vector<8x128xf32>
    %c0_183 = arith.constant 0 : index
    %c0_184 = arith.constant 0 : index
    %352 = vector.load %arg5[%c0_183, %c0_184] : memref<1x128xf32, #tpu.memory_space<vmem>>, vector<1x128xf32>
    %353 = vector.broadcast %352 : vector<1x128xf32> to vector<8x128xf32>
    %354 = arith.addf %351, %353 : vector<8x128xf32>
    %cst_185 = arith.constant 5.000000e-01 : f32
    %355 = vector.broadcast %cst_185 : f32 to vector<8x128xf32>
    %356 = arith.mulf %355, %354 : vector<8x128xf32>
    %cst_186 = arith.constant 4.471500e-02 : f32
    %357 = vector.broadcast %cst_186 : f32 to vector<8x128xf32>
    %358 = arith.mulf %357, %354 : vector<8x128xf32>
    %359 = arith.mulf %358, %354 : vector<8x128xf32>
    %360 = arith.mulf %359, %354 : vector<8x128xf32>
    %361 = arith.addf %354, %360 : vector<8x128xf32>
    %cst_187 = arith.constant 0.797884583 : f32
    %362 = vector.broadcast %cst_187 : f32 to vector<8x128xf32>
    %363 = arith.mulf %362, %361 : vector<8x128xf32>
    %364 = math.tanh %363 : vector<8x128xf32>
    %cst_188 = arith.constant 1.000000e+00 : f32
    %365 = vector.broadcast %cst_188 : f32 to vector<8x128xf32>
    %366 = arith.addf %365, %364 : vector<8x128xf32>
    %367 = arith.mulf %356, %366 : vector<8x128xf32>
    %c0_189 = arith.constant 0 : index
    %c0_190 = arith.constant 0 : index
    %368 = vector.load %arg6[%c0_189, %c0_190] : memref<1x128xf32, #tpu.memory_space<vmem>>, vector<1x128xf32>
    %c0_191 = arith.constant 0 : index
    %c0_192 = arith.constant 0 : index
    %369 = vector.load %arg7[%c0_191, %c0_192] : memref<1x128xf32, #tpu.memory_space<vmem>>, vector<1x128xf32>
    %cst_193 = arith.constant dense<0.000000e+00> : vector<8xf32>
    %370 = vector.multi_reduction <add>, %367, %cst_193 [1] : vector<8x128xf32> to vector<8xf32>
    %371 = vector.shape_cast %370 : vector<8xf32> to vector<8x1xf32>
    %cst_194 = arith.constant 1.280000e+02 : f32
    %372 = vector.broadcast %cst_194 : f32 to vector<8x1xf32>
    %373 = arith.divf %371, %372 : vector<8x1xf32>
    %374 = vector.broadcast %373 : vector<8x1xf32> to vector<8x128xf32>
    %375 = arith.subf %367, %374 : vector<8x128xf32>
    %376 = arith.mulf %375, %375 : vector<8x128xf32>
    %cst_195 = arith.constant dense<0.000000e+00> : vector<8xf32>
    %377 = vector.multi_reduction <add>, %376, %cst_195 [1] : vector<8x128xf32> to vector<8xf32>
    %378 = vector.shape_cast %377 : vector<8xf32> to vector<8x1xf32>
    %cst_196 = arith.constant 1.280000e+02 : f32
    %379 = vector.broadcast %cst_196 : f32 to vector<8x1xf32>
    %380 = arith.divf %378, %379 : vector<8x1xf32>
    %381 = vector.broadcast %373 : vector<8x1xf32> to vector<8x128xf32>
    %382 = arith.subf %367, %381 : vector<8x128xf32>
    %cst_197 = arith.constant 9.99999974E-6 : f32
    %383 = vector.broadcast %cst_197 : f32 to vector<8x1xf32>
    %384 = arith.addf %380, %383 : vector<8x1xf32>
    %385 = math.rsqrt %384 : vector<8x1xf32>
    %386 = vector.broadcast %385 : vector<8x1xf32> to vector<8x128xf32>
    %387 = arith.mulf %382, %386 : vector<8x128xf32>
    %388 = vector.broadcast %368 : vector<1x128xf32> to vector<8x128xf32>
    %389 = arith.mulf %387, %388 : vector<8x128xf32>
    %390 = vector.broadcast %369 : vector<1x128xf32> to vector<8x128xf32>
    %391 = arith.addf %389, %390 : vector<8x128xf32>
    %392 = arith.truncf %391 : vector<8x128xf32> to vector<8x128xbf16>
    %c0_198 = arith.constant 0 : index
    %c0_199 = arith.constant 0 : index
    %393 = vector.load %arg8[%c0_198, %c0_199] : memref<128x128xbf16, #tpu.memory_space<vmem>>, vector<128x128xbf16>
    %cst_200 = arith.constant dense<0.000000e+00> : vector<8x128xf32>
    %394 = tpu.matmul %392, %393, %cst_200 {dimension_numbers = #tpu.dot_dimension_numbers<[1], [0], [0], [1], [0, 0, 1, 1], [], []>} : vector<8x128xbf16>, vector<128x128xbf16>, vector<8x128xf32> -> vector<8x128xf32>
    %c0_201 = arith.constant 0 : index
    %c0_202 = arith.constant 0 : index
    %395 = vector.load %arg9[%c0_201, %c0_202] : memref<1x128xf32, #tpu.memory_space<vmem>>, vector<1x128xf32>
    %396 = vector.broadcast %395 : vector<1x128xf32> to vector<8x128xf32>
    %397 = arith.addf %394, %396 : vector<8x128xf32>
    %c0_203 = arith.constant 0 : index
    %c6 = arith.constant 6 : index
    %c0_204 = arith.constant 0 : index
    %398 = vector.load %arg10[%c0_203, %c6, %c0_204] : memref<8x8x128xf32, #tpu.memory_space<vmem>>, vector<8x1x128xf32>
    %399 = vector.shape_cast %398 : vector<8x1x128xf32> to vector<8x128xf32>
    %400 = vector.shape_cast %397 : vector<8x128xf32> to vector<8x1x128xf32>
    tpu.vector_store %arg10[%c0_203, %c6, %c0_204], %400 {strides = array<i32>} : memref<8x8x128xf32, #tpu.memory_space<vmem>>, vector<8x1x128xf32>,
    %c0_205 = arith.constant 0 : index
    %c896 = arith.constant 896 : index
    %401 = vector.load %arg2[%c0_205, %c896] : memref<128x1024xbf16, #tpu.memory_space<vmem>>, vector<128x128xbf16>
    %cst_206 = arith.constant dense<0.000000e+00> : vector<8x128xf32>
    %402 = tpu.matmul %1, %401, %cst_206 {dimension_numbers = #tpu.dot_dimension_numbers<[1], [0], [0], [1], [0, 0, 1, 1], [], []>} : vector<8x128xbf16>, vector<128x128xbf16>, vector<8x128xf32> -> vector<8x128xf32>
    %c0_207 = arith.constant 0 : index
    %c896_208 = arith.constant 896 : index
    %403 = vector.load %arg3[%c0_207, %c896_208] : memref<1x1024xf32, #tpu.memory_space<vmem>>, vector<1x128xf32>
    %404 = vector.broadcast %403 : vector<1x128xf32> to vector<8x128xf32>
    %405 = arith.addf %402, %404 : vector<8x128xf32>
    %406 = arith.truncf %405 : vector<8x128xf32> to vector<8x128xbf16>
    %c0_209 = arith.constant 0 : index
    %c0_210 = arith.constant 0 : index
    %407 = vector.load %arg4[%c0_209, %c0_210] : memref<128x128xbf16, #tpu.memory_space<vmem>>, vector<128x128xbf16>
    %cst_211 = arith.constant dense<0.000000e+00> : vector<8x128xf32>
    %408 = tpu.matmul %406, %407, %cst_211 {dimension_numbers = #tpu.dot_dimension_numbers<[1], [0], [0], [1], [0, 0, 1, 1], [], []>} : vector<8x128xbf16>, vector<128x128xbf16>, vector<8x128xf32> -> vector<8x128xf32>
    %c0_212 = arith.constant 0 : index
    %c0_213 = arith.constant 0 : index
    %409 = vector.load %arg5[%c0_212, %c0_213] : memref<1x128xf32, #tpu.memory_space<vmem>>, vector<1x128xf32>
    %410 = vector.broadcast %409 : vector<1x128xf32> to vector<8x128xf32>
    %411 = arith.addf %408, %410 : vector<8x128xf32>
    %cst_214 = arith.constant 5.000000e-01 : f32
    %412 = vector.broadcast %cst_214 : f32 to vector<8x128xf32>
    %413 = arith.mulf %412, %411 : vector<8x128xf32>
    %cst_215 = arith.constant 4.471500e-02 : f32
    %414 = vector.broadcast %cst_215 : f32 to vector<8x128xf32>
    %415 = arith.mulf %414, %411 : vector<8x128xf32>
    %416 = arith.mulf %415, %411 : vector<8x128xf32>
    %417 = arith.mulf %416, %411 : vector<8x128xf32>
    %418 = arith.addf %411, %417 : vector<8x128xf32>
    %cst_216 = arith.constant 0.797884583 : f32
    %419 = vector.broadcast %cst_216 : f32 to vector<8x128xf32>
    %420 = arith.mulf %419, %418 : vector<8x128xf32>
    %421 = math.tanh %420 : vector<8x128xf32>
    %cst_217 = arith.constant 1.000000e+00 : f32
    %422 = vector.broadcast %cst_217 : f32 to vector<8x128xf32>
    %423 = arith.addf %422, %421 : vector<8x128xf32>
    %424 = arith.mulf %413, %423 : vector<8x128xf32>
    %c0_218 = arith.constant 0 : index
    %c0_219 = arith.constant 0 : index
    %425 = vector.load %arg6[%c0_218, %c0_219] : memref<1x128xf32, #tpu.memory_space<vmem>>, vector<1x128xf32>
    %c0_220 = arith.constant 0 : index
    %c0_221 = arith.constant 0 : index
    %426 = vector.load %arg7[%c0_220, %c0_221] : memref<1x128xf32, #tpu.memory_space<vmem>>, vector<1x128xf32>
    %cst_222 = arith.constant dense<0.000000e+00> : vector<8xf32>
    %427 = vector.multi_reduction <add>, %424, %cst_222 [1] : vector<8x128xf32> to vector<8xf32>
    %428 = vector.shape_cast %427 : vector<8xf32> to vector<8x1xf32>
    %cst_223 = arith.constant 1.280000e+02 : f32
    %429 = vector.broadcast %cst_223 : f32 to vector<8x1xf32>
    %430 = arith.divf %428, %429 : vector<8x1xf32>
    %431 = vector.broadcast %430 : vector<8x1xf32> to vector<8x128xf32>
    %432 = arith.subf %424, %431 : vector<8x128xf32>
    %433 = arith.mulf %432, %432 : vector<8x128xf32>
    %cst_224 = arith.constant dense<0.000000e+00> : vector<8xf32>
    %434 = vector.multi_reduction <add>, %433, %cst_224 [1] : vector<8x128xf32> to vector<8xf32>
    %435 = vector.shape_cast %434 : vector<8xf32> to vector<8x1xf32>
    %cst_225 = arith.constant 1.280000e+02 : f32
    %436 = vector.broadcast %cst_225 : f32 to vector<8x1xf32>
    %437 = arith.divf %435, %436 : vector<8x1xf32>
    %438 = vector.broadcast %430 : vector<8x1xf32> to vector<8x128xf32>
    %439 = arith.subf %424, %438 : vector<8x128xf32>
    %cst_226 = arith.constant 9.99999974E-6 : f32
    %440 = vector.broadcast %cst_226 : f32 to vector<8x1xf32>
    %441 = arith.addf %437, %440 : vector<8x1xf32>
    %442 = math.rsqrt %441 : vector<8x1xf32>
    %443 = vector.broadcast %442 : vector<8x1xf32> to vector<8x128xf32>
    %444 = arith.mulf %439, %443 : vector<8x128xf32>
    %445 = vector.broadcast %425 : vector<1x128xf32> to vector<8x128xf32>
    %446 = arith.mulf %444, %445 : vector<8x128xf32>
    %447 = vector.broadcast %426 : vector<1x128xf32> to vector<8x128xf32>
    %448 = arith.addf %446, %447 : vector<8x128xf32>
    %449 = arith.truncf %448 : vector<8x128xf32> to vector<8x128xbf16>
    %c0_227 = arith.constant 0 : index
    %c0_228 = arith.constant 0 : index
    %450 = vector.load %arg8[%c0_227, %c0_228] : memref<128x128xbf16, #tpu.memory_space<vmem>>, vector<128x128xbf16>
    %cst_229 = arith.constant dense<0.000000e+00> : vector<8x128xf32>
    %451 = tpu.matmul %449, %450, %cst_229 {dimension_numbers = #tpu.dot_dimension_numbers<[1], [0], [0], [1], [0, 0, 1, 1], [], []>} : vector<8x128xbf16>, vector<128x128xbf16>, vector<8x128xf32> -> vector<8x128xf32>
    %c0_230 = arith.constant 0 : index
    %c0_231 = arith.constant 0 : index
    %452 = vector.load %arg9[%c0_230, %c0_231] : memref<1x128xf32, #tpu.memory_space<vmem>>, vector<1x128xf32>
    %453 = vector.broadcast %452 : vector<1x128xf32> to vector<8x128xf32>
    %454 = arith.addf %451, %453 : vector<8x128xf32>
    %c0_232 = arith.constant 0 : index
    %c7 = arith.constant 7 : index
    %c0_233 = arith.constant 0 : index
    %455 = vector.load %arg10[%c0_232, %c7, %c0_233] : memref<8x8x128xf32, #tpu.memory_space<vmem>>, vector<8x1x128xf32>
    %456 = vector.shape_cast %455 : vector<8x1x128xf32> to vector<8x128xf32>
    %457 = vector.shape_cast %454 : vector<8x128xf32> to vector<8x1x128xf32>
    tpu.vector_store %arg10[%c0_232, %c7, %c0_233], %457 {strides = array<i32>} : memref<8x8x128xf32, #tpu.memory_space<vmem>>, vector<8x1x128xf32>,
    return
  }
  func.func @transform_0(%arg0: i32) -> (i32, i32) {
    %c0_i32 = arith.constant 0 : i32
    %c0_i32_0 = arith.constant 0 : i32
    return %arg0, %c0_i32 : i32, i32
  }
  func.func @transform_1(%arg0: i32) -> (i32, i32) {
    %c0_i32 = arith.constant 0 : i32
    %c0_i32_0 = arith.constant 0 : i32
    %c0_i32_1 = arith.constant 0 : i32
    return %c0_i32, %c0_i32_0 : i32, i32
  }
  func.func @transform_2(%arg0: i32) -> (i32, i32) {
    %c0_i32 = arith.constant 0 : i32
    %c0_i32_0 = arith.constant 0 : i32
    %c0_i32_1 = arith.constant 0 : i32
    return %c0_i32, %c0_i32_0 : i32, i32
  }
  func.func @transform_3(%arg0: i32) -> (i32, i32) {
    %c0_i32 = arith.constant 0 : i32
    %c0_i32_0 = arith.constant 0 : i32
    %c0_i32_1 = arith.constant 0 : i32
    return %c0_i32, %c0_i32_0 : i32, i32
  }
  func.func @transform_4(%arg0: i32) -> (i32, i32) {
    %c0_i32 = arith.constant 0 : i32
    %c0_i32_0 = arith.constant 0 : i32
    %c0_i32_1 = arith.constant 0 : i32
    return %c0_i32, %c0_i32_0 : i32, i32
  }
  func.func @transform_5(%arg0: i32) -> (i32, i32) {
    %c0_i32 = arith.constant 0 : i32
    %c0_i32_0 = arith.constant 0 : i32
    %c0_i32_1 = arith.constant 0 : i32
    return %c0_i32, %c0_i32_0 : i32, i32
  }
  func.func @transform_6(%arg0: i32) -> (i32, i32) {
    %c0_i32 = arith.constant 0 : i32
    %c0_i32_0 = arith.constant 0 : i32
    %c0_i32_1 = arith.constant 0 : i32
    return %c0_i32, %c0_i32_0 : i32, i32
  }
  func.func @transform_7(%arg0: i32) -> (i32, i32) {
    %c0_i32 = arith.constant 0 : i32
    %c0_i32_0 = arith.constant 0 : i32
    %c0_i32_1 = arith.constant 0 : i32
    return %c0_i32, %c0_i32_0 : i32, i32
  }
  func.func @transform_8(%arg0: i32) -> (i32, i32) {
    %c0_i32 = arith.constant 0 : i32
    %c0_i32_0 = arith.constant 0 : i32
    %c0_i32_1 = arith.constant 0 : i32
    return %c0_i32, %c0_i32_0 : i32, i32
  }
  func.func @transform_9(%arg0: i32) -> (i32, i32, i32) {
    %c0_i32 = arith.constant 0 : i32
    %c0_i32_0 = arith.constant 0 : i32
    %c0_i32_1 = arith.constant 0 : i32
    return %arg0, %c0_i32, %c0_i32_0 : i32, i32, i32
  }
}

module attributes {stable_mosaic.version = 11 : i64} {
  func.func @encoder_stack_kernel(%arg0: i32, %arg1: memref<8x128xf32, #tpu.memory_space<vmem>>, %arg2: memref<1x128x384xbf16, #tpu.memory_space<vmem>>, %arg3: memref<1x1x384xf32, #tpu.memory_space<vmem>>, %arg4: memref<1x128x128xbf16, #tpu.memory_space<vmem>>, %arg5: memref<1x1x128xf32, #tpu.memory_space<vmem>>, %arg6: memref<1x1x128xf32, #tpu.memory_space<vmem>>, %arg7: memref<1x1x128xf32, #tpu.memory_space<vmem>>, %arg8: memref<1x128x256xbf16, #tpu.memory_space<vmem>>, %arg9: memref<1x1x256xf32, #tpu.memory_space<vmem>>, %arg10: memref<1x256x128xbf16, #tpu.memory_space<vmem>>, %arg11: memref<1x1x128xf32, #tpu.memory_space<vmem>>, %arg12: memref<1x1x128xf32, #tpu.memory_space<vmem>>, %arg13: memref<1x1x128xf32, #tpu.memory_space<vmem>>, %arg14: memref<8x128xf32, #tpu.memory_space<vmem>>, %arg15: memref<8x128xf32, #tpu.memory_space<vmem>>) attributes {dimension_semantics = [#tpu.dimension_semantics<arbitrary>], iteration_bounds = array<i64: 2>, scalar_prefetch = 0 : i64, scratch_operands = 1 : i64, tpu.core_type = #tpu.core_type<tc>, window_params = [{pipeline_mode = #tpu.pipeline_mode<synchronous>, transform_indices = @transform_0, window_bounds = array<i64: 8, 128>}, {transform_indices = @transform_1, window_bounds = array<i64: 1, 128, 384>}, {transform_indices = @transform_2, window_bounds = array<i64: 1, 1, 384>}, {transform_indices = @transform_3, window_bounds = array<i64: 1, 128, 128>}, {transform_indices = @transform_4, window_bounds = array<i64: 1, 1, 128>}, {transform_indices = @transform_5, window_bounds = array<i64: 1, 1, 128>}, {transform_indices = @transform_6, window_bounds = array<i64: 1, 1, 128>}, {transform_indices = @transform_7, window_bounds = array<i64: 1, 128, 256>}, {transform_indices = @transform_8, window_bounds = array<i64: 1, 1, 256>}, {transform_indices = @transform_9, window_bounds = array<i64: 1, 256, 128>}, {transform_indices = @transform_10, window_bounds = array<i64: 1, 1, 128>}, {transform_indices = @transform_11, window_bounds = array<i64: 1, 1, 128>}, {transform_indices = @transform_12, window_bounds = array<i64: 1, 1, 128>}, {pipeline_mode = #tpu.pipeline_mode<synchronous>, transform_indices = @transform_13, window_bounds = array<i64: 8, 128>}]} {
    %c0_i32 = arith.constant 0 : i32
    %0 = arith.cmpi eq, %arg0, %c0_i32 : i32
    %1 = arith.extui %0 : i1 to i32
    %c0_i32_0 = arith.constant 0 : i32
    %2 = arith.cmpi ne, %1, %c0_i32_0 : i32
    scf.if %2 {
      %c0_88 = arith.constant 0 : index
      %c0_89 = arith.constant 0 : index
      %208 = vector.load %arg1[%c0_88, %c0_89] : memref<8x128xf32, #tpu.memory_space<vmem>>, vector<8x128xf32>
      %c0_90 = arith.constant 0 : index
      %c0_91 = arith.constant 0 : index
      %209 = vector.load %arg15[%c0_90, %c0_91] : memref<8x128xf32, #tpu.memory_space<vmem>>, vector<8x128xf32>
      tpu.vector_store %arg15[%c0_90, %c0_91], %208 {strides = array<i32>} : memref<8x128xf32, #tpu.memory_space<vmem>>, vector<8x128xf32>,
    } else {
    }
    %c0 = arith.constant 0 : index
    %c0_1 = arith.constant 0 : index
    %3 = vector.load %arg15[%c0, %c0_1] : memref<8x128xf32, #tpu.memory_space<vmem>>, vector<8x128xf32>
    %4 = arith.truncf %3 : vector<8x128xf32> to vector<8x128xbf16>
    %c0_2 = arith.constant 0 : index
    %c0_3 = arith.constant 0 : index
    %c0_4 = arith.constant 0 : index
    %5 = vector.load %arg2[%c0_2, %c0_3, %c0_4] : memref<1x128x384xbf16, #tpu.memory_space<vmem>>, vector<1x128x384xbf16>
    %6 = vector.shape_cast %5 : vector<1x128x384xbf16> to vector<128x384xbf16>
    %cst = arith.constant dense<0.000000e+00> : vector<8x384xf32>
    %7 = tpu.matmul %4, %6, %cst {dimension_numbers = #tpu.dot_dimension_numbers<[1], [0], [0], [1], [0, 0, 1, 1], [], []>} : vector<8x128xbf16>, vector<128x384xbf16>, vector<8x384xf32> -> vector<8x384xf32>
    %c0_5 = arith.constant 0 : index
    %c0_6 = arith.constant 0 : index
    %c0_7 = arith.constant 0 : index
    %8 = vector.load %arg3[%c0_5, %c0_6, %c0_7] : memref<1x1x384xf32, #tpu.memory_space<vmem>>, vector<1x1x384xf32>
    %9 = vector.shape_cast %8 : vector<1x1x384xf32> to vector<1x384xf32>
    %10 = vector.broadcast %9 : vector<1x384xf32> to vector<8x384xf32>
    %11 = arith.addf %7, %10 : vector<8x384xf32>
    %cst_8 = arith.constant 0.000000e+00 : f32
    %12 = vector.broadcast %cst_8 : f32 to vector<8x128xf32>
    %13 = vector.extract_strided_slice %11 {offsets = [0, 0], sizes = [8, 32], strides = [1, 1]} : vector<8x384xf32> to vector<8x32xf32>
    %14 = arith.truncf %13 : vector<8x32xf32> to vector<8x32xbf16>
    %15 = vector.extract_strided_slice %11 {offsets = [0, 128], sizes = [8, 32], strides = [1, 1]} : vector<8x384xf32> to vector<8x32xf32>
    %16 = arith.truncf %15 : vector<8x32xf32> to vector<8x32xbf16>
    %17 = vector.extract_strided_slice %11 {offsets = [0, 256], sizes = [8, 32], strides = [1, 1]} : vector<8x384xf32> to vector<8x32xf32>
    %18 = arith.truncf %17 : vector<8x32xf32> to vector<8x32xbf16>
    %cst_9 = arith.constant dense<0.000000e+00> : vector<8x8xf32>
    %19 = tpu.matmul %14, %16, %cst_9 {dimension_numbers = #tpu.dot_dimension_numbers<[1], [1], [0], [0], [0, 0, 1, 0], [], []>} : vector<8x32xbf16>, vector<8x32xbf16>, vector<8x8xf32> -> vector<8x8xf32>
    %cst_10 = arith.constant 0.176776692 : f32
    %20 = vector.broadcast %cst_10 : f32 to vector<8x8xf32>
    %21 = arith.mulf %19, %20 : vector<8x8xf32>
    %cst_11 = arith.constant dense<0xFF800000> : vector<8xf32>
    %22 = vector.multi_reduction <maximumf>, %21, %cst_11 [1] : vector<8x8xf32> to vector<8xf32>
    %23 = vector.shape_cast %22 : vector<8xf32> to vector<8x1xf32>
    %24 = vector.broadcast %23 : vector<8x1xf32> to vector<8x8xf32>
    %25 = arith.subf %21, %24 : vector<8x8xf32>
    %26 = math.exp %25 : vector<8x8xf32>
    %cst_12 = arith.constant dense<0.000000e+00> : vector<8xf32>
    %27 = vector.multi_reduction <add>, %26, %cst_12 [1] : vector<8x8xf32> to vector<8xf32>
    %28 = vector.shape_cast %27 : vector<8xf32> to vector<8x1xf32>
    %29 = tpu.reciprocal %28 {approx = true} : vector<8x1xf32> -> vector<8x1xf32>
    %30 = vector.broadcast %29 : vector<8x1xf32> to vector<8x8xf32>
    %31 = arith.mulf %26, %30 : vector<8x8xf32>
    %32 = arith.truncf %31 : vector<8x8xf32> to vector<8x8xbf16>
    %cst_13 = arith.constant dense<0.000000e+00> : vector<8x32xf32>
    %33 = tpu.matmul %32, %18, %cst_13 {dimension_numbers = #tpu.dot_dimension_numbers<[1], [0], [0], [1], [0, 0, 1, 1], [], []>} : vector<8x8xbf16>, vector<8x32xbf16>, vector<8x32xf32> -> vector<8x32xf32>
    %34 = arith.truncf %33 : vector<8x32xf32> to vector<8x32xbf16>
    %c0_14 = arith.constant 0 : index
    %c0_15 = arith.constant 0 : index
    %c0_16 = arith.constant 0 : index
    %35 = vector.load %arg4[%c0_14, %c0_15, %c0_16] : memref<1x128x128xbf16, #tpu.memory_space<vmem>>, vector<1x32x128xbf16>
    %36 = vector.shape_cast %35 : vector<1x32x128xbf16> to vector<32x128xbf16>
    %cst_17 = arith.constant dense<0.000000e+00> : vector<8x128xf32>
    %37 = tpu.matmul %34, %36, %cst_17 {dimension_numbers = #tpu.dot_dimension_numbers<[1], [0], [0], [1], [0, 0, 1, 1], [], []>} : vector<8x32xbf16>, vector<32x128xbf16>, vector<8x128xf32> -> vector<8x128xf32>
    %38 = arith.addf %12, %37 : vector<8x128xf32>
    %39 = vector.extract_strided_slice %11 {offsets = [0, 32], sizes = [8, 32], strides = [1, 1]} : vector<8x384xf32> to vector<8x32xf32>
    %40 = arith.truncf %39 : vector<8x32xf32> to vector<8x32xbf16>
    %41 = vector.extract_strided_slice %11 {offsets = [0, 160], sizes = [8, 32], strides = [1, 1]} : vector<8x384xf32> to vector<8x32xf32>
    %42 = arith.truncf %41 : vector<8x32xf32> to vector<8x32xbf16>
    %43 = vector.extract_strided_slice %11 {offsets = [0, 288], sizes = [8, 32], strides = [1, 1]} : vector<8x384xf32> to vector<8x32xf32>
    %44 = arith.truncf %43 : vector<8x32xf32> to vector<8x32xbf16>
    %cst_18 = arith.constant dense<0.000000e+00> : vector<8x8xf32>
    %45 = tpu.matmul %40, %42, %cst_18 {dimension_numbers = #tpu.dot_dimension_numbers<[1], [1], [0], [0], [0, 0, 1, 0], [], []>} : vector<8x32xbf16>, vector<8x32xbf16>, vector<8x8xf32> -> vector<8x8xf32>
    %cst_19 = arith.constant 0.176776692 : f32
    %46 = vector.broadcast %cst_19 : f32 to vector<8x8xf32>
    %47 = arith.mulf %45, %46 : vector<8x8xf32>
    %cst_20 = arith.constant dense<0xFF800000> : vector<8xf32>
    %48 = vector.multi_reduction <maximumf>, %47, %cst_20 [1] : vector<8x8xf32> to vector<8xf32>
    %49 = vector.shape_cast %48 : vector<8xf32> to vector<8x1xf32>
    %50 = vector.broadcast %49 : vector<8x1xf32> to vector<8x8xf32>
    %51 = arith.subf %47, %50 : vector<8x8xf32>
    %52 = math.exp %51 : vector<8x8xf32>
    %cst_21 = arith.constant dense<0.000000e+00> : vector<8xf32>
    %53 = vector.multi_reduction <add>, %52, %cst_21 [1] : vector<8x8xf32> to vector<8xf32>
    %54 = vector.shape_cast %53 : vector<8xf32> to vector<8x1xf32>
    %55 = tpu.reciprocal %54 {approx = true} : vector<8x1xf32> -> vector<8x1xf32>
    %56 = vector.broadcast %55 : vector<8x1xf32> to vector<8x8xf32>
    %57 = arith.mulf %52, %56 : vector<8x8xf32>
    %58 = arith.truncf %57 : vector<8x8xf32> to vector<8x8xbf16>
    %cst_22 = arith.constant dense<0.000000e+00> : vector<8x32xf32>
    %59 = tpu.matmul %58, %44, %cst_22 {dimension_numbers = #tpu.dot_dimension_numbers<[1], [0], [0], [1], [0, 0, 1, 1], [], []>} : vector<8x8xbf16>, vector<8x32xbf16>, vector<8x32xf32> -> vector<8x32xf32>
    %60 = arith.truncf %59 : vector<8x32xf32> to vector<8x32xbf16>
    %c0_23 = arith.constant 0 : index
    %c32 = arith.constant 32 : index
    %c0_24 = arith.constant 0 : index
    %61 = vector.load %arg4[%c0_23, %c32, %c0_24] : memref<1x128x128xbf16, #tpu.memory_space<vmem>>, vector<1x32x128xbf16>
    %62 = vector.shape_cast %61 : vector<1x32x128xbf16> to vector<32x128xbf16>
    %cst_25 = arith.constant dense<0.000000e+00> : vector<8x128xf32>
    %63 = tpu.matmul %60, %62, %cst_25 {dimension_numbers = #tpu.dot_dimension_numbers<[1], [0], [0], [1], [0, 0, 1, 1], [], []>} : vector<8x32xbf16>, vector<32x128xbf16>, vector<8x128xf32> -> vector<8x128xf32>
    %64 = arith.addf %38, %63 : vector<8x128xf32>
    %65 = vector.extract_strided_slice %11 {offsets = [0, 64], sizes = [8, 32], strides = [1, 1]} : vector<8x384xf32> to vector<8x32xf32>
    %66 = arith.truncf %65 : vector<8x32xf32> to vector<8x32xbf16>
    %67 = vector.extract_strided_slice %11 {offsets = [0, 192], sizes = [8, 32], strides = [1, 1]} : vector<8x384xf32> to vector<8x32xf32>
    %68 = arith.truncf %67 : vector<8x32xf32> to vector<8x32xbf16>
    %69 = vector.extract_strided_slice %11 {offsets = [0, 320], sizes = [8, 32], strides = [1, 1]} : vector<8x384xf32> to vector<8x32xf32>
    %70 = arith.truncf %69 : vector<8x32xf32> to vector<8x32xbf16>
    %cst_26 = arith.constant dense<0.000000e+00> : vector<8x8xf32>
    %71 = tpu.matmul %66, %68, %cst_26 {dimension_numbers = #tpu.dot_dimension_numbers<[1], [1], [0], [0], [0, 0, 1, 0], [], []>} : vector<8x32xbf16>, vector<8x32xbf16>, vector<8x8xf32> -> vector<8x8xf32>
    %cst_27 = arith.constant 0.176776692 : f32
    %72 = vector.broadcast %cst_27 : f32 to vector<8x8xf32>
    %73 = arith.mulf %71, %72 : vector<8x8xf32>
    %cst_28 = arith.constant dense<0xFF800000> : vector<8xf32>
    %74 = vector.multi_reduction <maximumf>, %73, %cst_28 [1] : vector<8x8xf32> to vector<8xf32>
    %75 = vector.shape_cast %74 : vector<8xf32> to vector<8x1xf32>
    %76 = vector.broadcast %75 : vector<8x1xf32> to vector<8x8xf32>
    %77 = arith.subf %73, %76 : vector<8x8xf32>
    %78 = math.exp %77 : vector<8x8xf32>
    %cst_29 = arith.constant dense<0.000000e+00> : vector<8xf32>
    %79 = vector.multi_reduction <add>, %78, %cst_29 [1] : vector<8x8xf32> to vector<8xf32>
    %80 = vector.shape_cast %79 : vector<8xf32> to vector<8x1xf32>
    %81 = tpu.reciprocal %80 {approx = true} : vector<8x1xf32> -> vector<8x1xf32>
    %82 = vector.broadcast %81 : vector<8x1xf32> to vector<8x8xf32>
    %83 = arith.mulf %78, %82 : vector<8x8xf32>
    %84 = arith.truncf %83 : vector<8x8xf32> to vector<8x8xbf16>
    %cst_30 = arith.constant dense<0.000000e+00> : vector<8x32xf32>
    %85 = tpu.matmul %84, %70, %cst_30 {dimension_numbers = #tpu.dot_dimension_numbers<[1], [0], [0], [1], [0, 0, 1, 1], [], []>} : vector<8x8xbf16>, vector<8x32xbf16>, vector<8x32xf32> -> vector<8x32xf32>
    %86 = arith.truncf %85 : vector<8x32xf32> to vector<8x32xbf16>
    %c0_31 = arith.constant 0 : index
    %c64 = arith.constant 64 : index
    %c0_32 = arith.constant 0 : index
    %87 = vector.load %arg4[%c0_31, %c64, %c0_32] : memref<1x128x128xbf16, #tpu.memory_space<vmem>>, vector<1x32x128xbf16>
    %88 = vector.shape_cast %87 : vector<1x32x128xbf16> to vector<32x128xbf16>
    %cst_33 = arith.constant dense<0.000000e+00> : vector<8x128xf32>
    %89 = tpu.matmul %86, %88, %cst_33 {dimension_numbers = #tpu.dot_dimension_numbers<[1], [0], [0], [1], [0, 0, 1, 1], [], []>} : vector<8x32xbf16>, vector<32x128xbf16>, vector<8x128xf32> -> vector<8x128xf32>
    %90 = arith.addf %64, %89 : vector<8x128xf32>
    %91 = vector.extract_strided_slice %11 {offsets = [0, 96], sizes = [8, 32], strides = [1, 1]} : vector<8x384xf32> to vector<8x32xf32>
    %92 = arith.truncf %91 : vector<8x32xf32> to vector<8x32xbf16>
    %93 = vector.extract_strided_slice %11 {offsets = [0, 224], sizes = [8, 32], strides = [1, 1]} : vector<8x384xf32> to vector<8x32xf32>
    %94 = arith.truncf %93 : vector<8x32xf32> to vector<8x32xbf16>
    %95 = vector.extract_strided_slice %11 {offsets = [0, 352], sizes = [8, 32], strides = [1, 1]} : vector<8x384xf32> to vector<8x32xf32>
    %96 = arith.truncf %95 : vector<8x32xf32> to vector<8x32xbf16>
    %cst_34 = arith.constant dense<0.000000e+00> : vector<8x8xf32>
    %97 = tpu.matmul %92, %94, %cst_34 {dimension_numbers = #tpu.dot_dimension_numbers<[1], [1], [0], [0], [0, 0, 1, 0], [], []>} : vector<8x32xbf16>, vector<8x32xbf16>, vector<8x8xf32> -> vector<8x8xf32>
    %cst_35 = arith.constant 0.176776692 : f32
    %98 = vector.broadcast %cst_35 : f32 to vector<8x8xf32>
    %99 = arith.mulf %97, %98 : vector<8x8xf32>
    %cst_36 = arith.constant dense<0xFF800000> : vector<8xf32>
    %100 = vector.multi_reduction <maximumf>, %99, %cst_36 [1] : vector<8x8xf32> to vector<8xf32>
    %101 = vector.shape_cast %100 : vector<8xf32> to vector<8x1xf32>
    %102 = vector.broadcast %101 : vector<8x1xf32> to vector<8x8xf32>
    %103 = arith.subf %99, %102 : vector<8x8xf32>
    %104 = math.exp %103 : vector<8x8xf32>
    %cst_37 = arith.constant dense<0.000000e+00> : vector<8xf32>
    %105 = vector.multi_reduction <add>, %104, %cst_37 [1] : vector<8x8xf32> to vector<8xf32>
    %106 = vector.shape_cast %105 : vector<8xf32> to vector<8x1xf32>
    %107 = tpu.reciprocal %106 {approx = true} : vector<8x1xf32> -> vector<8x1xf32>
    %108 = vector.broadcast %107 : vector<8x1xf32> to vector<8x8xf32>
    %109 = arith.mulf %104, %108 : vector<8x8xf32>
    %110 = arith.truncf %109 : vector<8x8xf32> to vector<8x8xbf16>
    %cst_38 = arith.constant dense<0.000000e+00> : vector<8x32xf32>
    %111 = tpu.matmul %110, %96, %cst_38 {dimension_numbers = #tpu.dot_dimension_numbers<[1], [0], [0], [1], [0, 0, 1, 1], [], []>} : vector<8x8xbf16>, vector<8x32xbf16>, vector<8x32xf32> -> vector<8x32xf32>
    %112 = arith.truncf %111 : vector<8x32xf32> to vector<8x32xbf16>
    %c0_39 = arith.constant 0 : index
    %c96 = arith.constant 96 : index
    %c0_40 = arith.constant 0 : index
    %113 = vector.load %arg4[%c0_39, %c96, %c0_40] : memref<1x128x128xbf16, #tpu.memory_space<vmem>>, vector<1x32x128xbf16>
    %114 = vector.shape_cast %113 : vector<1x32x128xbf16> to vector<32x128xbf16>
    %cst_41 = arith.constant dense<0.000000e+00> : vector<8x128xf32>
    %115 = tpu.matmul %112, %114, %cst_41 {dimension_numbers = #tpu.dot_dimension_numbers<[1], [0], [0], [1], [0, 0, 1, 1], [], []>} : vector<8x32xbf16>, vector<32x128xbf16>, vector<8x128xf32> -> vector<8x128xf32>
    %116 = arith.addf %90, %115 : vector<8x128xf32>
    %117 = arith.addf %3, %116 : vector<8x128xf32>
    %c0_42 = arith.constant 0 : index
    %c0_43 = arith.constant 0 : index
    %c0_44 = arith.constant 0 : index
    %118 = vector.load %arg5[%c0_42, %c0_43, %c0_44] : memref<1x1x128xf32, #tpu.memory_space<vmem>>, vector<1x1x128xf32>
    %119 = vector.shape_cast %118 : vector<1x1x128xf32> to vector<1x128xf32>
    %120 = vector.broadcast %119 : vector<1x128xf32> to vector<8x128xf32>
    %121 = arith.addf %117, %120 : vector<8x128xf32>
    %c0_45 = arith.constant 0 : index
    %c0_46 = arith.constant 0 : index
    %c0_47 = arith.constant 0 : index
    %122 = vector.load %arg6[%c0_45, %c0_46, %c0_47] : memref<1x1x128xf32, #tpu.memory_space<vmem>>, vector<1x1x128xf32>
    %123 = vector.shape_cast %122 : vector<1x1x128xf32> to vector<1x128xf32>
    %c0_48 = arith.constant 0 : index
    %c0_49 = arith.constant 0 : index
    %c0_50 = arith.constant 0 : index
    %124 = vector.load %arg7[%c0_48, %c0_49, %c0_50] : memref<1x1x128xf32, #tpu.memory_space<vmem>>, vector<1x1x128xf32>
    %125 = vector.shape_cast %124 : vector<1x1x128xf32> to vector<1x128xf32>
    %cst_51 = arith.constant dense<0.000000e+00> : vector<8xf32>
    %126 = vector.multi_reduction <add>, %121, %cst_51 [1] : vector<8x128xf32> to vector<8xf32>
    %127 = vector.shape_cast %126 : vector<8xf32> to vector<8x1xf32>
    %cst_52 = arith.constant 1.280000e+02 : f32
    %128 = vector.broadcast %cst_52 : f32 to vector<8x1xf32>
    %129 = arith.divf %127, %128 : vector<8x1xf32>
    %130 = vector.broadcast %129 : vector<8x1xf32> to vector<8x128xf32>
    %131 = arith.subf %121, %130 : vector<8x128xf32>
    %132 = arith.mulf %131, %131 : vector<8x128xf32>
    %cst_53 = arith.constant dense<0.000000e+00> : vector<8xf32>
    %133 = vector.multi_reduction <add>, %132, %cst_53 [1] : vector<8x128xf32> to vector<8xf32>
    %134 = vector.shape_cast %133 : vector<8xf32> to vector<8x1xf32>
    %cst_54 = arith.constant 1.280000e+02 : f32
    %135 = vector.broadcast %cst_54 : f32 to vector<8x1xf32>
    %136 = arith.divf %134, %135 : vector<8x1xf32>
    %137 = vector.broadcast %129 : vector<8x1xf32> to vector<8x128xf32>
    %138 = arith.subf %121, %137 : vector<8x128xf32>
    %cst_55 = arith.constant 9.99999974E-6 : f32
    %139 = vector.broadcast %cst_55 : f32 to vector<8x1xf32>
    %140 = arith.addf %136, %139 : vector<8x1xf32>
    %141 = math.rsqrt %140 : vector<8x1xf32>
    %142 = vector.broadcast %141 : vector<8x1xf32> to vector<8x128xf32>
    %143 = arith.mulf %138, %142 : vector<8x128xf32>
    %144 = vector.broadcast %123 : vector<1x128xf32> to vector<8x128xf32>
    %145 = arith.mulf %143, %144 : vector<8x128xf32>
    %146 = vector.broadcast %125 : vector<1x128xf32> to vector<8x128xf32>
    %147 = arith.addf %145, %146 : vector<8x128xf32>
    %148 = arith.truncf %147 : vector<8x128xf32> to vector<8x128xbf16>
    %c0_56 = arith.constant 0 : index
    %c0_57 = arith.constant 0 : index
    %c0_58 = arith.constant 0 : index
    %149 = vector.load %arg8[%c0_56, %c0_57, %c0_58] : memref<1x128x256xbf16, #tpu.memory_space<vmem>>, vector<1x128x256xbf16>
    %150 = vector.shape_cast %149 : vector<1x128x256xbf16> to vector<128x256xbf16>
    %cst_59 = arith.constant dense<0.000000e+00> : vector<8x256xf32>
    %151 = tpu.matmul %148, %150, %cst_59 {dimension_numbers = #tpu.dot_dimension_numbers<[1], [0], [0], [1], [0, 0, 1, 1], [], []>} : vector<8x128xbf16>, vector<128x256xbf16>, vector<8x256xf32> -> vector<8x256xf32>
    %c0_60 = arith.constant 0 : index
    %c0_61 = arith.constant 0 : index
    %c0_62 = arith.constant 0 : index
    %152 = vector.load %arg9[%c0_60, %c0_61, %c0_62] : memref<1x1x256xf32, #tpu.memory_space<vmem>>, vector<1x1x256xf32>
    %153 = vector.shape_cast %152 : vector<1x1x256xf32> to vector<1x256xf32>
    %154 = vector.broadcast %153 : vector<1x256xf32> to vector<8x256xf32>
    %155 = arith.addf %151, %154 : vector<8x256xf32>
    %cst_63 = arith.constant 5.000000e-01 : f32
    %156 = vector.broadcast %cst_63 : f32 to vector<8x256xf32>
    %157 = arith.mulf %156, %155 : vector<8x256xf32>
    %cst_64 = arith.constant 4.471500e-02 : f32
    %158 = vector.broadcast %cst_64 : f32 to vector<8x256xf32>
    %159 = arith.mulf %158, %155 : vector<8x256xf32>
    %160 = arith.mulf %159, %155 : vector<8x256xf32>
    %161 = arith.mulf %160, %155 : vector<8x256xf32>
    %162 = arith.addf %155, %161 : vector<8x256xf32>
    %cst_65 = arith.constant 0.797884583 : f32
    %163 = vector.broadcast %cst_65 : f32 to vector<8x256xf32>
    %164 = arith.mulf %163, %162 : vector<8x256xf32>
    %165 = math.tanh %164 : vector<8x256xf32>
    %cst_66 = arith.constant 1.000000e+00 : f32
    %166 = vector.broadcast %cst_66 : f32 to vector<8x256xf32>
    %167 = arith.addf %166, %165 : vector<8x256xf32>
    %168 = arith.mulf %157, %167 : vector<8x256xf32>
    %169 = arith.truncf %168 : vector<8x256xf32> to vector<8x256xbf16>
    %c0_67 = arith.constant 0 : index
    %c0_68 = arith.constant 0 : index
    %c0_69 = arith.constant 0 : index
    %170 = vector.load %arg10[%c0_67, %c0_68, %c0_69] : memref<1x256x128xbf16, #tpu.memory_space<vmem>>, vector<1x256x128xbf16>
    %171 = vector.shape_cast %170 : vector<1x256x128xbf16> to vector<256x128xbf16>
    %cst_70 = arith.constant dense<0.000000e+00> : vector<8x128xf32>
    %172 = tpu.matmul %169, %171, %cst_70 {dimension_numbers = #tpu.dot_dimension_numbers<[1], [0], [0], [1], [0, 0, 1, 1], [], []>} : vector<8x256xbf16>, vector<256x128xbf16>, vector<8x128xf32> -> vector<8x128xf32>
    %c0_71 = arith.constant 0 : index
    %c0_72 = arith.constant 0 : index
    %c0_73 = arith.constant 0 : index
    %173 = vector.load %arg11[%c0_71, %c0_72, %c0_73] : memref<1x1x128xf32, #tpu.memory_space<vmem>>, vector<1x1x128xf32>
    %174 = vector.shape_cast %173 : vector<1x1x128xf32> to vector<1x128xf32>
    %175 = vector.broadcast %174 : vector<1x128xf32> to vector<8x128xf32>
    %176 = arith.addf %172, %175 : vector<8x128xf32>
    %177 = arith.addf %147, %176 : vector<8x128xf32>
    %c0_74 = arith.constant 0 : index
    %c0_75 = arith.constant 0 : index
    %c0_76 = arith.constant 0 : index
    %178 = vector.load %arg12[%c0_74, %c0_75, %c0_76] : memref<1x1x128xf32, #tpu.memory_space<vmem>>, vector<1x1x128xf32>
    %179 = vector.shape_cast %178 : vector<1x1x128xf32> to vector<1x128xf32>
    %c0_77 = arith.constant 0 : index
    %c0_78 = arith.constant 0 : index
    %c0_79 = arith.constant 0 : index
    %180 = vector.load %arg13[%c0_77, %c0_78, %c0_79] : memref<1x1x128xf32, #tpu.memory_space<vmem>>, vector<1x1x128xf32>
    %181 = vector.shape_cast %180 : vector<1x1x128xf32> to vector<1x128xf32>
    %cst_80 = arith.constant dense<0.000000e+00> : vector<8xf32>
    %182 = vector.multi_reduction <add>, %177, %cst_80 [1] : vector<8x128xf32> to vector<8xf32>
    %183 = vector.shape_cast %182 : vector<8xf32> to vector<8x1xf32>
    %cst_81 = arith.constant 1.280000e+02 : f32
    %184 = vector.broadcast %cst_81 : f32 to vector<8x1xf32>
    %185 = arith.divf %183, %184 : vector<8x1xf32>
    %186 = vector.broadcast %185 : vector<8x1xf32> to vector<8x128xf32>
    %187 = arith.subf %177, %186 : vector<8x128xf32>
    %188 = arith.mulf %187, %187 : vector<8x128xf32>
    %cst_82 = arith.constant dense<0.000000e+00> : vector<8xf32>
    %189 = vector.multi_reduction <add>, %188, %cst_82 [1] : vector<8x128xf32> to vector<8xf32>
    %190 = vector.shape_cast %189 : vector<8xf32> to vector<8x1xf32>
    %cst_83 = arith.constant 1.280000e+02 : f32
    %191 = vector.broadcast %cst_83 : f32 to vector<8x1xf32>
    %192 = arith.divf %190, %191 : vector<8x1xf32>
    %193 = vector.broadcast %185 : vector<8x1xf32> to vector<8x128xf32>
    %194 = arith.subf %177, %193 : vector<8x128xf32>
    %cst_84 = arith.constant 9.99999974E-6 : f32
    %195 = vector.broadcast %cst_84 : f32 to vector<8x1xf32>
    %196 = arith.addf %192, %195 : vector<8x1xf32>
    %197 = math.rsqrt %196 : vector<8x1xf32>
    %198 = vector.broadcast %197 : vector<8x1xf32> to vector<8x128xf32>
    %199 = arith.mulf %194, %198 : vector<8x128xf32>
    %200 = vector.broadcast %179 : vector<1x128xf32> to vector<8x128xf32>
    %201 = arith.mulf %199, %200 : vector<8x128xf32>
    %202 = vector.broadcast %181 : vector<1x128xf32> to vector<8x128xf32>
    %203 = arith.addf %201, %202 : vector<8x128xf32>
    %c0_85 = arith.constant 0 : index
    %c0_86 = arith.constant 0 : index
    %204 = vector.load %arg15[%c0_85, %c0_86] : memref<8x128xf32, #tpu.memory_space<vmem>>, vector<8x128xf32>
    tpu.vector_store %arg15[%c0_85, %c0_86], %203 {strides = array<i32>} : memref<8x128xf32, #tpu.memory_space<vmem>>, vector<8x128xf32>,
    %c1_i32 = arith.constant 1 : i32
    %205 = arith.cmpi eq, %arg0, %c1_i32 : i32
    %206 = arith.extui %205 : i1 to i32
    %c0_i32_87 = arith.constant 0 : i32
    %207 = arith.cmpi ne, %206, %c0_i32_87 : i32
    scf.if %207 {
      %c0_88 = arith.constant 0 : index
      %c0_89 = arith.constant 0 : index
      %208 = vector.load %arg14[%c0_88, %c0_89] : memref<8x128xf32, #tpu.memory_space<vmem>>, vector<8x128xf32>
      tpu.vector_store %arg14[%c0_88, %c0_89], %203 {strides = array<i32>} : memref<8x128xf32, #tpu.memory_space<vmem>>, vector<8x128xf32>,
    } else {
    }
    return
  }
  func.func @transform_0(%arg0: i32) -> (i32, i32) {
    %c0_i32 = arith.constant 0 : i32
    %c0_i32_0 = arith.constant 0 : i32
    %c0_i32_1 = arith.constant 0 : i32
    return %c0_i32, %c0_i32_0 : i32, i32
  }
  func.func @transform_1(%arg0: i32) -> (i32, i32, i32) {
    %c0_i32 = arith.constant 0 : i32
    %c0_i32_0 = arith.constant 0 : i32
    %c0_i32_1 = arith.constant 0 : i32
    return %arg0, %c0_i32, %c0_i32_0 : i32, i32, i32
  }
  func.func @transform_2(%arg0: i32) -> (i32, i32, i32) {
    %c0_i32 = arith.constant 0 : i32
    %c0_i32_0 = arith.constant 0 : i32
    %c0_i32_1 = arith.constant 0 : i32
    return %arg0, %c0_i32, %c0_i32_0 : i32, i32, i32
  }
  func.func @transform_3(%arg0: i32) -> (i32, i32, i32) {
    %c0_i32 = arith.constant 0 : i32
    %c0_i32_0 = arith.constant 0 : i32
    %c0_i32_1 = arith.constant 0 : i32
    return %arg0, %c0_i32, %c0_i32_0 : i32, i32, i32
  }
  func.func @transform_4(%arg0: i32) -> (i32, i32, i32) {
    %c0_i32 = arith.constant 0 : i32
    %c0_i32_0 = arith.constant 0 : i32
    %c0_i32_1 = arith.constant 0 : i32
    return %arg0, %c0_i32, %c0_i32_0 : i32, i32, i32
  }
  func.func @transform_5(%arg0: i32) -> (i32, i32, i32) {
    %c0_i32 = arith.constant 0 : i32
    %c0_i32_0 = arith.constant 0 : i32
    %c0_i32_1 = arith.constant 0 : i32
    return %arg0, %c0_i32, %c0_i32_0 : i32, i32, i32
  }
  func.func @transform_6(%arg0: i32) -> (i32, i32, i32) {
    %c0_i32 = arith.constant 0 : i32
    %c0_i32_0 = arith.constant 0 : i32
    %c0_i32_1 = arith.constant 0 : i32
    return %arg0, %c0_i32, %c0_i32_0 : i32, i32, i32
  }
  func.func @transform_7(%arg0: i32) -> (i32, i32, i32) {
    %c0_i32 = arith.constant 0 : i32
    %c0_i32_0 = arith.constant 0 : i32
    %c0_i32_1 = arith.constant 0 : i32
    return %arg0, %c0_i32, %c0_i32_0 : i32, i32, i32
  }
  func.func @transform_8(%arg0: i32) -> (i32, i32, i32) {
    %c0_i32 = arith.constant 0 : i32
    %c0_i32_0 = arith.constant 0 : i32
    %c0_i32_1 = arith.constant 0 : i32
    return %arg0, %c0_i32, %c0_i32_0 : i32, i32, i32
  }
  func.func @transform_9(%arg0: i32) -> (i32, i32, i32) {
    %c0_i32 = arith.constant 0 : i32
    %c0_i32_0 = arith.constant 0 : i32
    %c0_i32_1 = arith.constant 0 : i32
    return %arg0, %c0_i32, %c0_i32_0 : i32, i32, i32
  }
  func.func @transform_10(%arg0: i32) -> (i32, i32, i32) {
    %c0_i32 = arith.constant 0 : i32
    %c0_i32_0 = arith.constant 0 : i32
    %c0_i32_1 = arith.constant 0 : i32
    return %arg0, %c0_i32, %c0_i32_0 : i32, i32, i32
  }
  func.func @transform_11(%arg0: i32) -> (i32, i32, i32) {
    %c0_i32 = arith.constant 0 : i32
    %c0_i32_0 = arith.constant 0 : i32
    %c0_i32_1 = arith.constant 0 : i32
    return %arg0, %c0_i32, %c0_i32_0 : i32, i32, i32
  }
  func.func @transform_12(%arg0: i32) -> (i32, i32, i32) {
    %c0_i32 = arith.constant 0 : i32
    %c0_i32_0 = arith.constant 0 : i32
    %c0_i32_1 = arith.constant 0 : i32
    return %arg0, %c0_i32, %c0_i32_0 : i32, i32, i32
  }
  func.func @transform_13(%arg0: i32) -> (i32, i32) {
    %c0_i32 = arith.constant 0 : i32
    %c0_i32_0 = arith.constant 0 : i32
    %c0_i32_1 = arith.constant 0 : i32
    return %c0_i32, %c0_i32_0 : i32, i32
  }
}

</mosaic_0001>

<llo_original>
// kernel: musicbert_forward.3
$region0: #{musicbert_forward.3}
  #allocation0 [shape = 'u32[]', space=smem, size = 0x4, offset = 0x4, fixed_abs, tag = 'smem constant byte address 0x4 - core index']
  #allocation1 [shape = 'u32[72,128]{1,0:T(1,128)}', space=vmem, size = 0x9000, scoped, tag = 'internal scratch']
  %s0 = inlined_call_operand.vmem [shape: bf16[8,1024], index: 0, kind: input, shape index: {}]
  %s1 = inlined_call_operand.hbm [shape: bf16[1024,128], index: 1, kind: input, shape index: {}]
  %s2 = inlined_call_operand.vmem [shape: f32[1,128], index: 2, kind: input, shape index: {}]
  %s3 = inlined_call_operand.vmem [shape: f32[8,128], index: 3, kind: input, shape index: {}]
  %s4 = inlined_call_operand.vmem [shape: f32[1,128], index: 4, kind: input, shape index: {}]
  %s5 = inlined_call_operand.vmem [shape: f32[1,128], index: 5, kind: input, shape index: {}]
  %s6 = inlined_call_operand.vmem [shape: f32[8,128], index: 6, kind: output, shape index: {}]
  %s7 = sld [smem:[#allocation0]]
  $region38: #{musicbert_forward.3} parent=0
    _
  %s9 = ssub.s32 1, %s7
  %s10 = scalar_select 0, %s9, %s7
  $region1: #{musicbert_forward.3} parent=0
    #allocation2 [shape = 'u8[262144]{0}', space=vmem, size = 0x40000, scoped, tag = 'input window, operand 1, single buffered']
    #allocation3 [shape = 's32[1]{0}', space=sflag, size = 0x4, scoped, tag = 'scoped memory for musicbert_forward.3']
    %11 = vsyncpa [#allocation3], 0
    // Predicated region
    $region2: #{musicbert_forward.3} parent=1 // pred_check
      _
    $region3: #{musicbert_forward.3} parent=1 // pred_check_branch
      %13 = sbr.rel (0) target = $region5
    $region4: #{musicbert_forward.3} parent=1 // pred_region
      _
    $region5: #{musicbert_forward.3} parent=1 // pred_fallthru
      _
    // Predicated region
    $region6: #{musicbert_forward.3} parent=1 // pred_check
      _
    $region7: #{musicbert_forward.3} parent=1 // pred_check_branch
      %15 = sbr.rel (0) target = $region9
    $region8: #{musicbert_forward.3} parent=1 // pred_region
      %17 = vsyncadd [#allocation3], 0
      %s18 = sshll.u32 %s1, 4
      %s19 = int_to_ptr.hbm [resolvable:$true] %s18
      %s20 = sshll.u32 [#allocation2], 4
      %s21 = int_to_ptr.vmem [resolvable:$true] %s20
      %26 = dma.hbm_to_vmem [thread:$0]  %s19, 8192, %s21, [#allocation3], 64, 64, 4
    $region9: #{musicbert_forward.3} parent=1 // pred_fallthru
      _
    // Predicated region
    $region10: #{musicbert_forward.3} parent=1 // pred_check
      _
    $region11: #{musicbert_forward.3} parent=1 // pred_check_branch
      %28 = sbr.rel (0) target = $region13
    $region12: #{musicbert_forward.3} parent=1 // pred_region
      _
    $region13: #{musicbert_forward.3} parent=1 // pred_fallthru
      _
    // Predicated region
    $region14: #{musicbert_forward.3} parent=1 // pred_check
      _
    $region15: #{musicbert_forward.3} parent=1 // pred_check_branch
      %30 = sbr.rel (0) target = $region17
    $region16: #{musicbert_forward.3} parent=1 // pred_region
      _
    $region17: #{musicbert_forward.3} parent=1 // pred_fallthru
      _
    // Predicated region
    $region18: #{musicbert_forward.3} parent=1 // pred_check
      _
    $region19: #{musicbert_forward.3} parent=1 // pred_check_branch
      %32 = sbr.rel (0) target = $region21
    $region20: #{musicbert_forward.3} parent=1 // pred_region
      _
    $region21: #{musicbert_forward.3} parent=1 // pred_fallthru
      _
    // Predicated region
    $region22: #{musicbert_forward.3} parent=1 // pred_check
      _
    $region23: #{musicbert_forward.3} parent=1 // pred_check_branch
      %34 = sbr.rel (0) target = $region25
    $region24: #{musicbert_forward.3} parent=1 // pred_region
      _
    $region25: #{musicbert_forward.3} parent=1 // pred_fallthru
      _
    // Predicated region
    $region26: #{musicbert_forward.3} parent=1 // pred_check
      _
    $region27: #{musicbert_forward.3} parent=1 // pred_check_branch
      %36 = sbr.rel (0) target = $region29
    $region28: #{musicbert_forward.3} parent=1 // pred_region
      %38 = dma.done [#allocation3], 8192
    $region29: #{musicbert_forward.3} parent=1 // pred_fallthru
      _
    %v39 = vld [vmem:[%s0] sm:$0xff]
    %v40 = vld [vmem:[%s0 + $0x8] sm:$0xff]
    %v41 = vld [vmem:[%s0 + $0x10] sm:$0xff]
    %v42 = vld [vmem:[%s0 + $0x18] sm:$0xff]
    %v43 = vld [vmem:[#allocation2] sm:$0xf]
    %v44 = vld [vmem:[#allocation2 + $0x4] sm:$0xf]
    %v45 = vld [vmem:[#allocation2 + $0x8] sm:$0xf]
    %v46 = vld [vmem:[#allocation2 + $0xc] sm:$0xf]
    %v47 = vld [vmem:[#allocation2 + $0x10] sm:$0xf]
    %v48 = vld [vmem:[#allocation2 + $0x14] sm:$0xf]
    %v49 = vld [vmem:[#allocation2 + $0x18] sm:$0xf]
    %v50 = vld [vmem:[#allocation2 + $0x1c] sm:$0xf]
    %v51 = vld [vmem:[#allocation2 + $0x20] sm:$0xf]
    %v52 = vld [vmem:[#allocation2 + $0x24] sm:$0xf]
    %v53 = vld [vmem:[#allocation2 + $0x28] sm:$0xf]
    %v54 = vld [vmem:[#allocation2 + $0x2c] sm:$0xf]
    %v55 = vld [vmem:[#allocation2 + $0x30] sm:$0xf]
    %v56 = vld [vmem:[#allocation2 + $0x34] sm:$0xf]
    %v57 = vld [vmem:[#allocation2 + $0x38] sm:$0xf]
    %v58 = vld [vmem:[#allocation2 + $0x3c] sm:$0xf]
    %v59 = vld [vmem:[#allocation2 + $0x40] sm:$0xf]
    %v60 = vld [vmem:[#allocation2 + $0x44] sm:$0xf]
    %v61 = vld [vmem:[#allocation2 + $0x48] sm:$0xf]
    %v62 = vld [vmem:[#allocation2 + $0x4c] sm:$0xf]
    %v63 = vld [vmem:[#allocation2 + $0x50] sm:$0xf]
    %v64 = vld [vmem:[#allocation2 + $0x54] sm:$0xf]
    %v65 = vld [vmem:[#allocation2 + $0x58] sm:$0xf]
    %v66 = vld [vmem:[#allocation2 + $0x5c] sm:$0xf]
    %v67 = vld [vmem:[#allocation2 + $0x60] sm:$0xf]
    %v68 = vld [vmem:[#allocation2 + $0x64] sm:$0xf]
    %v69 = vld [vmem:[#allocation2 + $0x68] sm:$0xf]
    %v70 = vld [vmem:[#allocation2 + $0x6c] sm:$0xf]
    %v71 = vld [vmem:[#allocation2 + $0x70] sm:$0xf]
    %v72 = vld [vmem:[#allocation2 + $0x74] sm:$0xf]
    %v73 = vld [vmem:[#allocation2 + $0x78] sm:$0xf]
    %v74 = vld [vmem:[#allocation2 + $0x7c] sm:$0xf]
    %v75 = vld [vmem:[#allocation2 + $0x80] sm:$0xf]
    %v76 = vld [vmem:[#allocation2 + $0x84] sm:$0xf]
    %v77 = vld [vmem:[#allocation2 + $0x88] sm:$0xf]
    %v78 = vld [vmem:[#allocation2 + $0x8c] sm:$0xf]
    %v79 = vld [vmem:[#allocation2 + $0x90] sm:$0xf]
    %v80 = vld [vmem:[#allocation2 + $0x94] sm:$0xf]
    %v81 = vld [vmem:[#allocation2 + $0x98] sm:$0xf]
    %v82 = vld [vmem:[#allocation2 + $0x9c] sm:$0xf]
    %v83 = vld [vmem:[#allocation2 + $0xa0] sm:$0xf]
    %v84 = vld [vmem:[#allocation2 + $0xa4] sm:$0xf]
    %v85 = vld [vmem:[#allocation2 + $0xa8] sm:$0xf]
    %v86 = vld [vmem:[#allocation2 + $0xac] sm:$0xf]
    %v87 = vld [vmem:[#allocation2 + $0xb0] sm:$0xf]
    %v88 = vld [vmem:[#allocation2 + $0xb4] sm:$0xf]
    %v89 = vld [vmem:[#allocation2 + $0xb8] sm:$0xf]
    %v90 = vld [vmem:[#allocation2 + $0xbc] sm:$0xf]
    %v91 = vld [vmem:[#allocation2 + $0xc0] sm:$0xf]
    %v92 = vld [vmem:[#allocation2 + $0xc4] sm:$0xf]
    %v93 = vld [vmem:[#allocation2 + $0xc8] sm:$0xf]
    %v94 = vld [vmem:[#allocation2 + $0xcc] sm:$0xf]
    %v95 = vld [vmem:[#allocation2 + $0xd0] sm:$0xf]
    %v96 = vld [vmem:[#allocation2 + $0xd4] sm:$0xf]
    %v97 = vld [vmem:[#allocation2 + $0xd8] sm:$0xf]
    %v98 = vld [vmem:[#allocation2 + $0xdc] sm:$0xf]
    %v99 = vld [vmem:[#allocation2 + $0xe0] sm:$0xf]
    %v100 = vld [vmem:[#allocation2 + $0xe4] sm:$0xf]
    %v101 = vld [vmem:[#allocation2 + $0xe8] sm:$0xf]
    %v102 = vld [vmem:[#allocation2 + $0xec] sm:$0xf]
    %v103 = vld [vmem:[#allocation2 + $0xf0] sm:$0xf]
    %v104 = vld [vmem:[#allocation2 + $0xf4] sm:$0xf]
    %v105 = vld [vmem:[#allocation2 + $0xf8] sm:$0xf]
    %v106 = vld [vmem:[#allocation2 + $0xfc] sm:$0xf]
    %v107 = vld [vmem:[#allocation2 + $0x100] sm:$0xf]
    %v108 = vld [vmem:[#allocation2 + $0x104] sm:$0xf]
    %v109 = vld [vmem:[#allocation2 + $0x108] sm:$0xf]
    %v110 = vld [vmem:[#allocation2 + $0x10c] sm:$0xf]
    %v111 = vld [vmem:[#allocation2 + $0x110] sm:$0xf]
    %v112 = vld [vmem:[#allocation2 + $0x114] sm:$0xf]
    %v113 = vld [vmem:[#allocation2 + $0x118] sm:$0xf]
    %v114 = vld [vmem:[#allocation2 + $0x11c] sm:$0xf]
    %v115 = vld [vmem:[#allocation2 + $0x120] sm:$0xf]
    %v116 = vld [vmem:[#allocation2 + $0x124] sm:$0xf]
    %v117 = vld [vmem:[#allocation2 + $0x128] sm:$0xf]
    %v118 = vld [vmem:[#allocation2 + $0x12c] sm:$0xf]
    %v119 = vld [vmem:[#allocation2 + $0x130] sm:$0xf]
    %v120 = vld [vmem:[#allocation2 + $0x134] sm:$0xf]
    %v121 = vld [vmem:[#allocation2 + $0x138] sm:$0xf]
    %v122 = vld [vmem:[#allocation2 + $0x13c] sm:$0xf]
    %v123 = vld [vmem:[#allocation2 + $0x140] sm:$0xf]
    %v124 = vld [vmem:[#allocation2 + $0x144] sm:$0xf]
    %v125 = vld [vmem:[#allocation2 + $0x148] sm:$0xf]
    %v126 = vld [vmem:[#allocation2 + $0x14c] sm:$0xf]
    %v127 = vld [vmem:[#allocation2 + $0x150] sm:$0xf]
    %v128 = vld [vmem:[#allocation2 + $0x154] sm:$0xf]
    %v129 = vld [vmem:[#allocation2 + $0x158] sm:$0xf]
    %v130 = vld [vmem:[#allocation2 + $0x15c] sm:$0xf]
    %v131 = vld [vmem:[#allocation2 + $0x160] sm:$0xf]
    %v132 = vld [vmem:[#allocation2 + $0x164] sm:$0xf]
    %v133 = vld [vmem:[#allocation2 + $0x168] sm:$0xf]
    %v134 = vld [vmem:[#allocation2 + $0x16c] sm:$0xf]
    %v135 = vld [vmem:[#allocation2 + $0x170] sm:$0xf]
    %v136 = vld [vmem:[#allocation2 + $0x174] sm:$0xf]
    %v137 = vld [vmem:[#allocation2 + $0x178] sm:$0xf]
    %v138 = vld [vmem:[#allocation2 + $0x17c] sm:$0xf]
    %v139 = vld [vmem:[#allocation2 + $0x180] sm:$0xf]
    %v140 = vld [vmem:[#allocation2 + $0x184] sm:$0xf]
    %v141 = vld [vmem:[#allocation2 + $0x188] sm:$0xf]
    %v142 = vld [vmem:[#allocation2 + $0x18c] sm:$0xf]
    %v143 = vld [vmem:[#allocation2 + $0x190] sm:$0xf]
    %v144 = vld [vmem:[#allocation2 + $0x194] sm:$0xf]
    %v145 = vld [vmem:[#allocation2 + $0x198] sm:$0xf]
    %v146 = vld [vmem:[#allocation2 + $0x19c] sm:$0xf]
    %v147 = vld [vmem:[#allocation2 + $0x1a0] sm:$0xf]
    %v148 = vld [vmem:[#allocation2 + $0x1a4] sm:$0xf]
    %v149 = vld [vmem:[#allocation2 + $0x1a8] sm:$0xf]
    %v150 = vld [vmem:[#allocation2 + $0x1ac] sm:$0xf]
    %v151 = vld [vmem:[#allocation2 + $0x1b0] sm:$0xf]
    %v152 = vld [vmem:[#allocation2 + $0x1b4] sm:$0xf]
    %v153 = vld [vmem:[#allocation2 + $0x1b8] sm:$0xf]
    %v154 = vld [vmem:[#allocation2 + $0x1bc] sm:$0xf]
    %v155 = vld [vmem:[#allocation2 + $0x1c0] sm:$0xf]
    %v156 = vld [vmem:[#allocation2 + $0x1c4] sm:$0xf]
    %v157 = vld [vmem:[#allocation2 + $0x1c8] sm:$0xf]
    %v158 = vld [vmem:[#allocation2 + $0x1cc] sm:$0xf]
    %v159 = vld [vmem:[#allocation2 + $0x1d0] sm:$0xf]
    %v160 = vld [vmem:[#allocation2 + $0x1d4] sm:$0xf]
    %v161 = vld [vmem:[#allocation2 + $0x1d8] sm:$0xf]
    %v162 = vld [vmem:[#allocation2 + $0x1dc] sm:$0xf]
    %v163 = vld [vmem:[#allocation2 + $0x1e0] sm:$0xf]
    %v164 = vld [vmem:[#allocation2 + $0x1e4] sm:$0xf]
    %v165 = vld [vmem:[#allocation2 + $0x1e8] sm:$0xf]
    %v166 = vld [vmem:[#allocation2 + $0x1ec] sm:$0xf]
    %v167 = vld [vmem:[#allocation2 + $0x1f0] sm:$0xf]
    %v168 = vld [vmem:[#allocation2 + $0x1f4] sm:$0xf]
    %v169 = vld [vmem:[#allocation2 + $0x1f8] sm:$0xf]
    %v170 = vld [vmem:[#allocation2 + $0x1fc] sm:$0xf]
    %v171 = vld [vmem:[%s2] sm:$0x1]
    %v173 = vperm.slane %v171, 0
    %v179 = vunpack.c.l.b16 %v39
    %v180 = vunpack.c.h.b16 %v39
    %v181 = vunpack.c.l.b16 %v40
    %v182 = vunpack.c.h.b16 %v40
    %v183 = vunpack.c.l.b16 %v41
    %v184 = vunpack.c.h.b16 %v41
    %v185 = vunpack.c.l.b16 %v42
    %v186 = vunpack.c.h.b16 %v42
    %v187 = vpack.c.b16 %v179, %v179
    %v188 = vpack.c.b16 %v180, %v180
    %v189 = vpack.c.b16 %v181, %v181
    %v190 = vpack.c.b16 %v182, %v182
    %v191 = vpack.c.b16 %v183, %v183
    %v192 = vpack.c.b16 %v184, %v184
    %v193 = vpack.c.b16 %v185, %v185
    %v194 = vpack.c.b16 %v186, %v186
    %v331 = vunpack.c.l.b16 %v43
    %v332 = vunpack.c.l.b16 %v44
    %v333 = vunpack.c.l.b16 %v45
    %v334 = vunpack.c.l.b16 %v46
    %v335 = vunpack.c.l.b16 %v47
    %v336 = vunpack.c.l.b16 %v48
    %v337 = vunpack.c.l.b16 %v49
    %v338 = vunpack.c.l.b16 %v50
    %v339 = vunpack.c.l.b16 %v51
    %v340 = vunpack.c.l.b16 %v52
    %v341 = vunpack.c.l.b16 %v53
    %v342 = vunpack.c.l.b16 %v54
    %v343 = vunpack.c.l.b16 %v55
    %v344 = vunpack.c.l.b16 %v56
    %v345 = vunpack.c.l.b16 %v57
    %v346 = vunpack.c.l.b16 %v58
    %v347 = vunpack.c.l.b16 %v59
    %v348 = vunpack.c.l.b16 %v60
    %v349 = vunpack.c.l.b16 %v61
    %v350 = vunpack.c.l.b16 %v62
    %v351 = vunpack.c.l.b16 %v63
    %v352 = vunpack.c.l.b16 %v64
    %v353 = vunpack.c.l.b16 %v65
    %v354 = vunpack.c.l.b16 %v66
    %v355 = vunpack.c.l.b16 %v67
    %v356 = vunpack.c.l.b16 %v68
    %v357 = vunpack.c.l.b16 %v69
    %v358 = vunpack.c.l.b16 %v70
    %v359 = vunpack.c.l.b16 %v71
    %v360 = vunpack.c.l.b16 %v72
    %v361 = vunpack.c.l.b16 %v73
    %v362 = vunpack.c.l.b16 %v74
    %v363 = vunpack.c.l.b16 %v75
    %v364 = vunpack.c.l.b16 %v76
    %v365 = vunpack.c.l.b16 %v77
    %v366 = vunpack.c.l.b16 %v78
    %v367 = vunpack.c.l.b16 %v79
    %v368 = vunpack.c.l.b16 %v80
    %v369 = vunpack.c.l.b16 %v81
    %v370 = vunpack.c.l.b16 %v82
    %v371 = vunpack.c.l.b16 %v83
    %v372 = vunpack.c.l.b16 %v84
    %v373 = vunpack.c.l.b16 %v85
    %v374 = vunpack.c.l.b16 %v86
    %v375 = vunpack.c.l.b16 %v87
    %v376 = vunpack.c.l.b16 %v88
    %v377 = vunpack.c.l.b16 %v89
    %v378 = vunpack.c.l.b16 %v90
    %v379 = vunpack.c.l.b16 %v91
    %v380 = vunpack.c.l.b16 %v92
    %v381 = vunpack.c.l.b16 %v93
    %v382 = vunpack.c.l.b16 %v94
    %v383 = vunpack.c.l.b16 %v95
    %v384 = vunpack.c.l.b16 %v96
    %v385 = vunpack.c.l.b16 %v97
    %v386 = vunpack.c.l.b16 %v98
    %v387 = vunpack.c.l.b16 %v99
    %v388 = vunpack.c.l.b16 %v100
    %v389 = vunpack.c.l.b16 %v101
    %v390 = vunpack.c.l.b16 %v102
    %v391 = vunpack.c.l.b16 %v103
    %v392 = vunpack.c.l.b16 %v104
    %v393 = vunpack.c.l.b16 %v105
    %v394 = vunpack.c.l.b16 %v106
    %v395 = vunpack.c.l.b16 %v107
    %v396 = vunpack.c.l.b16 %v108
    %v397 = vunpack.c.l.b16 %v109
    %v398 = vunpack.c.l.b16 %v110
    %v399 = vunpack.c.l.b16 %v111
    %v400 = vunpack.c.l.b16 %v112
    %v401 = vunpack.c.l.b16 %v113
    %v402 = vunpack.c.l.b16 %v114
    %v403 = vunpack.c.l.b16 %v115
    %v404 = vunpack.c.l.b16 %v116
    %v405 = vunpack.c.l.b16 %v117
    %v406 = vunpack.c.l.b16 %v118
    %v407 = vunpack.c.l.b16 %v119
    %v408 = vunpack.c.l.b16 %v120
    %v409 = vunpack.c.l.b16 %v121
    %v410 = vunpack.c.l.b16 %v122
    %v411 = vunpack.c.l.b16 %v123
    %v412 = vunpack.c.l.b16 %v124
    %v413 = vunpack.c.l.b16 %v125
    %v414 = vunpack.c.l.b16 %v126
    %v415 = vunpack.c.l.b16 %v127
    %v416 = vunpack.c.l.b16 %v128
    %v417 = vunpack.c.l.b16 %v129
    %v418 = vunpack.c.l.b16 %v130
    %v419 = vunpack.c.l.b16 %v131
    %v420 = vunpack.c.l.b16 %v132
    %v421 = vunpack.c.l.b16 %v133
    %v422 = vunpack.c.l.b16 %v134
    %v423 = vunpack.c.l.b16 %v135
    %v424 = vunpack.c.l.b16 %v136
    %v425 = vunpack.c.l.b16 %v137
    %v426 = vunpack.c.l.b16 %v138
    %v427 = vunpack.c.l.b16 %v139
    %v428 = vunpack.c.l.b16 %v140
    %v429 = vunpack.c.l.b16 %v141
    %v430 = vunpack.c.l.b16 %v142
    %v431 = vunpack.c.l.b16 %v143
    %v432 = vunpack.c.l.b16 %v144
    %v433 = vunpack.c.l.b16 %v145
    %v434 = vunpack.c.l.b16 %v146
    %v435 = vunpack.c.l.b16 %v147
    %v436 = vunpack.c.l.b16 %v148
    %v437 = vunpack.c.l.b16 %v149
    %v438 = vunpack.c.l.b16 %v150
    %v439 = vunpack.c.l.b16 %v151
    %v440 = vunpack.c.l.b16 %v152
    %v441 = vunpack.c.l.b16 %v153
    %v442 = vunpack.c.l.b16 %v154
    %v443 = vunpack.c.l.b16 %v155
    %v444 = vunpack.c.l.b16 %v156
    %v445 = vunpack.c.l.b16 %v157
    %v446 = vunpack.c.l.b16 %v158
    %v447 = vunpack.c.l.b16 %v159
    %v448 = vunpack.c.l.b16 %v160
    %v449 = vunpack.c.l.b16 %v161
    %v450 = vunpack.c.l.b16 %v162
    %v451 = vunpack.c.l.b16 %v163
    %v452 = vunpack.c.l.b16 %v164
    %v453 = vunpack.c.l.b16 %v165
    %v454 = vunpack.c.l.b16 %v166
    %v455 = vunpack.c.l.b16 %v167
    %v456 = vunpack.c.l.b16 %v168
    %v457 = vunpack.c.l.b16 %v169
    %v458 = vunpack.c.l.b16 %v170
    %v459 = vpack.c.b16 %v332, %v331
    %v460 = vpack.c.b16 %v334, %v333
    %v461 = vpack.c.b16 %v336, %v335
    %v462 = vpack.c.b16 %v338, %v337
    %v463 = vpack.c.b16 %v340, %v339
    %v464 = vpack.c.b16 %v342, %v341
    %v465 = vpack.c.b16 %v344, %v343
    %v466 = vpack.c.b16 %v346, %v345
    %v467 = vpack.c.b16 %v348, %v347
    %v468 = vpack.c.b16 %v350, %v349
    %v469 = vpack.c.b16 %v352, %v351
    %v470 = vpack.c.b16 %v354, %v353
    %v471 = vpack.c.b16 %v356, %v355
    %v472 = vpack.c.b16 %v358, %v357
    %v473 = vpack.c.b16 %v360, %v359
    %v474 = vpack.c.b16 %v362, %v361
    %v475 = vpack.c.b16 %v364, %v363
    %v476 = vpack.c.b16 %v366, %v365
    %v477 = vpack.c.b16 %v368, %v367
    %v478 = vpack.c.b16 %v370, %v369
    %v479 = vpack.c.b16 %v372, %v371
    %v480 = vpack.c.b16 %v374, %v373
    %v481 = vpack.c.b16 %v376, %v375
    %v482 = vpack.c.b16 %v378, %v377
    %v483 = vpack.c.b16 %v380, %v379
    %v484 = vpack.c.b16 %v382, %v381
    %v485 = vpack.c.b16 %v384, %v383
    %v486 = vpack.c.b16 %v386, %v385
    %v487 = vpack.c.b16 %v388, %v387
    %v488 = vpack.c.b16 %v390, %v389
    %v489 = vpack.c.b16 %v392, %v391
    %v490 = vpack.c.b16 %v394, %v393
    %v491 = vpack.c.b16 %v396, %v395
    %v492 = vpack.c.b16 %v398, %v397
    %v493 = vpack.c.b16 %v400, %v399
    %v494 = vpack.c.b16 %v402, %v401
    %v495 = vpack.c.b16 %v404, %v403
    %v496 = vpack.c.b16 %v406, %v405
    %v497 = vpack.c.b16 %v408, %v407
    %v498 = vpack.c.b16 %v410, %v409
    %v499 = vpack.c.b16 %v412, %v411
    %v500 = vpack.c.b16 %v414, %v413
    %v501 = vpack.c.b16 %v416, %v415
    %v502 = vpack.c.b16 %v418, %v417
    %v503 = vpack.c.b16 %v420, %v419
    %v504 = vpack.c.b16 %v422, %v421
    %v505 = vpack.c.b16 %v424, %v423
    %v506 = vpack.c.b16 %v426, %v425
    %v507 = vpack.c.b16 %v428, %v427
    %v508 = vpack.c.b16 %v430, %v429
    %v509 = vpack.c.b16 %v432, %v431
    %v510 = vpack.c.b16 %v434, %v433
    %v511 = vpack.c.b16 %v436, %v435
    %v512 = vpack.c.b16 %v438, %v437
    %v513 = vpack.c.b16 %v440, %v439
    %v514 = vpack.c.b16 %v442, %v441
    %v515 = vpack.c.b16 %v444, %v443
    %v516 = vpack.c.b16 %v446, %v445
    %v517 = vpack.c.b16 %v448, %v447
    %v518 = vpack.c.b16 %v450, %v449
    %v519 = vpack.c.b16 %v452, %v451
    %v520 = vpack.c.b16 %v454, %v453
    %v521 = vpack.c.b16 %v456, %v455
    %v522 = vpack.c.b16 %v458, %v457
    %587 = vmatpush.bf16.msra.mxu0 %v466
    %588 = vmatpush.bf16.msra.mxu0 %v465
    %589 = vmatpush.bf16.msra.mxu0 %v464
    %590 = vmatpush.bf16.msra.mxu0 %v463
    %591 = vmatpush.bf16.msra.mxu0 %v462
    %592 = vmatpush.bf16.msra.mxu0 %v461
    %593 = vmatpush.bf16.msra.mxu0 %v460
    %594 = vmatpush.bf16.msra.mxu0 %v459
    %595 = vmatmul.bf16.gmra.mxu0 %v187
    %v596 = vpop.f32.mrf.mxu0
    %v597 = vadd.f32 %v173, %v596
    %v598 = vpop.f32.mrf.mxu0
    %599 = vdwg.mxu0
    %600 = vmatpush.bf16.msra.mxu0 %v474
    %601 = vmatpush.bf16.msra.mxu0 %v473
    %602 = vmatpush.bf16.msra.mxu0 %v472
    %603 = vmatpush.bf16.msra.mxu0 %v471
    %604 = vmatpush.bf16.msra.mxu0 %v470
    %605 = vmatpush.bf16.msra.mxu0 %v469
    %606 = vmatpush.bf16.msra.mxu0 %v468
    %607 = vmatpush.bf16.msra.mxu0 %v467
    %608 = vmatmul.bf16.gmra.mxu0 %v188
    %v609 = vpop.f32.mrf.mxu0
    %v610 = vadd.f32 %v597, %v609
    %v611 = vpop.f32.mrf.mxu0
    %612 = vdwg.mxu0
    %613 = vmatpush.bf16.msra.mxu0 %v482
    %614 = vmatpush.bf16.msra.mxu0 %v481
    %615 = vmatpush.bf16.msra.mxu0 %v480
    %616 = vmatpush.bf16.msra.mxu0 %v479
    %617 = vmatpush.bf16.msra.mxu0 %v478
    %618 = vmatpush.bf16.msra.mxu0 %v477
    %619 = vmatpush.bf16.msra.mxu0 %v476
    %620 = vmatpush.bf16.msra.mxu0 %v475
    %621 = vmatmul.bf16.gmra.mxu0 %v189
    %v622 = vpop.f32.mrf.mxu0
    %v623 = vadd.f32 %v610, %v622
    %v624 = vpop.f32.mrf.mxu0
    %625 = vdwg.mxu0
    %626 = vmatpush.bf16.msra.mxu0 %v490
    %627 = vmatpush.bf16.msra.mxu0 %v489
    %628 = vmatpush.bf16.msra.mxu0 %v488
    %629 = vmatpush.bf16.msra.mxu0 %v487
    %630 = vmatpush.bf16.msra.mxu0 %v486
    %631 = vmatpush.bf16.msra.mxu0 %v485
    %632 = vmatpush.bf16.msra.mxu0 %v484
    %633 = vmatpush.bf16.msra.mxu0 %v483
    %634 = vmatmul.bf16.gmra.mxu0 %v190
    %v635 = vpop.f32.mrf.mxu0
    %v636 = vadd.f32 %v623, %v635
    %v637 = vpop.f32.mrf.mxu0
    %638 = vdwg.mxu0
    %639 = vmatpush.bf16.msra.mxu0 %v498
    %640 = vmatpush.bf16.msra.mxu0 %v497
    %641 = vmatpush.bf16.msra.mxu0 %v496
    %642 = vmatpush.bf16.msra.mxu0 %v495
    %643 = vmatpush.bf16.msra.mxu0 %v494
    %644 = vmatpush.bf16.msra.mxu0 %v493
    %645 = vmatpush.bf16.msra.mxu0 %v492
    %646 = vmatpush.bf16.msra.mxu0 %v491
    %647 = vmatmul.bf16.gmra.mxu0 %v191
    %v648 = vpop.f32.mrf.mxu0
    %v649 = vadd.f32 %v636, %v648
    %v650 = vpop.f32.mrf.mxu0
    %651 = vdwg.mxu0
    %652 = vmatpush.bf16.msra.mxu0 %v506
    %653 = vmatpush.bf16.msra.mxu0 %v505
    %654 = vmatpush.bf16.msra.mxu0 %v504
    %655 = vmatpush.bf16.msra.mxu0 %v503
    %656 = vmatpush.bf16.msra.mxu0 %v502
    %657 = vmatpush.bf16.msra.mxu0 %v501
    %658 = vmatpush.bf16.msra.mxu0 %v500
    %659 = vmatpush.bf16.msra.mxu0 %v499
    %660 = vmatmul.bf16.gmra.mxu0 %v192
    %v661 = vpop.f32.mrf.mxu0
    %v662 = vadd.f32 %v649, %v661
    %v663 = vpop.f32.mrf.mxu0
    %664 = vdwg.mxu0
    %665 = vmatpush.bf16.msra.mxu0 %v514
    %666 = vmatpush.bf16.msra.mxu0 %v513
    %667 = vmatpush.bf16.msra.mxu0 %v512
    %668 = vmatpush.bf16.msra.mxu0 %v511
    %669 = vmatpush.bf16.msra.mxu0 %v510
    %670 = vmatpush.bf16.msra.mxu0 %v509
    %671 = vmatpush.bf16.msra.mxu0 %v508
    %672 = vmatpush.bf16.msra.mxu0 %v507
    %673 = vmatmul.bf16.gmra.mxu0 %v193
    %v674 = vpop.f32.mrf.mxu0
    %v675 = vadd.f32 %v662, %v674
    %v676 = vpop.f32.mrf.mxu0
    %677 = vdwg.mxu0
    %678 = vmatpush.bf16.msra.mxu0 %v522
    %679 = vmatpush.bf16.msra.mxu0 %v521
    %680 = vmatpush.bf16.msra.mxu0 %v520
    %681 = vmatpush.bf16.msra.mxu0 %v519
    %682 = vmatpush.bf16.msra.mxu0 %v518
    %683 = vmatpush.bf16.msra.mxu0 %v517
    %684 = vmatpush.bf16.msra.mxu0 %v516
    %685 = vmatpush.bf16.msra.mxu0 %v515
    %686 = vmatmul.bf16.gmra.mxu0 %v194
    %v687 = vpop.f32.mrf.mxu0
    %v688 = vadd.f32 %v675, %v687
    %v689 = vpop.f32.mrf.mxu0
    %690 = vdwg.mxu0
    %v691 = vld [vmem:[%s3] sm:$0xff]
    %v692 = vadd.f32 %v688, %v691
    %v693 = vld [vmem:[%s4] sm:$0x1]
    %v694 = vld [vmem:[%s5] sm:$0x1]
    %695 = vadd.xlane.f32.xlu0 %v692
    %v696 = vpop.xlane.xlu0 %695
    %v697 = vrcp.pop 128.0
    %v698 = vmul.f32 128.0, %v697
    %v699 = vsub.f32 1.0, %v698
    %v700 = vmul.f32 %v697, %v699
    %v701 = vadd.f32 %v697, %v700
    %vm702 = vweird.f32 %v697
    %v703 = vsel %vm702, %v697, %v701
    %v704 = vmul.f32 %v696, %v703
    %v705 = vsub.f32 %v692, %v704
    %v706 = vmul.f32 %v705, %v705
    %707 = vadd.xlane.f32.xlu0 %v706
    %v708 = vpop.xlane.xlu0 %707
    %v709 = vmul.f32 %v708, %v703
    %v710 = vadd.f32 %v709, 1e-05
    %v711 = vrsqrt.pop %v710
    %v712 = vmul.f32 %v711, %v710
    %v713 = vmul.f32 %v712, %v711
    %v714 = vmul.f32 0.5, %v713
    %v715 = vsub.f32 1.5, %v714
    %v716 = vmul.f32 %v711, %v715
    %vm717 = vweird.f32 %v710
    %vm718 = vweird.f32 %v711
    %vm719 = vmor %vm717, %vm718
    %v720 = vsel %vm719, %v711, %v716
    %v721 = vmul.f32 %v705, %v720
    %v723 = vperm.slane %v693, 0
    %v725 = vmul.f32 %v721, %v723
    %v727 = vperm.slane %v694, 0
    %v729 = vadd.f32 %v725, %v727
    %730 = vst [vmem:[%s6] sm:$0xff] %v729
    // Predicated region
    $region30: #{musicbert_forward.3} parent=1 // pred_check
      _
    $region31: #{musicbert_forward.3} parent=1 // pred_check_branch
      %732 = sbr.rel (0) target = $region33
    $region32: #{musicbert_forward.3} parent=1 // pred_region
      _
    $region33: #{musicbert_forward.3} parent=1 // pred_fallthru
      _
    // Predicated region
    $region34: #{musicbert_forward.3} parent=1 // pred_check
      _
    $region35: #{musicbert_forward.3} parent=1 // pred_check_branch
      %734 = sbr.rel (0) target = $region37
    $region36: #{musicbert_forward.3} parent=1 // pred_region
      _
    $region37: #{musicbert_forward.3} parent=1 // pred_fallthru
      _
    %735 = vsyncpa [#allocation3], 1

// kernel: musicbert_forward.4
$region0: #{musicbert_forward.4}
  #allocation0 [shape = 'u32[]', space=smem, size = 0x4, offset = 0x4, fixed_abs, tag = 'smem constant byte address 0x4 - core index']
  #allocation1 [shape = 'u32[72,128]{1,0:T(1,128)}', space=vmem, size = 0x9000, scoped, tag = 'internal scratch']
  #allocation2 [shape = 'f32[8,128]{1,0:T(8,128)}', space=vmem, size = 0x1000, scoped, tag = 'scratch operand']
  %s0 = inlined_call_operand.vmem [shape: f32[8,128], index: 0, kind: input, shape index: {}]
  %s1 = inlined_call_operand.vmem [shape: bf16[2,128,384], index: 1, kind: input, shape index: {}]
  %s2 = inlined_call_operand.vmem [shape: f32[2,1,384], index: 2, kind: input, shape index: {}]
  %s3 = inlined_call_operand.hbm [shape: bf16[2,128,128], index: 3, kind: input, shape index: {}]
  %s4 = inlined_call_operand.vmem [shape: f32[2,1,128], index: 4, kind: input, shape index: {}]
  %s5 = inlined_call_operand.vmem [shape: f32[2,1,128], index: 5, kind: input, shape index: {}]
  %s6 = inlined_call_operand.vmem [shape: f32[2,1,128], index: 6, kind: input, shape index: {}]
  %s7 = inlined_call_operand.hbm [shape: bf16[2,128,256], index: 7, kind: input, shape index: {}]
  %s8 = inlined_call_operand.vmem [shape: f32[2,1,256], index: 8, kind: input, shape index: {}]
  %s9 = inlined_call_operand.hbm [shape: bf16[2,256,128], index: 9, kind: input, shape index: {}]
  %s10 = inlined_call_operand.vmem [shape: f32[2,1,128], index: 10, kind: input, shape index: {}]
  %s11 = inlined_call_operand.vmem [shape: f32[2,1,128], index: 11, kind: input, shape index: {}]
  %s12 = inlined_call_operand.vmem [shape: f32[2,1,128], index: 12, kind: input, shape index: {}]
  %s13 = inlined_call_operand.vmem [shape: f32[8,128], index: 13, kind: output, shape index: {}]
  %s14 = sld [smem:[#allocation0]]
  $region105: #{musicbert_forward.4} parent=0
    _
  %s16 = ssub.s32 1, %s14
  %s17 = scalar_select 0, %s16, %s14
  $region1: #{musicbert_forward.4} parent=0
    #allocation3 [shape = 'u8[65536]{0}', space=vmem, size = 0x10000, scoped, tag = 'input window, operand 3']
    #allocation4 [shape = 's32[2]{0}', space=sflag, size = 0x8, scoped, tag = 'scoped memory for musicbert_forward.4']
    #allocation5 [shape = 'u8[131072]{0}', space=vmem, size = 0x20000, scoped, tag = 'input window, operand 7']
    #allocation6 [shape = 's32[2]{0}', space=sflag, size = 0x8, scoped, tag = 'scoped memory for musicbert_forward.4']
    #allocation7 [shape = 'u8[131072]{0}', space=vmem, size = 0x20000, scoped, tag = 'input window, operand 9']
    %18 = vsyncpa [#allocation4], 0
    %s19 = scalar_lea.sflag [#allocation4], 1
    %20 = vsyncpa %s19, 0
    %21 = vsyncpa [#allocation6], 0
    %s22 = scalar_lea.sflag [#allocation6], 1
    %23 = vsyncpa %s22, 0
    loop: start=0, step=1, limit=4
    $region2: #{musicbert_forward.4} parent=1 // loop_pre_header
      _
    $region3: #{musicbert_forward.4} parent=1 // loop_header
      %s25 = sphi 0, %s29
      %p26 = scmp.ge.s32.totalorder %s25, 4
      %s33 = sphi 0, %s33
      %s35 = sphi 0, %s33
      %s36 = sphi 0, %s35
      %s50 = sphi 0, %s36
      %s56 = sphi 0, %s58
      %s59 = sphi 0, %s56
      %s60 = sphi 0, %s59
      %s76 = sphi 0, %s60
      %s82 = sphi 0, %s84
      %s85 = sphi 0, %s82
      %s86 = sphi 0, %s85
      %s102 = sphi 0, %s86
      %s108 = sphi 0, %s110
      %s111 = sphi 0, %s108
      %s112 = sphi 0, %s111
      %s128 = sphi 0, %s112
      %s134 = sphi 0, %s136
      %s137 = sphi 0, %s134
      %s138 = sphi 0, %s137
      %s154 = sphi 0, %s138
      %s160 = sphi 0, %s162
      %s163 = sphi 0, %s160
      %s164 = sphi 0, %s163
      %s180 = sphi 0, %s164
      %s186 = sphi 0, %s188
      %s189 = sphi 0, %s186
      %s190 = sphi 0, %s189
      %s206 = sphi 0, %s190
      %s212 = sphi 0, %s214
      %s215 = sphi 0, %s212
      %s216 = sphi 0, %s215
      %s232 = sphi 0, %s216
      %s238 = sphi 0, %s240
      %s241 = sphi 0, %s238
      %s242 = sphi 0, %s241
      %s258 = sphi 0, %s242
      %s264 = sphi 0, %s266
      %s267 = sphi 0, %s264
      %s268 = sphi 0, %s267
      %s284 = sphi 0, %s268
      %s290 = sphi 0, %s292
      %s293 = sphi 0, %s290
      %s294 = sphi 0, %s293
      %s310 = sphi 0, %s294
      %s316 = sphi 0, %s318
      %s319 = sphi 0, %s316
      %s320 = sphi 0, %s319
      %s336 = sphi 0, %s320
      %s342 = sphi 0, %s344
      %s345 = sphi 0, %s342
      %s346 = sphi 0, %s345
      %s362 = sphi 0, %s346
      %s366 = sphi 0, %s366
      %s368 = sphi 0, %s366
      %s369 = sphi 0, %s368
      %s383 = sphi 0, %s369
    $region4: #{musicbert_forward.4} parent=1 // loop_header_branch
      %28 = sbr.rel (%p26) target = $region8
    $region5: #{musicbert_forward.4} parent=1 // loop_body
      %s30 = ssub.s32 %s25, 1
      %s31 = ssub.s32 %s25, 2
      %s32 = sadd.s32 %s25, 1
      %s34 = sadd.s32 %s33, 1
      %p37 = scmp.eq.s32.totalorder %s25, 1
      %p38 = scmp.ne.s32.totalorder %s33, %s35
      %p39 = scmp.eq.s32.totalorder %s25, 0
      %p40 = por %p38, %p39
      %p41 = scmp.ne.s32.totalorder %s33, %s35
      %p42 = scmp.eq.s32.totalorder %s30, 1
      %p43 = por %p41, %p42
      %p44 = scmp.ne.s32.totalorder %s35, %s36
      %p45 = scmp.eq.s32.totalorder %s30, 0
      %p46 = por %p44, %p45
      %p47 = scmp.ne.s32.totalorder %s35, %s36
      %p48 = scmp.eq.s32.totalorder %s31, 1
      %p49 = por %p47, %p48
      %p51 = scmp.ne.s32.totalorder %s36, %s50
      %p52 = scmp.eq.s32.totalorder %s31, 0
      %p53 = por %p51, %p52
      %s54 = ssub.s32 %s25, %s32
      %p55 = scmp.eq.s32.totalorder %s54, 0
      %s57 = sadd.s32 %s56, 1
      %s58 = scalar_select %p55, %s56, %s57
      %p61 = pneg %p55
      %p62 = scmp.eq.s32.totalorder %s25, 1
      %p63 = por %p61, %p62
      %p64 = scmp.ne.s32.totalorder %s56, %s59
      %p65 = scmp.eq.s32.totalorder %s25, 0
      %p66 = por %p64, %p65
      %p67 = scmp.ne.s32.totalorder %s56, %s59
      %p68 = scmp.eq.s32.totalorder %s30, 1
      %p69 = por %p67, %p68
      %p70 = scmp.ne.s32.totalorder %s59, %s60
      %p71 = scmp.eq.s32.totalorder %s30, 0
      %p72 = por %p70, %p71
      %p73 = scmp.ne.s32.totalorder %s59, %s60
      %p74 = scmp.eq.s32.totalorder %s31, 1
      %p75 = por %p73, %p74
      %p77 = scmp.ne.s32.totalorder %s60, %s76
      %p78 = scmp.eq.s32.totalorder %s31, 0
      %p79 = por %p77, %p78
      %s80 = ssub.s32 %s25, %s32
      %p81 = scmp.eq.s32.totalorder %s80, 0
      %s83 = sadd.s32 %s82, 1
      %s84 = scalar_select %p81, %s82, %s83
      %p87 = pneg %p81
      %p88 = scmp.eq.s32.totalorder %s25, 1
      %p89 = por %p87, %p88
      %p90 = scmp.ne.s32.totalorder %s82, %s85
      %p91 = scmp.eq.s32.totalorder %s25, 0
      %p92 = por %p90, %p91
      %p93 = scmp.ne.s32.totalorder %s82, %s85
      %p94 = scmp.eq.s32.totalorder %s30, 1
      %p95 = por %p93, %p94
      %p96 = scmp.ne.s32.totalorder %s85, %s86
      %p97 = scmp.eq.s32.totalorder %s30, 0
      %p98 = por %p96, %p97
      %p99 = scmp.ne.s32.totalorder %s85, %s86
      %p100 = scmp.eq.s32.totalorder %s31, 1
      %p101 = por %p99, %p100
      %p103 = scmp.ne.s32.totalorder %s86, %s102
      %p104 = scmp.eq.s32.totalorder %s31, 0
      %p105 = por %p103, %p104
      %s106 = ssub.s32 %s25, %s32
      %p107 = scmp.eq.s32.totalorder %s106, 0
      %s109 = sadd.s32 %s108, 1
      %s110 = scalar_select %p107, %s108, %s109
      %p113 = pneg %p107
      %p114 = scmp.eq.s32.totalorder %s25, 1
      %p115 = por %p113, %p114
      %p116 = scmp.ne.s32.totalorder %s108, %s111
      %p117 = scmp.eq.s32.totalorder %s25, 0
      %p118 = por %p116, %p117
      %p119 = scmp.ne.s32.totalorder %s108, %s111
      %p120 = scmp.eq.s32.totalorder %s30, 1
      %p121 = por %p119, %p120
      %p122 = scmp.ne.s32.totalorder %s111, %s112
      %p123 = scmp.eq.s32.totalorder %s30, 0
      %p124 = por %p122, %p123
      %p125 = scmp.ne.s32.totalorder %s111, %s112
      %p126 = scmp.eq.s32.totalorder %s31, 1
      %p127 = por %p125, %p126
      %p129 = scmp.ne.s32.totalorder %s112, %s128
      %p130 = scmp.eq.s32.totalorder %s31, 0
      %p131 = por %p129, %p130
      %s132 = ssub.s32 %s25, %s32
      %p133 = scmp.eq.s32.totalorder %s132, 0
      %s135 = sadd.s32 %s134, 1
      %s136 = scalar_select %p133, %s134, %s135
      %p139 = pneg %p133
      %p140 = scmp.eq.s32.totalorder %s25, 1
      %p141 = por %p139, %p140
      %p142 = scmp.ne.s32.totalorder %s134, %s137
      %p143 = scmp.eq.s32.totalorder %s25, 0
      %p144 = por %p142, %p143
      %p145 = scmp.ne.s32.totalorder %s134, %s137
      %p146 = scmp.eq.s32.totalorder %s30, 1
      %p147 = por %p145, %p146
      %p148 = scmp.ne.s32.totalorder %s137, %s138
      %p149 = scmp.eq.s32.totalorder %s30, 0
      %p150 = por %p148, %p149
      %p151 = scmp.ne.s32.totalorder %s137, %s138
      %p152 = scmp.eq.s32.totalorder %s31, 1
      %p153 = por %p151, %p152
      %p155 = scmp.ne.s32.totalorder %s138, %s154
      %p156 = scmp.eq.s32.totalorder %s31, 0
      %p157 = por %p155, %p156
      %s158 = ssub.s32 %s25, %s32
      %p159 = scmp.eq.s32.totalorder %s158, 0
      %s161 = sadd.s32 %s160, 1
      %s162 = scalar_select %p159, %s160, %s161
      %p165 = pneg %p159
      %p166 = scmp.eq.s32.totalorder %s25, 1
      %p167 = por %p165, %p166
      %p168 = scmp.ne.s32.totalorder %s160, %s163
      %p169 = scmp.eq.s32.totalorder %s25, 0
      %p170 = por %p168, %p169
      %p171 = scmp.ne.s32.totalorder %s160, %s163
      %p172 = scmp.eq.s32.totalorder %s30, 1
      %p173 = por %p171, %p172
      %p174 = scmp.ne.s32.totalorder %s163, %s164
      %p175 = scmp.eq.s32.totalorder %s30, 0
      %p176 = por %p174, %p175
      %p177 = scmp.ne.s32.totalorder %s163, %s164
      %p178 = scmp.eq.s32.totalorder %s31, 1
      %p179 = por %p177, %p178
      %p181 = scmp.ne.s32.totalorder %s164, %s180
      %p182 = scmp.eq.s32.totalorder %s31, 0
      %p183 = por %p181, %p182
      %s184 = ssub.s32 %s25, %s32
      %p185 = scmp.eq.s32.totalorder %s184, 0
      %s187 = sadd.s32 %s186, 1
      %s188 = scalar_select %p185, %s186, %s187
      %p191 = pneg %p185
      %p192 = scmp.eq.s32.totalorder %s25, 1
      %p193 = por %p191, %p192
      %p194 = scmp.ne.s32.totalorder %s186, %s189
      %p195 = scmp.eq.s32.totalorder %s25, 0
      %p196 = por %p194, %p195
      %p197 = scmp.ne.s32.totalorder %s186, %s189
      %p198 = scmp.eq.s32.totalorder %s30, 1
      %p199 = por %p197, %p198
      %p200 = scmp.ne.s32.totalorder %s189, %s190
      %p201 = scmp.eq.s32.totalorder %s30, 0
      %p202 = por %p200, %p201
      %p203 = scmp.ne.s32.totalorder %s189, %s190
      %p204 = scmp.eq.s32.totalorder %s31, 1
      %p205 = por %p203, %p204
      %p207 = scmp.ne.s32.totalorder %s190, %s206
      %p208 = scmp.eq.s32.totalorder %s31, 0
      %p209 = por %p207, %p208
      %s210 = ssub.s32 %s25, %s32
      %p211 = scmp.eq.s32.totalorder %s210, 0
      %s213 = sadd.s32 %s212, 1
      %s214 = scalar_select %p211, %s212, %s213
      %p217 = pneg %p211
      %p218 = scmp.eq.s32.totalorder %s25, 1
      %p219 = por %p217, %p218
      %p220 = scmp.ne.s32.totalorder %s212, %s215
      %p221 = scmp.eq.s32.totalorder %s25, 0
      %p222 = por %p220, %p221
      %p223 = scmp.ne.s32.totalorder %s212, %s215
      %p224 = scmp.eq.s32.totalorder %s30, 1
      %p225 = por %p223, %p224
      %p226 = scmp.ne.s32.totalorder %s215, %s216
      %p227 = scmp.eq.s32.totalorder %s30, 0
      %p228 = por %p226, %p227
      %p229 = scmp.ne.s32.totalorder %s215, %s216
      %p230 = scmp.eq.s32.totalorder %s31, 1
      %p231 = por %p229, %p230
      %p233 = scmp.ne.s32.totalorder %s216, %s232
      %p234 = scmp.eq.s32.totalorder %s31, 0
      %p235 = por %p233, %p234
      %s236 = ssub.s32 %s25, %s32
      %p237 = scmp.eq.s32.totalorder %s236, 0
      %s239 = sadd.s32 %s238, 1
      %s240 = scalar_select %p237, %s238, %s239
      %p243 = pneg %p237
      %p244 = scmp.eq.s32.totalorder %s25, 1
      %p245 = por %p243, %p244
      %p246 = scmp.ne.s32.totalorder %s238, %s241
      %p247 = scmp.eq.s32.totalorder %s25, 0
      %p248 = por %p246, %p247
      %p249 = scmp.ne.s32.totalorder %s238, %s241
      %p250 = scmp.eq.s32.totalorder %s30, 1
      %p251 = por %p249, %p250
      %p252 = scmp.ne.s32.totalorder %s241, %s242
      %p253 = scmp.eq.s32.totalorder %s30, 0
      %p254 = por %p252, %p253
      %p255 = scmp.ne.s32.totalorder %s241, %s242
      %p256 = scmp.eq.s32.totalorder %s31, 1
      %p257 = por %p255, %p256
      %p259 = scmp.ne.s32.totalorder %s242, %s258
      %p260 = scmp.eq.s32.totalorder %s31, 0
      %p261 = por %p259, %p260
      %s262 = ssub.s32 %s25, %s32
      %p263 = scmp.eq.s32.totalorder %s262, 0
      %s265 = sadd.s32 %s264, 1
      %s266 = scalar_select %p263, %s264, %s265
      %p269 = pneg %p263
      %p270 = scmp.eq.s32.totalorder %s25, 1
      %p271 = por %p269, %p270
      %p272 = scmp.ne.s32.totalorder %s264, %s267
      %p273 = scmp.eq.s32.totalorder %s25, 0
      %p274 = por %p272, %p273
      %p275 = scmp.ne.s32.totalorder %s264, %s267
      %p276 = scmp.eq.s32.totalorder %s30, 1
      %p277 = por %p275, %p276
      %p278 = scmp.ne.s32.totalorder %s267, %s268
      %p279 = scmp.eq.s32.totalorder %s30, 0
      %p280 = por %p278, %p279
      %p281 = scmp.ne.s32.totalorder %s267, %s268
      %p282 = scmp.eq.s32.totalorder %s31, 1
      %p283 = por %p281, %p282
      %p285 = scmp.ne.s32.totalorder %s268, %s284
      %p286 = scmp.eq.s32.totalorder %s31, 0
      %p287 = por %p285, %p286
      %s288 = ssub.s32 %s25, %s32
      %p289 = scmp.eq.s32.totalorder %s288, 0
      %s291 = sadd.s32 %s290, 1
      %s292 = scalar_select %p289, %s290, %s291
      %p295 = pneg %p289
      %p296 = scmp.eq.s32.totalorder %s25, 1
      %p297 = por %p295, %p296
      %p298 = scmp.ne.s32.totalorder %s290, %s293
      %p299 = scmp.eq.s32.totalorder %s25, 0
      %p300 = por %p298, %p299
      %p301 = scmp.ne.s32.totalorder %s290, %s293
      %p302 = scmp.eq.s32.totalorder %s30, 1
      %p303 = por %p301, %p302
      %p304 = scmp.ne.s32.totalorder %s293, %s294
      %p305 = scmp.eq.s32.totalorder %s30, 0
      %p306 = por %p304, %p305
      %p307 = scmp.ne.s32.totalorder %s293, %s294
      %p308 = scmp.eq.s32.totalorder %s31, 1
      %p309 = por %p307, %p308
      %p311 = scmp.ne.s32.totalorder %s294, %s310
      %p312 = scmp.eq.s32.totalorder %s31, 0
      %p313 = por %p311, %p312
      %s314 = ssub.s32 %s25, %s32
      %p315 = scmp.eq.s32.totalorder %s314, 0
      %s317 = sadd.s32 %s316, 1
      %s318 = scalar_select %p315, %s316, %s317
      %p321 = pneg %p315
      %p322 = scmp.eq.s32.totalorder %s25, 1
      %p323 = por %p321, %p322
      %p324 = scmp.ne.s32.totalorder %s316, %s319
      %p325 = scmp.eq.s32.totalorder %s25, 0
      %p326 = por %p324, %p325
      %p327 = scmp.ne.s32.totalorder %s316, %s319
      %p328 = scmp.eq.s32.totalorder %s30, 1
      %p329 = por %p327, %p328
      %p330 = scmp.ne.s32.totalorder %s319, %s320
      %p331 = scmp.eq.s32.totalorder %s30, 0
      %p332 = por %p330, %p331
      %p333 = scmp.ne.s32.totalorder %s319, %s320
      %p334 = scmp.eq.s32.totalorder %s31, 1
      %p335 = por %p333, %p334
      %p337 = scmp.ne.s32.totalorder %s320, %s336
      %p338 = scmp.eq.s32.totalorder %s31, 0
      %p339 = por %p337, %p338
      %s340 = ssub.s32 %s25, %s32
      %p341 = scmp.eq.s32.totalorder %s340, 0
      %s343 = sadd.s32 %s342, 1
      %s344 = scalar_select %p341, %s342, %s343
      %p347 = pneg %p341
      %p348 = scmp.eq.s32.totalorder %s25, 1
      %p349 = por %p347, %p348
      %p350 = scmp.ne.s32.totalorder %s342, %s345
      %p351 = scmp.eq.s32.totalorder %s25, 0
      %p352 = por %p350, %p351
      %p353 = scmp.ne.s32.totalorder %s342, %s345
      %p354 = scmp.eq.s32.totalorder %s30, 1
      %p355 = por %p353, %p354
      %p356 = scmp.ne.s32.totalorder %s345, %s346
      %p357 = scmp.eq.s32.totalorder %s30, 0
      %p358 = por %p356, %p357
      %p359 = scmp.ne.s32.totalorder %s345, %s346
      %p360 = scmp.eq.s32.totalorder %s31, 1
      %p361 = por %p359, %p360
      %p363 = scmp.ne.s32.totalorder %s346, %s362
      %p364 = scmp.eq.s32.totalorder %s31, 0
      %p365 = por %p363, %p364
      %s367 = sadd.s32 %s366, 1
      %p370 = scmp.eq.s32.totalorder %s25, 1
      %p371 = scmp.ne.s32.totalorder %s366, %s368
      %p372 = scmp.eq.s32.totalorder %s25, 0
      %p373 = por %p371, %p372
      %p374 = scmp.ne.s32.totalorder %s366, %s368
      %p375 = scmp.eq.s32.totalorder %s30, 1
      %p376 = por %p374, %p375
      %p377 = scmp.ne.s32.totalorder %s368, %s369
      %p378 = scmp.eq.s32.totalorder %s30, 0
      %p379 = por %p377, %p378
      %p380 = scmp.ne.s32.totalorder %s368, %s369
      %p381 = scmp.eq.s32.totalorder %s31, 1
      %p382 = por %p380, %p381
      %p384 = scmp.ne.s32.totalorder %s369, %s383
      %p385 = scmp.eq.s32.totalorder %s31, 0
      %p386 = por %p384, %p385
      %p387 = scmp.le.s32.totalorder 1, %s25
      %p388 = scmp.lt.s32.totalorder %s25, 3
      %p389 = pnand %p387, %p388
      %p390 = pneg %p389
      // Predicated region
      $region9: #{musicbert_forward.4} parent=5 // pred_check
        _
      $region10: #{musicbert_forward.4} parent=5 // pred_check_branch
        %392 = sbr.rel (%p389) target = $region12
      $region11: #{musicbert_forward.4} parent=5 // pred_region
        %s393 = ssub.s32 %s25, 1
        // Predicated region
        $region13: #{musicbert_forward.4} parent=11 // pred_check
          %p394 = pneg %p46
        $region14: #{musicbert_forward.4} parent=11 // pred_check_branch
          %396 = sbr.rel (%p394) target = $region16
        $region15: #{musicbert_forward.4} parent=11 // pred_region
          _
        $region16: #{musicbert_forward.4} parent=11 // pred_fallthru
          _
      $region12: #{musicbert_forward.4} parent=5 // pred_fallthru
        _
      %p397 = scmp.lt.s32.totalorder %s25, 2
      // Predicated region
      $region17: #{musicbert_forward.4} parent=5 // pred_check
        %p398 = pneg %p397
      $region18: #{musicbert_forward.4} parent=5 // pred_check_branch
        %400 = sbr.rel (%p398) target = $region20
      $region19: #{musicbert_forward.4} parent=5 // pred_region
        // Predicated region
        $region21: #{musicbert_forward.4} parent=19 // pred_check
          %p401 = pneg %p66
        $region22: #{musicbert_forward.4} parent=19 // pred_check_branch
          %403 = sbr.rel (%p401) target = $region24
        $region23: #{musicbert_forward.4} parent=19 // pred_region
          %p404 = scmp.lt.s32.totalorder %s25, 1
          %s405 = scalar_select %p404, %s25, 1
          %s406 = smul.addr %s405, 48
          %s407 = smul.addr %s406, 4
          %s408 = scalar_lea.vmem %s1, %s407
        $region24: #{musicbert_forward.4} parent=19 // pred_fallthru
          _
        // Predicated region
        $region25: #{musicbert_forward.4} parent=19 // pred_check
          %p409 = pneg %p92
        $region26: #{musicbert_forward.4} parent=19 // pred_check_branch
          %411 = sbr.rel (%p409) target = $region28
        $region27: #{musicbert_forward.4} parent=19 // pred_region
          %p412 = scmp.lt.s32.totalorder %s25, 1
          %s413 = scalar_select %p412, %s25, 1
          %s414 = smul.addr %s413, 3
          %s415 = scalar_lea.vmem %s2, %s414
        $region28: #{musicbert_forward.4} parent=19 // pred_fallthru
          _
        // Predicated region
        $region29: #{musicbert_forward.4} parent=19 // pred_check
          %p416 = pneg %p118
        $region30: #{musicbert_forward.4} parent=19 // pred_check_branch
          %418 = sbr.rel (%p416) target = $region32
        $region31: #{musicbert_forward.4} parent=19 // pred_region
          %s419 = sand.u32 %s108, 1
          %s420 = scalar_lea.sflag [#allocation4], %s419
          %s421 = sand.u32 %s108, 1
          %s422 = smul.addr %s421, 64
          %s423 = scalar_lea.vmem [#allocation3], %s422
          %425 = vsyncadd %s420, 0
          %s426 = smul.addr %s25, 16
          %s427 = smul.addr %s426, 4
          %s428 = scalar_lea.hbm %s3, %s427
          %s429 = sshll.u32 %s428, 4
          %s430 = int_to_ptr.hbm [resolvable:$true] %s429
          %s431 = sshll.u32 %s423, 4
          %s432 = int_to_ptr.vmem [resolvable:$true] %s431
          %437 = dma.hbm_to_vmem [thread:$0]  %s430, 1024, %s432, %s420, 64, 64, 4
        $region32: #{musicbert_forward.4} parent=19 // pred_fallthru
          _
        // Predicated region
        $region33: #{musicbert_forward.4} parent=19 // pred_check
          %p438 = pneg %p144
        $region34: #{musicbert_forward.4} parent=19 // pred_check_branch
          %440 = sbr.rel (%p438) target = $region36
        $region35: #{musicbert_forward.4} parent=19 // pred_region
          %p441 = scmp.lt.s32.totalorder %s25, 1
          %s442 = scalar_select %p441, %s25, 1
          %s443 = scalar_lea.vmem %s4, %s442
        $region36: #{musicbert_forward.4} parent=19 // pred_fallthru
          _
        // Predicated region
        $region37: #{musicbert_forward.4} parent=19 // pred_check
          %p444 = pneg %p170
        $region38: #{musicbert_forward.4} parent=19 // pred_check_branch
          %446 = sbr.rel (%p444) target = $region40
        $region39: #{musicbert_forward.4} parent=19 // pred_region
          %p447 = scmp.lt.s32.totalorder %s25, 1
          %s448 = scalar_select %p447, %s25, 1
          %s449 = scalar_lea.vmem %s5, %s448
        $region40: #{musicbert_forward.4} parent=19 // pred_fallthru
          _
        // Predicated region
        $region41: #{musicbert_forward.4} parent=19 // pred_check
          %p450 = pneg %p196
        $region42: #{musicbert_forward.4} parent=19 // pred_check_branch
          %452 = sbr.rel (%p450) target = $region44
        $region43: #{musicbert_forward.4} parent=19 // pred_region
          %p453 = scmp.lt.s32.totalorder %s25, 1
          %s454 = scalar_select %p453, %s25, 1
          %s455 = scalar_lea.vmem %s6, %s454
        $region44: #{musicbert_forward.4} parent=19 // pred_fallthru
          _
        // Predicated region
        $region45: #{musicbert_forward.4} parent=19 // pred_check
          %p456 = pneg %p222
        $region46: #{musicbert_forward.4} parent=19 // pred_check_branch
          %458 = sbr.rel (%p456) target = $region48
        $region47: #{musicbert_forward.4} parent=19 // pred_region
          %s459 = sand.u32 %s25, 1
          %s460 = scalar_lea.sflag [#allocation6], %s459
          %s461 = sand.u32 %s212, 1
          %s462 = smul.addr %s461, 128
          %s463 = scalar_lea.vmem [#allocation5], %s462
          %465 = vsyncadd %s460, 0
          %s466 = smul.addr %s25, 32
          %s467 = smul.addr %s466, 4
          %s468 = scalar_lea.hbm %s7, %s467
          %s469 = sshll.u32 %s468, 4
          %s470 = int_to_ptr.hbm [resolvable:$true] %s469
          %s471 = sshll.u32 %s463, 4
          %s472 = int_to_ptr.vmem [resolvable:$true] %s471
          %477 = dma.hbm_to_vmem [thread:$0]  %s470, 2048, %s472, %s460, 128, 128, 8
        $region48: #{musicbert_forward.4} parent=19 // pred_fallthru
          _
        // Predicated region
        $region49: #{musicbert_forward.4} parent=19 // pred_check
          %p478 = pneg %p248
        $region50: #{musicbert_forward.4} parent=19 // pred_check_branch
          %480 = sbr.rel (%p478) target = $region52
        $region51: #{musicbert_forward.4} parent=19 // pred_region
          %p481 = scmp.lt.s32.totalorder %s25, 1
          %s482 = scalar_select %p481, %s25, 1
          %s483 = smul.addr %s482, 2
          %s484 = scalar_lea.vmem %s8, %s483
        $region52: #{musicbert_forward.4} parent=19 // pred_fallthru
          _
        // Predicated region
        $region53: #{musicbert_forward.4} parent=19 // pred_check
          %p485 = pneg %p274
        $region54: #{musicbert_forward.4} parent=19 // pred_check_branch
          %487 = sbr.rel (%p485) target = $region56
        $region55: #{musicbert_forward.4} parent=19 // pred_region
          %s488 = sand.u32 %s25, 1
          %s489 = scalar_lea.sflag [#allocation6], %s488
          %s490 = sand.u32 %s264, 1
          %s491 = smul.addr %s490, 128
          %s492 = scalar_lea.vmem [#allocation7], %s491
          %494 = vsyncadd %s489, 0
          %s495 = smul.addr %s25, 32
          %s496 = smul.addr %s495, 4
          %s497 = scalar_lea.hbm %s9, %s496
          %s498 = sshll.u32 %s497, 4
          %s499 = int_to_ptr.hbm [resolvable:$true] %s498
          %s500 = sshll.u32 %s492, 4
          %s501 = int_to_ptr.vmem [resolvable:$true] %s500
          %506 = dma.hbm_to_vmem [thread:$0]  %s499, 2048, %s501, %s489, 64, 64, 4
        $region56: #{musicbert_forward.4} parent=19 // pred_fallthru
          _
        // Predicated region
        $region57: #{musicbert_forward.4} parent=19 // pred_check
          %p507 = pneg %p300
        $region58: #{musicbert_forward.4} parent=19 // pred_check_branch
          %509 = sbr.rel (%p507) target = $region60
        $region59: #{musicbert_forward.4} parent=19 // pred_region
          %p510 = scmp.lt.s32.totalorder %s25, 1
          %s511 = scalar_select %p510, %s25, 1
          %s512 = scalar_lea.vmem %s10, %s511
        $region60: #{musicbert_forward.4} parent=19 // pred_fallthru
          _
        // Predicated region
        $region61: #{musicbert_forward.4} parent=19 // pred_check
          %p513 = pneg %p326
        $region62: #{musicbert_forward.4} parent=19 // pred_check_branch
          %515 = sbr.rel (%p513) target = $region64
        $region63: #{musicbert_forward.4} parent=19 // pred_region
          %p516 = scmp.lt.s32.totalorder %s25, 1
          %s517 = scalar_select %p516, %s25, 1
          %s518 = scalar_lea.vmem %s11, %s517
        $region64: #{musicbert_forward.4} parent=19 // pred_fallthru
          _
        // Predicated region
        $region65: #{musicbert_forward.4} parent=19 // pred_check
          %p519 = pneg %p352
        $region66: #{musicbert_forward.4} parent=19 // pred_check_branch
          %521 = sbr.rel (%p519) target = $region68
        $region67: #{musicbert_forward.4} parent=19 // pred_region
          %p522 = scmp.lt.s32.totalorder %s25, 1
          %s523 = scalar_select %p522, %s25, 1
          %s524 = scalar_lea.vmem %s12, %s523
        $region68: #{musicbert_forward.4} parent=19 // pred_fallthru
          _
      $region20: #{musicbert_forward.4} parent=5 // pred_fallthru
        _
      %p525 = scmp.le.s32.totalorder 1, %s25
      %p526 = scmp.lt.s32.totalorder %s25, 3
      %p527 = pnand %p525, %p526
      %p528 = pneg %p527
      // Predicated region
      $region69: #{musicbert_forward.4} parent=5 // pred_check
        _
      $region70: #{musicbert_forward.4} parent=5 // pred_check_branch
        %530 = sbr.rel (%p527) target = $region72
      $region71: #{musicbert_forward.4} parent=5 // pred_region
        %s531 = ssub.s32 %s25, 1
        %s532 = sand.u32 %s111, 1
        %s533 = scalar_lea.sflag [#allocation4], %s532
        %s534 = sand.u32 %s111, 1
        %s535 = smul.addr %s534, 64
        %s536 = scalar_lea.vmem [#allocation3], %s535
        // Predicated region
        $region73: #{musicbert_forward.4} parent=71 // pred_check
          %p537 = pneg %p124
        $region74: #{musicbert_forward.4} parent=71 // pred_check_branch
          %539 = sbr.rel (%p537) target = $region76
        $region75: #{musicbert_forward.4} parent=71 // pred_region
          %541 = dma.done %s533, 1024
        $region76: #{musicbert_forward.4} parent=71 // pred_fallthru
          _
        %s542 = sand.u32 %s30, 1
        %s543 = scalar_lea.sflag [#allocation6], %s542
        %s544 = sand.u32 %s215, 1
        %s545 = smul.addr %s544, 128
        %s546 = scalar_lea.vmem [#allocation5], %s545
        // Predicated region
        $region77: #{musicbert_forward.4} parent=71 // pred_check
          %p547 = pneg %p228
        $region78: #{musicbert_forward.4} parent=71 // pred_check_branch
          %549 = sbr.rel (%p547) target = $region80
        $region79: #{musicbert_forward.4} parent=71 // pred_region
          %551 = dma.done %s543, 2048
        $region80: #{musicbert_forward.4} parent=71 // pred_fallthru
          _
        %s552 = sand.u32 %s30, 1
        %s553 = scalar_lea.sflag [#allocation6], %s552
        %s554 = sand.u32 %s267, 1
        %s555 = smul.addr %s554, 128
        %s556 = scalar_lea.vmem [#allocation7], %s555
        // Predicated region
        $region81: #{musicbert_forward.4} parent=71 // pred_check
          %p557 = pneg %p280
        $region82: #{musicbert_forward.4} parent=71 // pred_check_branch
          %559 = sbr.rel (%p557) target = $region84
        $region83: #{musicbert_forward.4} parent=71 // pred_region
          %561 = dma.done %s553, 2048
        $region84: #{musicbert_forward.4} parent=71 // pred_fallthru
          _
        %p562 = pneg %p46
        %p563 = pneg %p43
        %p564 = scmp.lt.s32.totalorder %s30, 1
        %s565 = scalar_select %p564, %s30, 1
        %s566 = smul.addr %s565, 48
        %s567 = smul.addr %s566, 4
        %s568 = scalar_lea.vmem %s1, %s567
        %p569 = pneg %p72
        %p570 = pneg %p69
        %p571 = scmp.lt.s32.totalorder %s30, 1
        %s572 = scalar_select %p571, %s30, 1
        %s573 = smul.addr %s572, 3
        %s574 = scalar_lea.vmem %s2, %s573
        %p575 = pneg %p98
        %p576 = pneg %p95
        %s577 = sand.u32 %s111, 1
        %s578 = scalar_lea.sflag [#allocation4], %s577
        %s579 = sand.u32 %s111, 1
        %s580 = smul.addr %s579, 64
        %s581 = scalar_lea.vmem [#allocation3], %s580
        %p582 = pneg %p124
        %p583 = pneg %p121
        %p584 = scmp.lt.s32.totalorder %s30, 1
        %s585 = scalar_select %p584, %s30, 1
        %s586 = scalar_lea.vmem %s4, %s585
        %p587 = pneg %p150
        %p588 = pneg %p147
        %p589 = scmp.lt.s32.totalorder %s30, 1
        %s590 = scalar_select %p589, %s30, 1
        %s591 = scalar_lea.vmem %s5, %s590
        %p592 = pneg %p176
        %p593 = pneg %p173
        %p594 = scmp.lt.s32.totalorder %s30, 1
        %s595 = scalar_select %p594, %s30, 1
        %s596 = scalar_lea.vmem %s6, %s595
        %p597 = pneg %p202
        %p598 = pneg %p199
        %s599 = sand.u32 %s30, 1
        %s600 = scalar_lea.sflag [#allocation6], %s599
        %s601 = sand.u32 %s215, 1
        %s602 = smul.addr %s601, 128
        %s603 = scalar_lea.vmem [#allocation5], %s602
        %p604 = pneg %p228
        %p605 = pneg %p225
        %p606 = scmp.lt.s32.totalorder %s30, 1
        %s607 = scalar_select %p606, %s30, 1
        %s608 = smul.addr %s607, 2
        %s609 = scalar_lea.vmem %s8, %s608
        %p610 = pneg %p254
        %p611 = pneg %p251
        %s612 = sand.u32 %s30, 1
        %s613 = scalar_lea.sflag [#allocation6], %s612
        %s614 = sand.u32 %s267, 1
        %s615 = smul.addr %s614, 128
        %s616 = scalar_lea.vmem [#allocation7], %s615
        %p617 = pneg %p280
        %p618 = pneg %p277
        %p619 = scmp.lt.s32.totalorder %s30, 1
        %s620 = scalar_select %p619, %s30, 1
        %s621 = scalar_lea.vmem %s10, %s620
        %p622 = pneg %p306
        %p623 = pneg %p303
        %p624 = scmp.lt.s32.totalorder %s30, 1
        %s625 = scalar_select %p624, %s30, 1
        %s626 = scalar_lea.vmem %s11, %s625
        %p627 = pneg %p332
        %p628 = pneg %p329
        %p629 = scmp.lt.s32.totalorder %s30, 1
        %s630 = scalar_select %p629, %s30, 1
        %s631 = scalar_lea.vmem %s12, %s630
        %p632 = pneg %p358
        %p633 = pneg %p355
        %p634 = pneg %p379
        %p635 = pneg %p376
        %p636 = scmp.lt.s32.totalorder %s30, 1
        %s637 = scalar_select %p636, %s30, 1
        %s638 = smul.addr %s637, 48
        %s639 = smul.addr %s638, 4
        %s640 = scalar_lea.vmem %s1, %s639
        %p641 = scmp.lt.s32.totalorder %s30, 1
        %s642 = scalar_select %p641, %s30, 1
        %s643 = smul.addr %s642, 3
        %s644 = scalar_lea.vmem %s2, %s643
        %p645 = scmp.lt.s32.totalorder %s30, 1
        %s646 = scalar_select %p645, %s30, 1
        %s647 = scalar_lea.vmem %s4, %s646
        %p648 = scmp.lt.s32.totalorder %s30, 1
        %s649 = scalar_select %p648, %s30, 1
        %s650 = scalar_lea.vmem %s5, %s649
        %p651 = scmp.lt.s32.totalorder %s30, 1
        %s652 = scalar_select %p651, %s30, 1
        %s653 = scalar_lea.vmem %s6, %s652
        %p654 = scmp.lt.s32.totalorder %s30, 1
        %s655 = scalar_select %p654, %s30, 1
        %s656 = smul.addr %s655, 2
        %s657 = scalar_lea.vmem %s8, %s656
        %p658 = scmp.lt.s32.totalorder %s30, 1
        %s659 = scalar_select %p658, %s30, 1
        %s660 = scalar_lea.vmem %s10, %s659
        %p661 = scmp.lt.s32.totalorder %s30, 1
        %s662 = scalar_select %p661, %s30, 1
        %s663 = scalar_lea.vmem %s11, %s662
        %p664 = scmp.lt.s32.totalorder %s30, 1
        %s665 = scalar_select %p664, %s30, 1
        %s666 = scalar_lea.vmem %s12, %s665
        %p668 = scmp.eq.s32.totalorder %s30, 0
        // Predicated region
        $region85: #{musicbert_forward.4} parent=71 // pred_check
          %p669 = pneg %p668
        $region86: #{musicbert_forward.4} parent=71 // pred_check_branch
          %671 = sbr.rel (%p669) target = $region88
        $region87: #{musicbert_forward.4} parent=71 // pred_region
          %v672 = vld [vmem:[%s0] sm:$0xff]
          %673 = vst [vmem:[#allocation2] sm:$0xff] %v672
        $region88: #{musicbert_forward.4} parent=71 // pred_fallthru
          _
        %v674 = vld [vmem:[#allocation2] sm:$0xff]
        %v675 = vpack.c.bf16 %v674, %v674
        %v676 = vld [vmem:[%s640] sm:$0xff]
        %v677 = vld [vmem:[%s640 + $0x8] sm:$0xf]
        %v678 = vld [vmem:[%s640 + $0xc] sm:$0xff]
        %v679 = vld [vmem:[%s640 + $0x14] sm:$0xf]
        %v680 = vld [vmem:[%s640 + $0x18] sm:$0xff]
        %v681 = vld [vmem:[%s640 + $0x20] sm:$0xf]
        %v682 = vld [vmem:[%s640 + $0x24] sm:$0xff]
        %v683 = vld [vmem:[%s640 + $0x2c] sm:$0xf]
        %v684 = vld [vmem:[%s640 + $0x30] sm:$0xff]
        %v685 = vld [vmem:[%s640 + $0x38] sm:$0xf]
        %v686 = vld [vmem:[%s640 + $0x3c] sm:$0xff]
        %v687 = vld [vmem:[%s640 + $0x44] sm:$0xf]
        %v688 = vld [vmem:[%s640 + $0x48] sm:$0xff]
        %v689 = vld [vmem:[%s640 + $0x50] sm:$0xf]
        %v690 = vld [vmem:[%s640 + $0x54] sm:$0xff]
        %v691 = vld [vmem:[%s640 + $0x5c] sm:$0xf]
        %v692 = vld [vmem:[%s640 + $0x60] sm:$0xff]
        %v693 = vld [vmem:[%s640 + $0x68] sm:$0xf]
        %v694 = vld [vmem:[%s640 + $0x6c] sm:$0xff]
        %v695 = vld [vmem:[%s640 + $0x74] sm:$0xf]
        %v696 = vld [vmem:[%s640 + $0x78] sm:$0xff]
        %v697 = vld [vmem:[%s640 + $0x80] sm:$0xf]
        %v698 = vld [vmem:[%s640 + $0x84] sm:$0xff]
        %v699 = vld [vmem:[%s640 + $0x8c] sm:$0xf]
        %v700 = vld [vmem:[%s640 + $0x90] sm:$0xff]
        %v701 = vld [vmem:[%s640 + $0x98] sm:$0xf]
        %v702 = vld [vmem:[%s640 + $0x9c] sm:$0xff]
        %v703 = vld [vmem:[%s640 + $0xa4] sm:$0xf]
        %v704 = vld [vmem:[%s640 + $0xa8] sm:$0xff]
        %v705 = vld [vmem:[%s640 + $0xb0] sm:$0xf]
        %v706 = vld [vmem:[%s640 + $0xb4] sm:$0xff]
        %v707 = vld [vmem:[%s640 + $0xbc] sm:$0xf]
        %v708 = vld [vmem:[%s644] sm:$0x7]
        %v710 = vperm.slane %v708, 0
        %v711 = vperm.slane %v708, 1
        %v712 = vperm.slane %v708, 2
        %v748 = vunpack.c.l.b16 %v676
        %v749 = vunpack.c.h.b16 %v676
        %v750 = vunpack.c.l.b16 %v677
        %v751 = vunpack.c.l.b16 %v678
        %v752 = vunpack.c.h.b16 %v678
        %v753 = vunpack.c.l.b16 %v679
        %v754 = vunpack.c.l.b16 %v680
        %v755 = vunpack.c.h.b16 %v680
        %v756 = vunpack.c.l.b16 %v681
        %v757 = vunpack.c.l.b16 %v682
        %v758 = vunpack.c.h.b16 %v682
        %v759 = vunpack.c.l.b16 %v683
        %v760 = vunpack.c.l.b16 %v684
        %v761 = vunpack.c.h.b16 %v684
        %v762 = vunpack.c.l.b16 %v685
        %v763 = vunpack.c.l.b16 %v686
        %v764 = vunpack.c.h.b16 %v686
        %v765 = vunpack.c.l.b16 %v687
        %v766 = vunpack.c.l.b16 %v688
        %v767 = vunpack.c.h.b16 %v688
        %v768 = vunpack.c.l.b16 %v689
        %v769 = vunpack.c.l.b16 %v690
        %v770 = vunpack.c.h.b16 %v690
        %v771 = vunpack.c.l.b16 %v691
        %v772 = vunpack.c.l.b16 %v692
        %v773 = vunpack.c.h.b16 %v692
        %v774 = vunpack.c.l.b16 %v693
        %v775 = vunpack.c.l.b16 %v694
        %v776 = vunpack.c.h.b16 %v694
        %v777 = vunpack.c.l.b16 %v695
        %v778 = vunpack.c.l.b16 %v696
        %v779 = vunpack.c.h.b16 %v696
        %v780 = vunpack.c.l.b16 %v697
        %v781 = vunpack.c.l.b16 %v698
        %v782 = vunpack.c.h.b16 %v698
        %v783 = vunpack.c.l.b16 %v699
        %v784 = vunpack.c.l.b16 %v700
        %v785 = vunpack.c.h.b16 %v700
        %v786 = vunpack.c.l.b16 %v701
        %v787 = vunpack.c.l.b16 %v702
        %v788 = vunpack.c.h.b16 %v702
        %v789 = vunpack.c.l.b16 %v703
        %v790 = vunpack.c.l.b16 %v704
        %v791 = vunpack.c.h.b16 %v704
        %v792 = vunpack.c.l.b16 %v705
        %v793 = vunpack.c.l.b16 %v706
        %v794 = vunpack.c.h.b16 %v706
        %v795 = vunpack.c.l.b16 %v707
        %v796 = vpack.c.b16 %v751, %v748
        %v797 = vpack.c.b16 %v752, %v749
        %v798 = vpack.c.b16 %v753, %v750
        %v799 = vpack.c.b16 %v757, %v754
        %v800 = vpack.c.b16 %v758, %v755
        %v801 = vpack.c.b16 %v759, %v756
        %v802 = vpack.c.b16 %v763, %v760
        %v803 = vpack.c.b16 %v764, %v761
        %v804 = vpack.c.b16 %v765, %v762
        %v805 = vpack.c.b16 %v769, %v766
        %v806 = vpack.c.b16 %v770, %v767
        %v807 = vpack.c.b16 %v771, %v768
        %v808 = vpack.c.b16 %v775, %v772
        %v809 = vpack.c.b16 %v776, %v773
        %v810 = vpack.c.b16 %v777, %v774
        %v811 = vpack.c.b16 %v781, %v778
        %v812 = vpack.c.b16 %v782, %v779
        %v813 = vpack.c.b16 %v783, %v780
        %v814 = vpack.c.b16 %v787, %v784
        %v815 = vpack.c.b16 %v788, %v785
        %v816 = vpack.c.b16 %v789, %v786
        %v817 = vpack.c.b16 %v793, %v790
        %v818 = vpack.c.b16 %v794, %v791
        %v819 = vpack.c.b16 %v795, %v792
        %844 = vmatpush.bf16.msra.mxu0 %v817
        %845 = vmatpush.bf16.msra.mxu0 %v814
        %846 = vmatpush.bf16.msra.mxu0 %v811
        %847 = vmatpush.bf16.msra.mxu0 %v808
        %848 = vmatpush.bf16.msra.mxu0 %v805
        %849 = vmatpush.bf16.msra.mxu0 %v802
        %850 = vmatpush.bf16.msra.mxu0 %v799
        %851 = vmatpush.bf16.msra.mxu0 %v796
        %852 = vmatmul.bf16.gmra.mxu0 %v675
        %v853 = vpop.f32.mrf.mxu0
        %v854 = vadd.f32 %v710, %v853
        %v855 = vpop.f32.mrf.mxu0
        %856 = vdwg.mxu0
        %857 = vmatpush.bf16.msra.mxu0 %v818
        %858 = vmatpush.bf16.msra.mxu0 %v815
        %859 = vmatpush.bf16.msra.mxu0 %v812
        %860 = vmatpush.bf16.msra.mxu0 %v809
        %861 = vmatpush.bf16.msra.mxu0 %v806
        %862 = vmatpush.bf16.msra.mxu0 %v803
        %863 = vmatpush.bf16.msra.mxu0 %v800
        %864 = vmatpush.bf16.msra.mxu0 %v797
        %865 = vmatmul.bf16.gmra.mxu0 %v675
        %v866 = vpop.f32.mrf.mxu0
        %v867 = vadd.f32 %v711, %v866
        %v868 = vpop.f32.mrf.mxu0
        %869 = vdwg.mxu0
        %870 = vmatpush.bf16.msra.mxu0 %v819
        %871 = vmatpush.bf16.msra.mxu0 %v816
        %872 = vmatpush.bf16.msra.mxu0 %v813
        %873 = vmatpush.bf16.msra.mxu0 %v810
        %874 = vmatpush.bf16.msra.mxu0 %v807
        %875 = vmatpush.bf16.msra.mxu0 %v804
        %876 = vmatpush.bf16.msra.mxu0 %v801
        %877 = vmatpush.bf16.msra.mxu0 %v798
        %878 = vmatmul.bf16.gmra.mxu0 %v675
        %v879 = vpop.f32.mrf.mxu0
        %v880 = vadd.f32 %v712, %v879
        %v881 = vpop.f32.mrf.mxu0
        %882 = vdwg.mxu0
        %v883 = vpack.c.bf16 %v854, %v854
        %v884 = vpack.c.bf16 %v867, %v867
        %v885 = vpack.c.bf16 %v880, %v880
        %vm886 = vcmask 261120
        %v888 = vsel %vm886, %v883, 0
        %v891 = vsel %vm886, %v884, 0
        %893 = vmatpush.bf16.xpose.msra.mxu0 0
        %894 = vmatpush.bf16.xpose.msra.mxu0 0
        %895 = vmatpush.bf16.xpose.msra.mxu0 0
        %896 = vmatpush.bf16.xpose.msra.mxu0 0
        %897 = vmatpush.bf16.xpose.msra.mxu0 0
        %898 = vmatpush.bf16.xpose.msra.mxu0 0
        %899 = vmatpush.bf16.xpose.msra.mxu0 0
        %900 = vmatpush.bf16.xpose.msra.mxu0 %v891
        %901 = vmatmul.bf16.gmra.mxu0 %v888
        %v902 = vpop.f32.mrf.mxu0
        %v903 = vadd.f32 0.0, %v902
        %v904 = vpop.f32.mrf.mxu0
        %905 = vdwg.mxu0
        %v906 = vmul.f32 %v903, 0.17677669
        %vm907 = vcmask 64512
        %v908 = vsel %vm907, %v906, -inf
        %909 = vmax.xlane.f32.xlu0 %v908
        %v910 = vpop.xlane.xlu0 %909
        %v911 = vsub.f32 %v906, %v910
        %v912 = vmul.f32 %v911, 1.442695
        %v913 = vpow.pop %v912
        %v914 = vsel %vm907, %v913, 0.0
        %915 = vadd.xlane.f32.xlu0 %v914
        %v916 = vpop.xlane.xlu0 %915
        %v917 = vrcp.pop %v916
        %v918 = vmul.f32 %v913, %v917
        %v919 = vpack.c.bf16 %v918, %v918
        %v921 = vsel %vm907, %v919, 0
        %vm923 = vcmask 1043456
        %v925 = vsel %vm923, %v885, 0
        %927 = vmatpush.bf16.msra.mxu0 0
        %928 = vmatpush.bf16.msra.mxu0 0
        %929 = vmatpush.bf16.msra.mxu0 0
        %930 = vmatpush.bf16.msra.mxu0 0
        %931 = vmatpush.bf16.msra.mxu0 0
        %932 = vmatpush.bf16.msra.mxu0 0
        %933 = vmatpush.bf16.msra.mxu0 0
        %934 = vmatpush.bf16.msra.mxu0 %v925
        %935 = vmatmul.bf16.gmra.mxu0 %v921
        %v936 = vpop.f32.mrf.mxu0
        %v937 = vadd.f32 0.0, %v936
        %v938 = vpop.f32.mrf.mxu0
        %939 = vdwg.mxu0
        %v940 = vpack.c.bf16 %v937, %v937
        %v941 = vld [vmem:[%s536] sm:$0xf]
        %v942 = vld [vmem:[%s536 + $0x4] sm:$0xf]
        %v943 = vld [vmem:[%s536 + $0x8] sm:$0xf]
        %v944 = vld [vmem:[%s536 + $0xc] sm:$0xf]
        %946 = vrot.lane.b32.xlu0 %v883, 96
        %v947 = vpop.permute.xlu0 %946
        %949 = vrot.lane.b32.xlu0 %v884, 96
        %v950 = vpop.permute.xlu0 %949
        %v952 = vsel %vm886, %v947, 0
        %v955 = vsel %vm886, %v950, 0
        %957 = vmatpush.bf16.xpose.msra.mxu0 0
        %958 = vmatpush.bf16.xpose.msra.mxu0 0
        %959 = vmatpush.bf16.xpose.msra.mxu0 0
        %960 = vmatpush.bf16.xpose.msra.mxu0 0
        %961 = vmatpush.bf16.xpose.msra.mxu0 0
        %962 = vmatpush.bf16.xpose.msra.mxu0 0
        %963 = vmatpush.bf16.xpose.msra.mxu0 0
        %964 = vmatpush.bf16.xpose.msra.mxu0 %v955
        %965 = vmatmul.bf16.gmra.mxu0 %v952
        %v966 = vpop.f32.mrf.mxu0
        %v967 = vadd.f32 0.0, %v966
        %v968 = vpop.f32.mrf.mxu0
        %969 = vdwg.mxu0
        %v970 = vmul.f32 %v967, 0.17677669
        %v971 = vsel %vm907, %v970, -inf
        %972 = vmax.xlane.f32.xlu0 %v971
        %v973 = vpop.xlane.xlu0 %972
        %v974 = vsub.f32 %v970, %v973
        %v975 = vmul.f32 %v974, 1.442695
        %v976 = vpow.pop %v975
        %v977 = vsel %vm907, %v976, 0.0
        %978 = vadd.xlane.f32.xlu0 %v977
        %v979 = vpop.xlane.xlu0 %978
        %v980 = vrcp.pop %v979
        %v981 = vmul.f32 %v976, %v980
        %v982 = vpack.c.bf16 %v981, %v981
        %984 = vrot.lane.b32.xlu0 %v885, 96
        %v985 = vpop.permute.xlu0 %984
        %v987 = vsel %vm907, %v982, 0
        %v990 = vsel %vm923, %v985, 0
        %992 = vmatpush.bf16.msra.mxu0 0
        %993 = vmatpush.bf16.msra.mxu0 0
        %994 = vmatpush.bf16.msra.mxu0 0
        %995 = vmatpush.bf16.msra.mxu0 0
        %996 = vmatpush.bf16.msra.mxu0 0
        %997 = vmatpush.bf16.msra.mxu0 0
        %998 = vmatpush.bf16.msra.mxu0 0
        %999 = vmatpush.bf16.msra.mxu0 %v990
        %1000 = vmatmul.bf16.gmra.mxu0 %v987
        %v1001 = vpop.f32.mrf.mxu0
        %v1002 = vadd.f32 0.0, %v1001
        %v1003 = vpop.f32.mrf.mxu0
        %1004 = vdwg.mxu0
        %v1005 = vpack.c.bf16 %v1002, %v1002
        %v1006 = vld [vmem:[%s536 + $0x10] sm:$0xf]
        %v1007 = vld [vmem:[%s536 + $0x14] sm:$0xf]
        %v1008 = vld [vmem:[%s536 + $0x18] sm:$0xf]
        %v1009 = vld [vmem:[%s536 + $0x1c] sm:$0xf]
        %v1014 = vunpack.c.l.b16 %v1006
        %v1015 = vunpack.c.l.b16 %v1007
        %v1016 = vunpack.c.l.b16 %v1008
        %v1017 = vunpack.c.l.b16 %v1009
        %v1018 = vpack.c.b16 %v1015, %v1014
        %v1019 = vpack.c.b16 %v1017, %v1016
        %v1023 = vsel %vm886, %v1005, 0
        %1025 = vmatpush.bf16.msra.mxu0 0
        %1026 = vmatpush.bf16.msra.mxu0 0
        %1027 = vmatpush.bf16.msra.mxu0 0
        %1028 = vmatpush.bf16.msra.mxu0 0
        %1029 = vmatpush.bf16.msra.mxu0 0
        %1030 = vmatpush.bf16.msra.mxu0 0
        %1031 = vmatpush.bf16.msra.mxu0 %v1019
        %1032 = vmatpush.bf16.msra.mxu0 %v1018
        %1033 = vmatmul.bf16.gmra.mxu0 %v1023
        %v1034 = vpop.f32.mrf.mxu0
        %v1035 = vadd.f32 0.0, %v1034
        %v1036 = vpop.f32.mrf.mxu0
        %1037 = vdwg.mxu0
        %v1042 = vunpack.c.l.b16 %v941
        %v1043 = vunpack.c.l.b16 %v942
        %v1044 = vunpack.c.l.b16 %v943
        %v1045 = vunpack.c.l.b16 %v944
        %v1046 = vpack.c.b16 %v1043, %v1042
        %v1047 = vpack.c.b16 %v1045, %v1044
        %v1051 = vsel %vm886, %v940, 0
        %1053 = vmatpush.bf16.msra.mxu0 0
        %1054 = vmatpush.bf16.msra.mxu0 0
        %1055 = vmatpush.bf16.msra.mxu0 0
        %1056 = vmatpush.bf16.msra.mxu0 0
        %1057 = vmatpush.bf16.msra.mxu0 0
        %1058 = vmatpush.bf16.msra.mxu0 0
        %1059 = vmatpush.bf16.msra.mxu0 %v1047
        %1060 = vmatpush.bf16.msra.mxu0 %v1046
        %1061 = vmatmul.bf16.gmra.mxu0 %v1051
        %v1062 = vpop.f32.mrf.mxu0
        %v1063 = vadd.f32 %v1035, %v1062
        %v1064 = vpop.f32.mrf.mxu0
        %1065 = vdwg.mxu0
        %1066 = vrot.lane.b32.xlu0 %v883, 64
        %v1067 = vpop.permute.xlu0 %1066
        %1068 = vrot.lane.b32.xlu0 %v884, 64
        %v1069 = vpop.permute.xlu0 %1068
        %v1071 = vsel %vm886, %v1067, 0
        %v1074 = vsel %vm886, %v1069, 0
        %1076 = vmatpush.bf16.xpose.msra.mxu0 0
        %1077 = vmatpush.bf16.xpose.msra.mxu0 0
        %1078 = vmatpush.bf16.xpose.msra.mxu0 0
        %1079 = vmatpush.bf16.xpose.msra.mxu0 0
        %1080 = vmatpush.bf16.xpose.msra.mxu0 0
        %1081 = vmatpush.bf16.xpose.msra.mxu0 0
        %1082 = vmatpush.bf16.xpose.msra.mxu0 0
        %1083 = vmatpush.bf16.xpose.msra.mxu0 %v1074
        %1084 = vmatmul.bf16.gmra.mxu0 %v1071
        %v1085 = vpop.f32.mrf.mxu0
        %v1086 = vadd.f32 0.0, %v1085
        %v1087 = vpop.f32.mrf.mxu0
        %1088 = vdwg.mxu0
        %v1089 = vmul.f32 %v1086, 0.17677669
        %v1090 = vsel %vm907, %v1089, -inf
        %1091 = vmax.xlane.f32.xlu0 %v1090
        %v1092 = vpop.xlane.xlu0 %1091
        %v1093 = vsub.f32 %v1089, %v1092
        %v1094 = vmul.f32 %v1093, 1.442695
        %v1095 = vpow.pop %v1094
        %v1096 = vsel %vm907, %v1095, 0.0
        %1097 = vadd.xlane.f32.xlu0 %v1096
        %v1098 = vpop.xlane.xlu0 %1097
        %v1099 = vrcp.pop %v1098
        %v1100 = vmul.f32 %v1095, %v1099
        %v1101 = vpack.c.bf16 %v1100, %v1100
        %1102 = vrot.lane.b32.xlu0 %v885, 64
        %v1103 = vpop.permute.xlu0 %1102
        %v1105 = vsel %vm907, %v1101, 0
        %v1108 = vsel %vm923, %v1103, 0
        %1110 = vmatpush.bf16.msra.mxu0 0
        %1111 = vmatpush.bf16.msra.mxu0 0
        %1112 = vmatpush.bf16.msra.mxu0 0
        %1113 = vmatpush.bf16.msra.mxu0 0
        %1114 = vmatpush.bf16.msra.mxu0 0
        %1115 = vmatpush.bf16.msra.mxu0 0
        %1116 = vmatpush.bf16.msra.mxu0 0
        %1117 = vmatpush.bf16.msra.mxu0 %v1108
        %1118 = vmatmul.bf16.gmra.mxu0 %v1105
        %v1119 = vpop.f32.mrf.mxu0
        %v1120 = vadd.f32 0.0, %v1119
        %v1121 = vpop.f32.mrf.mxu0
        %1122 = vdwg.mxu0
        %v1123 = vpack.c.bf16 %v1120, %v1120
        %v1124 = vld [vmem:[%s536 + $0x20] sm:$0xf]
        %v1125 = vld [vmem:[%s536 + $0x24] sm:$0xf]
        %v1126 = vld [vmem:[%s536 + $0x28] sm:$0xf]
        %v1127 = vld [vmem:[%s536 + $0x2c] sm:$0xf]
        %v1132 = vunpack.c.l.b16 %v1124
        %v1133 = vunpack.c.l.b16 %v1125
        %v1134 = vunpack.c.l.b16 %v1126
        %v1135 = vunpack.c.l.b16 %v1127
        %v1136 = vpack.c.b16 %v1133, %v1132
        %v1137 = vpack.c.b16 %v1135, %v1134
        %v1141 = vsel %vm886, %v1123, 0
        %1143 = vmatpush.bf16.msra.mxu0 0
        %1144 = vmatpush.bf16.msra.mxu0 0
        %1145 = vmatpush.bf16.msra.mxu0 0
        %1146 = vmatpush.bf16.msra.mxu0 0
        %1147 = vmatpush.bf16.msra.mxu0 0
        %1148 = vmatpush.bf16.msra.mxu0 0
        %1149 = vmatpush.bf16.msra.mxu0 %v1137
        %1150 = vmatpush.bf16.msra.mxu0 %v1136
        %1151 = vmatmul.bf16.gmra.mxu0 %v1141
        %v1152 = vpop.f32.mrf.mxu0
        %v1153 = vadd.f32 0.0, %v1152
        %v1154 = vpop.f32.mrf.mxu0
        %1155 = vdwg.mxu0
        %v1156 = vadd.f32 %v1063, %v1153
        %1157 = vrot.lane.b32.xlu0 %v883, 32
        %v1158 = vpop.permute.xlu0 %1157
        %1159 = vrot.lane.b32.xlu0 %v884, 32
        %v1160 = vpop.permute.xlu0 %1159
        %v1162 = vsel %vm886, %v1158, 0
        %v1165 = vsel %vm886, %v1160, 0
        %1167 = vmatpush.bf16.xpose.msra.mxu0 0
        %1168 = vmatpush.bf16.xpose.msra.mxu0 0
        %1169 = vmatpush.bf16.xpose.msra.mxu0 0
        %1170 = vmatpush.bf16.xpose.msra.mxu0 0
        %1171 = vmatpush.bf16.xpose.msra.mxu0 0
        %1172 = vmatpush.bf16.xpose.msra.mxu0 0
        %1173 = vmatpush.bf16.xpose.msra.mxu0 0
        %1174 = vmatpush.bf16.xpose.msra.mxu0 %v1165
        %1175 = vmatmul.bf16.gmra.mxu0 %v1162
        %v1176 = vpop.f32.mrf.mxu0
        %v1177 = vadd.f32 0.0, %v1176
        %v1178 = vpop.f32.mrf.mxu0
        %1179 = vdwg.mxu0
        %v1180 = vmul.f32 %v1177, 0.17677669
        %v1181 = vsel %vm907, %v1180, -inf
        %1182 = vmax.xlane.f32.xlu0 %v1181
        %v1183 = vpop.xlane.xlu0 %1182
        %v1184 = vsub.f32 %v1180, %v1183
        %v1185 = vmul.f32 %v1184, 1.442695
        %v1186 = vpow.pop %v1185
        %v1187 = vsel %vm907, %v1186, 0.0
        %1188 = vadd.xlane.f32.xlu0 %v1187
        %v1189 = vpop.xlane.xlu0 %1188
        %v1190 = vrcp.pop %v1189
        %v1191 = vmul.f32 %v1186, %v1190
        %v1192 = vpack.c.bf16 %v1191, %v1191
        %1193 = vrot.lane.b32.xlu0 %v885, 32
        %v1194 = vpop.permute.xlu0 %1193
        %v1196 = vsel %vm907, %v1192, 0
        %v1199 = vsel %vm923, %v1194, 0
        %1201 = vmatpush.bf16.msra.mxu0 0
        %1202 = vmatpush.bf16.msra.mxu0 0
        %1203 = vmatpush.bf16.msra.mxu0 0
        %1204 = vmatpush.bf16.msra.mxu0 0
        %1205 = vmatpush.bf16.msra.mxu0 0
        %1206 = vmatpush.bf16.msra.mxu0 0
        %1207 = vmatpush.bf16.msra.mxu0 0
        %1208 = vmatpush.bf16.msra.mxu0 %v1199
        %1209 = vmatmul.bf16.gmra.mxu0 %v1196
        %v1210 = vpop.f32.mrf.mxu0
        %v1211 = vadd.f32 0.0, %v1210
        %v1212 = vpop.f32.mrf.mxu0
        %1213 = vdwg.mxu0
        %v1214 = vpack.c.bf16 %v1211, %v1211
        %v1215 = vld [vmem:[%s536 + $0x30] sm:$0xf]
        %v1216 = vld [vmem:[%s536 + $0x34] sm:$0xf]
        %v1217 = vld [vmem:[%s536 + $0x38] sm:$0xf]
        %v1218 = vld [vmem:[%s536 + $0x3c] sm:$0xf]
        %v1223 = vunpack.c.l.b16 %v1215
        %v1224 = vunpack.c.l.b16 %v1216
        %v1225 = vunpack.c.l.b16 %v1217
        %v1226 = vunpack.c.l.b16 %v1218
        %v1227 = vpack.c.b16 %v1224, %v1223
        %v1228 = vpack.c.b16 %v1226, %v1225
        %v1232 = vsel %vm886, %v1214, 0
        %1234 = vmatpush.bf16.msra.mxu0 0
        %1235 = vmatpush.bf16.msra.mxu0 0
        %1236 = vmatpush.bf16.msra.mxu0 0
        %1237 = vmatpush.bf16.msra.mxu0 0
        %1238 = vmatpush.bf16.msra.mxu0 0
        %1239 = vmatpush.bf16.msra.mxu0 0
        %1240 = vmatpush.bf16.msra.mxu0 %v1228
        %1241 = vmatpush.bf16.msra.mxu0 %v1227
        %1242 = vmatmul.bf16.gmra.mxu0 %v1232
        %v1243 = vpop.f32.mrf.mxu0
        %v1244 = vadd.f32 0.0, %v1243
        %v1245 = vpop.f32.mrf.mxu0
        %1246 = vdwg.mxu0
        %v1247 = vadd.f32 %v1156, %v1244
        %v1248 = vadd.f32 %v674, %v1247
        %v1249 = vld [vmem:[%s647] sm:$0x1]
        %v1251 = vperm.slane %v1249, 0
        %v1253 = vadd.f32 %v1248, %v1251
        %v1254 = vld [vmem:[%s650] sm:$0x1]
        %v1255 = vld [vmem:[%s653] sm:$0x1]
        %1256 = vadd.xlane.f32.xlu0 %v1253
        %v1257 = vpop.xlane.xlu0 %1256
        %v1258 = vrcp.pop 128.0
        %v1259 = vmul.f32 128.0, %v1258
        %v1260 = vsub.f32 1.0, %v1259
        %v1261 = vmul.f32 %v1258, %v1260
        %v1262 = vadd.f32 %v1258, %v1261
        %vm1263 = vweird.f32 %v1258
        %v1264 = vsel %vm1263, %v1258, %v1262
        %v1265 = vmul.f32 %v1257, %v1264
        %v1266 = vsub.f32 %v1253, %v1265
        %v1267 = vmul.f32 %v1266, %v1266
        %1268 = vadd.xlane.f32.xlu0 %v1267
        %v1269 = vpop.xlane.xlu0 %1268
        %v1270 = vmul.f32 %v1269, %v1264
        %v1271 = vadd.f32 %v1270, 1e-05
        %v1272 = vrsqrt.pop %v1271
        %v1273 = vmul.f32 %v1272, %v1271
        %v1274 = vmul.f32 %v1273, %v1272
        %v1275 = vmul.f32 0.5, %v1274
        %v1276 = vsub.f32 1.5, %v1275
        %v1277 = vmul.f32 %v1272, %v1276
        %vm1278 = vweird.f32 %v1271
        %vm1279 = vweird.f32 %v1272
        %vm1280 = vmor %vm1278, %vm1279
        %v1281 = vsel %vm1280, %v1272, %v1277
        %v1282 = vmul.f32 %v1266, %v1281
        %v1284 = vperm.slane %v1254, 0
        %v1286 = vmul.f32 %v1282, %v1284
        %v1288 = vperm.slane %v1255, 0
        %v1290 = vadd.f32 %v1286, %v1288
        %v1291 = vpack.c.bf16 %v1290, %v1290
        %v1292 = vld [vmem:[%s546] sm:$0xff]
        %v1293 = vld [vmem:[%s546 + $0x8] sm:$0xff]
        %v1294 = vld [vmem:[%s546 + $0x10] sm:$0xff]
        %v1295 = vld [vmem:[%s546 + $0x18] sm:$0xff]
        %v1296 = vld [vmem:[%s546 + $0x20] sm:$0xff]
        %v1297 = vld [vmem:[%s546 + $0x28] sm:$0xff]
        %v1298 = vld [vmem:[%s546 + $0x30] sm:$0xff]
        %v1299 = vld [vmem:[%s546 + $0x38] sm:$0xff]
        %v1300 = vld [vmem:[%s546 + $0x40] sm:$0xff]
        %v1301 = vld [vmem:[%s546 + $0x48] sm:$0xff]
        %v1302 = vld [vmem:[%s546 + $0x50] sm:$0xff]
        %v1303 = vld [vmem:[%s546 + $0x58] sm:$0xff]
        %v1304 = vld [vmem:[%s546 + $0x60] sm:$0xff]
        %v1305 = vld [vmem:[%s546 + $0x68] sm:$0xff]
        %v1306 = vld [vmem:[%s546 + $0x70] sm:$0xff]
        %v1307 = vld [vmem:[%s546 + $0x78] sm:$0xff]
        %v1308 = vld [vmem:[%s657] sm:$0x3]
        %v1310 = vperm.slane %v1308, 0
        %v1311 = vperm.slane %v1308, 1
        %v1330 = vunpack.c.l.b16 %v1292
        %v1331 = vunpack.c.h.b16 %v1292
        %v1332 = vunpack.c.l.b16 %v1293
        %v1333 = vunpack.c.h.b16 %v1293
        %v1334 = vunpack.c.l.b16 %v1294
        %v1335 = vunpack.c.h.b16 %v1294
        %v1336 = vunpack.c.l.b16 %v1295
        %v1337 = vunpack.c.h.b16 %v1295
        %v1338 = vunpack.c.l.b16 %v1296
        %v1339 = vunpack.c.h.b16 %v1296
        %v1340 = vunpack.c.l.b16 %v1297
        %v1341 = vunpack.c.h.b16 %v1297
        %v1342 = vunpack.c.l.b16 %v1298
        %v1343 = vunpack.c.h.b16 %v1298
        %v1344 = vunpack.c.l.b16 %v1299
        %v1345 = vunpack.c.h.b16 %v1299
        %v1346 = vunpack.c.l.b16 %v1300
        %v1347 = vunpack.c.h.b16 %v1300
        %v1348 = vunpack.c.l.b16 %v1301
        %v1349 = vunpack.c.h.b16 %v1301
        %v1350 = vunpack.c.l.b16 %v1302
        %v1351 = vunpack.c.h.b16 %v1302
        %v1352 = vunpack.c.l.b16 %v1303
        %v1353 = vunpack.c.h.b16 %v1303
        %v1354 = vunpack.c.l.b16 %v1304
        %v1355 = vunpack.c.h.b16 %v1304
        %v1356 = vunpack.c.l.b16 %v1305
        %v1357 = vunpack.c.h.b16 %v1305
        %v1358 = vunpack.c.l.b16 %v1306
        %v1359 = vunpack.c.h.b16 %v1306
        %v1360 = vunpack.c.l.b16 %v1307
        %v1361 = vunpack.c.h.b16 %v1307
        %v1362 = vpack.c.b16 %v1332, %v1330
        %v1363 = vpack.c.b16 %v1333, %v1331
        %v1364 = vpack.c.b16 %v1336, %v1334
        %v1365 = vpack.c.b16 %v1337, %v1335
        %v1366 = vpack.c.b16 %v1340, %v1338
        %v1367 = vpack.c.b16 %v1341, %v1339
        %v1368 = vpack.c.b16 %v1344, %v1342
        %v1369 = vpack.c.b16 %v1345, %v1343
        %v1370 = vpack.c.b16 %v1348, %v1346
        %v1371 = vpack.c.b16 %v1349, %v1347
        %v1372 = vpack.c.b16 %v1352, %v1350
        %v1373 = vpack.c.b16 %v1353, %v1351
        %v1374 = vpack.c.b16 %v1356, %v1354
        %v1375 = vpack.c.b16 %v1357, %v1355
        %v1376 = vpack.c.b16 %v1360, %v1358
        %v1377 = vpack.c.b16 %v1361, %v1359
        %1394 = vmatpush.bf16.msra.mxu0 %v1376
        %1395 = vmatpush.bf16.msra.mxu0 %v1374
        %1396 = vmatpush.bf16.msra.mxu0 %v1372
        %1397 = vmatpush.bf16.msra.mxu0 %v1370
        %1398 = vmatpush.bf16.msra.mxu0 %v1368
        %1399 = vmatpush.bf16.msra.mxu0 %v1366
        %1400 = vmatpush.bf16.msra.mxu0 %v1364
        %1401 = vmatpush.bf16.msra.mxu0 %v1362
        %1402 = vmatmul.bf16.gmra.mxu0 %v1291
        %v1403 = vpop.f32.mrf.mxu0
        %v1404 = vadd.f32 %v1310, %v1403
        %v1405 = vpop.f32.mrf.mxu0
        %1406 = vdwg.mxu0
        %1407 = vmatpush.bf16.msra.mxu0 %v1377
        %1408 = vmatpush.bf16.msra.mxu0 %v1375
        %1409 = vmatpush.bf16.msra.mxu0 %v1373
        %1410 = vmatpush.bf16.msra.mxu0 %v1371
        %1411 = vmatpush.bf16.msra.mxu0 %v1369
        %1412 = vmatpush.bf16.msra.mxu0 %v1367
        %1413 = vmatpush.bf16.msra.mxu0 %v1365
        %1414 = vmatpush.bf16.msra.mxu0 %v1363
        %1415 = vmatmul.bf16.gmra.mxu0 %v1291
        %v1416 = vpop.f32.mrf.mxu0
        %v1417 = vadd.f32 %v1311, %v1416
        %v1418 = vpop.f32.mrf.mxu0
        %1419 = vdwg.mxu0
        %v1420 = vmul.f32 %v1404, 0.5
        %v1421 = vmul.f32 %v1417, 0.5
        %v1422 = vmul.f32 %v1404, 0.044715
        %v1423 = vmul.f32 %v1417, 0.044715
        %v1424 = vmul.f32 %v1422, %v1404
        %v1425 = vmul.f32 %v1423, %v1417
        %v1426 = vmul.f32 %v1424, %v1404
        %v1427 = vmul.f32 %v1425, %v1417
        %v1428 = vadd.f32 %v1404, %v1426
        %v1429 = vadd.f32 %v1417, %v1427
        %v1430 = vmul.f32 %v1428, 0.7978846
        %v1431 = vmul.f32 %v1429, 0.7978846
        %v1432 = vtanh.pop %v1430
        %v1433 = vtanh.pop %v1431
        %v1434 = vadd.f32 %v1432, 1.0
        %v1435 = vadd.f32 %v1433, 1.0
        %v1436 = vmul.f32 %v1420, %v1434
        %v1437 = vmul.f32 %v1421, %v1435
        %v1438 = vpack.c.bf16 %v1436, %v1436
        %v1439 = vpack.c.bf16 %v1437, %v1437
        %v1440 = vld [vmem:[%s556] sm:$0xf]
        %v1441 = vld [vmem:[%s556 + $0x4] sm:$0xf]
        %v1442 = vld [vmem:[%s556 + $0x8] sm:$0xf]
        %v1443 = vld [vmem:[%s556 + $0xc] sm:$0xf]
        %v1444 = vld [vmem:[%s556 + $0x10] sm:$0xf]
        %v1445 = vld [vmem:[%s556 + $0x14] sm:$0xf]
        %v1446 = vld [vmem:[%s556 + $0x18] sm:$0xf]
        %v1447 = vld [vmem:[%s556 + $0x1c] sm:$0xf]
        %v1448 = vld [vmem:[%s556 + $0x20] sm:$0xf]
        %v1449 = vld [vmem:[%s556 + $0x24] sm:$0xf]
        %v1450 = vld [vmem:[%s556 + $0x28] sm:$0xf]
        %v1451 = vld [vmem:[%s556 + $0x2c] sm:$0xf]
        %v1452 = vld [vmem:[%s556 + $0x30] sm:$0xf]
        %v1453 = vld [vmem:[%s556 + $0x34] sm:$0xf]
        %v1454 = vld [vmem:[%s556 + $0x38] sm:$0xf]
        %v1455 = vld [vmem:[%s556 + $0x3c] sm:$0xf]
        %v1456 = vld [vmem:[%s556 + $0x40] sm:$0xf]
        %v1457 = vld [vmem:[%s556 + $0x44] sm:$0xf]
        %v1458 = vld [vmem:[%s556 + $0x48] sm:$0xf]
        %v1459 = vld [vmem:[%s556 + $0x4c] sm:$0xf]
        %v1460 = vld [vmem:[%s556 + $0x50] sm:$0xf]
        %v1461 = vld [vmem:[%s556 + $0x54] sm:$0xf]
        %v1462 = vld [vmem:[%s556 + $0x58] sm:$0xf]
        %v1463 = vld [vmem:[%s556 + $0x5c] sm:$0xf]
        %v1464 = vld [vmem:[%s556 + $0x60] sm:$0xf]
        %v1465 = vld [vmem:[%s556 + $0x64] sm:$0xf]
        %v1466 = vld [vmem:[%s556 + $0x68] sm:$0xf]
        %v1467 = vld [vmem:[%s556 + $0x6c] sm:$0xf]
        %v1468 = vld [vmem:[%s556 + $0x70] sm:$0xf]
        %v1469 = vld [vmem:[%s556 + $0x74] sm:$0xf]
        %v1470 = vld [vmem:[%s556 + $0x78] sm:$0xf]
        %v1471 = vld [vmem:[%s556 + $0x7c] sm:$0xf]
        %v1472 = vld [vmem:[%s660] sm:$0x1]
        %v1474 = vperm.slane %v1472, 0
        %v1508 = vunpack.c.l.b16 %v1440
        %v1509 = vunpack.c.l.b16 %v1441
        %v1510 = vunpack.c.l.b16 %v1442
        %v1511 = vunpack.c.l.b16 %v1443
        %v1512 = vunpack.c.l.b16 %v1444
        %v1513 = vunpack.c.l.b16 %v1445
        %v1514 = vunpack.c.l.b16 %v1446
        %v1515 = vunpack.c.l.b16 %v1447
        %v1516 = vunpack.c.l.b16 %v1448
        %v1517 = vunpack.c.l.b16 %v1449
        %v1518 = vunpack.c.l.b16 %v1450
        %v1519 = vunpack.c.l.b16 %v1451
        %v1520 = vunpack.c.l.b16 %v1452
        %v1521 = vunpack.c.l.b16 %v1453
        %v1522 = vunpack.c.l.b16 %v1454
        %v1523 = vunpack.c.l.b16 %v1455
        %v1524 = vunpack.c.l.b16 %v1456
        %v1525 = vunpack.c.l.b16 %v1457
        %v1526 = vunpack.c.l.b16 %v1458
        %v1527 = vunpack.c.l.b16 %v1459
        %v1528 = vunpack.c.l.b16 %v1460
        %v1529 = vunpack.c.l.b16 %v1461
        %v1530 = vunpack.c.l.b16 %v1462
        %v1531 = vunpack.c.l.b16 %v1463
        %v1532 = vunpack.c.l.b16 %v1464
        %v1533 = vunpack.c.l.b16 %v1465
        %v1534 = vunpack.c.l.b16 %v1466
        %v1535 = vunpack.c.l.b16 %v1467
        %v1536 = vunpack.c.l.b16 %v1468
        %v1537 = vunpack.c.l.b16 %v1469
        %v1538 = vunpack.c.l.b16 %v1470
        %v1539 = vunpack.c.l.b16 %v1471
        %v1540 = vpack.c.b16 %v1509, %v1508
        %v1541 = vpack.c.b16 %v1511, %v1510
        %v1542 = vpack.c.b16 %v1513, %v1512
        %v1543 = vpack.c.b16 %v1515, %v1514
        %v1544 = vpack.c.b16 %v1517, %v1516
        %v1545 = vpack.c.b16 %v1519, %v1518
        %v1546 = vpack.c.b16 %v1521, %v1520
        %v1547 = vpack.c.b16 %v1523, %v1522
        %v1548 = vpack.c.b16 %v1525, %v1524
        %v1549 = vpack.c.b16 %v1527, %v1526
        %v1550 = vpack.c.b16 %v1529, %v1528
        %v1551 = vpack.c.b16 %v1531, %v1530
        %v1552 = vpack.c.b16 %v1533, %v1532
        %v1553 = vpack.c.b16 %v1535, %v1534
        %v1554 = vpack.c.b16 %v1537, %v1536
        %v1555 = vpack.c.b16 %v1539, %v1538
        %1572 = vmatpush.bf16.msra.mxu0 %v1547
        %1573 = vmatpush.bf16.msra.mxu0 %v1546
        %1574 = vmatpush.bf16.msra.mxu0 %v1545
        %1575 = vmatpush.bf16.msra.mxu0 %v1544
        %1576 = vmatpush.bf16.msra.mxu0 %v1543
        %1577 = vmatpush.bf16.msra.mxu0 %v1542
        %1578 = vmatpush.bf16.msra.mxu0 %v1541
        %1579 = vmatpush.bf16.msra.mxu0 %v1540
        %1580 = vmatmul.bf16.gmra.mxu0 %v1438
        %v1581 = vpop.f32.mrf.mxu0
        %v1582 = vadd.f32 %v1474, %v1581
        %v1583 = vpop.f32.mrf.mxu0
        %1584 = vdwg.mxu0
        %1585 = vmatpush.bf16.msra.mxu0 %v1555
        %1586 = vmatpush.bf16.msra.mxu0 %v1554
        %1587 = vmatpush.bf16.msra.mxu0 %v1553
        %1588 = vmatpush.bf16.msra.mxu0 %v1552
        %1589 = vmatpush.bf16.msra.mxu0 %v1551
        %1590 = vmatpush.bf16.msra.mxu0 %v1550
        %1591 = vmatpush.bf16.msra.mxu0 %v1549
        %1592 = vmatpush.bf16.msra.mxu0 %v1548
        %1593 = vmatmul.bf16.gmra.mxu0 %v1439
        %v1594 = vpop.f32.mrf.mxu0
        %v1595 = vadd.f32 %v1582, %v1594
        %v1596 = vpop.f32.mrf.mxu0
        %1597 = vdwg.mxu0
        %v1598 = vadd.f32 %v1290, %v1595
        %v1599 = vld [vmem:[%s663] sm:$0x1]
        %v1600 = vld [vmem:[%s666] sm:$0x1]
        %1601 = vadd.xlane.f32.xlu0 %v1598
        %v1602 = vpop.xlane.xlu0 %1601
        %v1603 = vmul.f32 %v1602, %v1264
        %v1604 = vsub.f32 %v1598, %v1603
        %v1605 = vmul.f32 %v1604, %v1604
        %1606 = vadd.xlane.f32.xlu0 %v1605
        %v1607 = vpop.xlane.xlu0 %1606
        %v1608 = vmul.f32 %v1607, %v1264
        %v1609 = vadd.f32 %v1608, 1e-05
        %v1610 = vrsqrt.pop %v1609
        %v1611 = vmul.f32 %v1610, %v1609
        %v1612 = vmul.f32 %v1611, %v1610
        %v1613 = vmul.f32 0.5, %v1612
        %v1614 = vsub.f32 1.5, %v1613
        %v1615 = vmul.f32 %v1610, %v1614
        %vm1616 = vweird.f32 %v1609
        %vm1617 = vweird.f32 %v1610
        %vm1618 = vmor %vm1616, %vm1617
        %v1619 = vsel %vm1618, %v1610, %v1615
        %v1620 = vmul.f32 %v1604, %v1619
        %v1622 = vperm.slane %v1599, 0
        %v1624 = vmul.f32 %v1620, %v1622
        %v1626 = vperm.slane %v1600, 0
        %v1628 = vadd.f32 %v1624, %v1626
        %1629 = vst [vmem:[#allocation2] sm:$0xff] %v1628
        %p1630 = scmp.eq.s32.totalorder %s30, 1
        // Predicated region
        $region89: #{musicbert_forward.4} parent=71 // pred_check
          %p1631 = pneg %p1630
        $region90: #{musicbert_forward.4} parent=71 // pred_check_branch
          %1633 = sbr.rel (%p1631) target = $region92
        $region91: #{musicbert_forward.4} parent=71 // pred_region
          %1634 = vst [vmem:[%s13] sm:$0xff] %v1628
        $region92: #{musicbert_forward.4} parent=71 // pred_fallthru
          _
        // Predicated region
        $region93: #{musicbert_forward.4} parent=71 // pred_check
          %p1635 = pneg %p376
        $region94: #{musicbert_forward.4} parent=71 // pred_check_branch
          %1637 = sbr.rel (%p1635) target = $region96
        $region95: #{musicbert_forward.4} parent=71 // pred_region
          _
        $region96: #{musicbert_forward.4} parent=71 // pred_fallthru
          _
        // Predicated region
        $region97: #{musicbert_forward.4} parent=71 // pred_check
          %p1638 = pneg %p376
        $region98: #{musicbert_forward.4} parent=71 // pred_check_branch
          %1640 = sbr.rel (%p1638) target = $region100
        $region99: #{musicbert_forward.4} parent=71 // pred_region
          _
        $region100: #{musicbert_forward.4} parent=71 // pred_fallthru
          _
      $region72: #{musicbert_forward.4} parent=5 // pred_fallthru
        _
      %p1641 = scmp.le.s32.totalorder 2, %s25
      // Predicated region
      $region101: #{musicbert_forward.4} parent=5 // pred_check
        %p1642 = pneg %p1641
      $region102: #{musicbert_forward.4} parent=5 // pred_check_branch
        %1644 = sbr.rel (%p1642) target = $region104
      $region103: #{musicbert_forward.4} parent=5 // pred_region
        %s1645 = ssub.s32 %s25, 2
      $region104: #{musicbert_forward.4} parent=5 // pred_fallthru
        _
    $region6: #{musicbert_forward.4} parent=1 // loop_footer
      %s29 = sadd.s32 1, %s25
    $region7: #{musicbert_forward.4} parent=1 // loop_footer_branch
      %24 = sbr.rel target = $region3
    $region8: #{musicbert_forward.4} parent=1 // loop_exit
      _
    %1646 = vsyncpa [#allocation4], 1
    %s1647 = scalar_lea.sflag [#allocation4], 1
    %1648 = vsyncpa %s1647, 1
    %1649 = vsyncpa [#allocation6], 1
    %s1650 = scalar_lea.sflag [#allocation6], 1
    %1651 = vsyncpa %s1650, 1

// kernel: musicbert_forward.5
$region0: #{musicbert_forward.5}
  #allocation0 [shape = 'u32[]', space=smem, size = 0x4, offset = 0x4, fixed_abs, tag = 'smem constant byte address 0x4 - core index']
  #allocation1 [shape = 'u32[72,128]{1,0:T(1,128)}', space=vmem, size = 0x9000, scoped, tag = 'internal scratch']
  %s0 = inlined_call_operand.vmem [shape: f32[8,128], index: 0, kind: input, shape index: {}]
  %s1 = inlined_call_operand.vmem [shape: bf16[128,1024], index: 1, kind: input, shape index: {}]
  %s2 = inlined_call_operand.vmem [shape: f32[1,1024], index: 2, kind: input, shape index: {}]
  %s3 = inlined_call_operand.vmem [shape: bf16[128,128], index: 3, kind: input, shape index: {}]
  %s4 = inlined_call_operand.vmem [shape: f32[1,128], index: 4, kind: input, shape index: {}]
  %s5 = inlined_call_operand.vmem [shape: f32[1,128], index: 5, kind: input, shape index: {}]
  %s6 = inlined_call_operand.vmem [shape: f32[1,128], index: 6, kind: input, shape index: {}]
  %s7 = inlined_call_operand.vmem [shape: bf16[128,128], index: 7, kind: input, shape index: {}]
  %s8 = inlined_call_operand.vmem [shape: f32[1,128], index: 8, kind: input, shape index: {}]
  %s9 = inlined_call_operand.hbm [shape: f32[8,8,128], index: 9, kind: output, shape index: {}]
  %s10 = sld [smem:[#allocation0]]
  $region46: #{musicbert_forward.5} parent=0
    _
  %s12 = ssub.s32 1, %s10
  %s13 = scalar_select 0, %s12, %s10
  $region1: #{musicbert_forward.5} parent=0
    #allocation2 [shape = 'u8[32768]{0}', space=vmem, size = 0x8000, scoped, tag = 'output window, operand 0, single buffered']
    #allocation3 [shape = 's32[1]{0}', space=sflag, size = 0x4, scoped, tag = 'scoped memory for musicbert_forward.5']
    %14 = vsyncpa [#allocation3], 0
    // Predicated region
    $region2: #{musicbert_forward.5} parent=1 // pred_check
      _
    $region3: #{musicbert_forward.5} parent=1 // pred_check_branch
      %16 = sbr.rel (0) target = $region5
    $region4: #{musicbert_forward.5} parent=1 // pred_region
      _
    $region5: #{musicbert_forward.5} parent=1 // pred_fallthru
      _
    // Predicated region
    $region6: #{musicbert_forward.5} parent=1 // pred_check
      _
    $region7: #{musicbert_forward.5} parent=1 // pred_check_branch
      %18 = sbr.rel (0) target = $region9
    $region8: #{musicbert_forward.5} parent=1 // pred_region
      _
    $region9: #{musicbert_forward.5} parent=1 // pred_fallthru
      _
    // Predicated region
    $region10: #{musicbert_forward.5} parent=1 // pred_check
      _
    $region11: #{musicbert_forward.5} parent=1 // pred_check_branch
      %20 = sbr.rel (0) target = $region13
    $region12: #{musicbert_forward.5} parent=1 // pred_region
      _
    $region13: #{musicbert_forward.5} parent=1 // pred_fallthru
      _
    // Predicated region
    $region14: #{musicbert_forward.5} parent=1 // pred_check
      _
    $region15: #{musicbert_forward.5} parent=1 // pred_check_branch
      %22 = sbr.rel (0) target = $region17
    $region16: #{musicbert_forward.5} parent=1 // pred_region
      _
    $region17: #{musicbert_forward.5} parent=1 // pred_fallthru
      _
    // Predicated region
    $region18: #{musicbert_forward.5} parent=1 // pred_check
      _
    $region19: #{musicbert_forward.5} parent=1 // pred_check_branch
      %24 = sbr.rel (0) target = $region21
    $region20: #{musicbert_forward.5} parent=1 // pred_region
      _
    $region21: #{musicbert_forward.5} parent=1 // pred_fallthru
      _
    // Predicated region
    $region22: #{musicbert_forward.5} parent=1 // pred_check
      _
    $region23: #{musicbert_forward.5} parent=1 // pred_check_branch
      %26 = sbr.rel (0) target = $region25
    $region24: #{musicbert_forward.5} parent=1 // pred_region
      _
    $region25: #{musicbert_forward.5} parent=1 // pred_fallthru
      _
    // Predicated region
    $region26: #{musicbert_forward.5} parent=1 // pred_check
      _
    $region27: #{musicbert_forward.5} parent=1 // pred_check_branch
      %28 = sbr.rel (0) target = $region29
    $region28: #{musicbert_forward.5} parent=1 // pred_region
      _
    $region29: #{musicbert_forward.5} parent=1 // pred_fallthru
      _
    // Predicated region
    $region30: #{musicbert_forward.5} parent=1 // pred_check
      _
    $region31: #{musicbert_forward.5} parent=1 // pred_check_branch
      %30 = sbr.rel (0) target = $region33
    $region32: #{musicbert_forward.5} parent=1 // pred_region
      _
    $region33: #{musicbert_forward.5} parent=1 // pred_fallthru
      _
    // Predicated region
    $region34: #{musicbert_forward.5} parent=1 // pred_check
      _
    $region35: #{musicbert_forward.5} parent=1 // pred_check_branch
      %32 = sbr.rel (0) target = $region37
    $region36: #{musicbert_forward.5} parent=1 // pred_region
      _
    $region37: #{musicbert_forward.5} parent=1 // pred_fallthru
      _
    %v33 = vld [vmem:[%s0] sm:$0xff]
    %v34 = vpack.c.bf16 %v33, %v33
    %v35 = vld [vmem:[%s1] sm:$0xf]
    %v36 = vld [vmem:[%s1 + $0x20] sm:$0xf]
    %v37 = vld [vmem:[%s1 + $0x40] sm:$0xf]
    %v38 = vld [vmem:[%s1 + $0x60] sm:$0xf]
    %v39 = vld [vmem:[%s1 + $0x80] sm:$0xf]
    %v40 = vld [vmem:[%s1 + $0xa0] sm:$0xf]
    %v41 = vld [vmem:[%s1 + $0xc0] sm:$0xf]
    %v42 = vld [vmem:[%s1 + $0xe0] sm:$0xf]
    %v43 = vld [vmem:[%s1 + $0x100] sm:$0xf]
    %v44 = vld [vmem:[%s1 + $0x120] sm:$0xf]
    %v45 = vld [vmem:[%s1 + $0x140] sm:$0xf]
    %v46 = vld [vmem:[%s1 + $0x160] sm:$0xf]
    %v47 = vld [vmem:[%s1 + $0x180] sm:$0xf]
    %v48 = vld [vmem:[%s1 + $0x1a0] sm:$0xf]
    %v49 = vld [vmem:[%s1 + $0x1c0] sm:$0xf]
    %v50 = vld [vmem:[%s1 + $0x1e0] sm:$0xf]
    %v51 = vld [vmem:[%s2] sm:$0x1]
    %v53 = vperm.slane %v51, 0
    %v71 = vunpack.c.l.b16 %v35
    %v72 = vunpack.c.l.b16 %v36
    %v73 = vunpack.c.l.b16 %v37
    %v74 = vunpack.c.l.b16 %v38
    %v75 = vunpack.c.l.b16 %v39
    %v76 = vunpack.c.l.b16 %v40
    %v77 = vunpack.c.l.b16 %v41
    %v78 = vunpack.c.l.b16 %v42
    %v79 = vunpack.c.l.b16 %v43
    %v80 = vunpack.c.l.b16 %v44
    %v81 = vunpack.c.l.b16 %v45
    %v82 = vunpack.c.l.b16 %v46
    %v83 = vunpack.c.l.b16 %v47
    %v84 = vunpack.c.l.b16 %v48
    %v85 = vunpack.c.l.b16 %v49
    %v86 = vunpack.c.l.b16 %v50
    %v87 = vpack.c.b16 %v72, %v71
    %v88 = vpack.c.b16 %v74, %v73
    %v89 = vpack.c.b16 %v76, %v75
    %v90 = vpack.c.b16 %v78, %v77
    %v91 = vpack.c.b16 %v80, %v79
    %v92 = vpack.c.b16 %v82, %v81
    %v93 = vpack.c.b16 %v84, %v83
    %v94 = vpack.c.b16 %v86, %v85
    %103 = vmatpush.bf16.msra.mxu0 %v94
    %104 = vmatpush.bf16.msra.mxu0 %v93
    %105 = vmatpush.bf16.msra.mxu0 %v92
    %106 = vmatpush.bf16.msra.mxu0 %v91
    %107 = vmatpush.bf16.msra.mxu0 %v90
    %108 = vmatpush.bf16.msra.mxu0 %v89
    %109 = vmatpush.bf16.msra.mxu0 %v88
    %110 = vmatpush.bf16.msra.mxu0 %v87
    %111 = vmatmul.bf16.gmra.mxu0 %v34
    %v112 = vpop.f32.mrf.mxu0
    %v113 = vadd.f32 %v53, %v112
    %v114 = vpop.f32.mrf.mxu0
    %115 = vdwg.mxu0
    %v116 = vpack.c.bf16 %v113, %v113
    %v117 = vld [vmem:[%s3] sm:$0xf]
    %v118 = vld [vmem:[%s3 + $0x4] sm:$0xf]
    %v119 = vld [vmem:[%s3 + $0x8] sm:$0xf]
    %v120 = vld [vmem:[%s3 + $0xc] sm:$0xf]
    %v121 = vld [vmem:[%s3 + $0x10] sm:$0xf]
    %v122 = vld [vmem:[%s3 + $0x14] sm:$0xf]
    %v123 = vld [vmem:[%s3 + $0x18] sm:$0xf]
    %v124 = vld [vmem:[%s3 + $0x1c] sm:$0xf]
    %v125 = vld [vmem:[%s3 + $0x20] sm:$0xf]
    %v126 = vld [vmem:[%s3 + $0x24] sm:$0xf]
    %v127 = vld [vmem:[%s3 + $0x28] sm:$0xf]
    %v128 = vld [vmem:[%s3 + $0x2c] sm:$0xf]
    %v129 = vld [vmem:[%s3 + $0x30] sm:$0xf]
    %v130 = vld [vmem:[%s3 + $0x34] sm:$0xf]
    %v131 = vld [vmem:[%s3 + $0x38] sm:$0xf]
    %v132 = vld [vmem:[%s3 + $0x3c] sm:$0xf]
    %v133 = vld [vmem:[%s4] sm:$0x1]
    %v135 = vperm.slane %v133, 0
    %v153 = vunpack.c.l.b16 %v117
    %v154 = vunpack.c.l.b16 %v118
    %v155 = vunpack.c.l.b16 %v119
    %v156 = vunpack.c.l.b16 %v120
    %v157 = vunpack.c.l.b16 %v121
    %v158 = vunpack.c.l.b16 %v122
    %v159 = vunpack.c.l.b16 %v123
    %v160 = vunpack.c.l.b16 %v124
    %v161 = vunpack.c.l.b16 %v125
    %v162 = vunpack.c.l.b16 %v126
    %v163 = vunpack.c.l.b16 %v127
    %v164 = vunpack.c.l.b16 %v128
    %v165 = vunpack.c.l.b16 %v129
    %v166 = vunpack.c.l.b16 %v130
    %v167 = vunpack.c.l.b16 %v131
    %v168 = vunpack.c.l.b16 %v132
    %v169 = vpack.c.b16 %v154, %v153
    %v170 = vpack.c.b16 %v156, %v155
    %v171 = vpack.c.b16 %v158, %v157
    %v172 = vpack.c.b16 %v160, %v159
    %v173 = vpack.c.b16 %v162, %v161
    %v174 = vpack.c.b16 %v164, %v163
    %v175 = vpack.c.b16 %v166, %v165
    %v176 = vpack.c.b16 %v168, %v167
    %185 = vmatpush.bf16.msra.mxu0 %v176
    %186 = vmatpush.bf16.msra.mxu0 %v175
    %187 = vmatpush.bf16.msra.mxu0 %v174
    %188 = vmatpush.bf16.msra.mxu0 %v173
    %189 = vmatpush.bf16.msra.mxu0 %v172
    %190 = vmatpush.bf16.msra.mxu0 %v171
    %191 = vmatpush.bf16.msra.mxu0 %v170
    %192 = vmatpush.bf16.msra.mxu0 %v169
    %193 = vmatmul.bf16.gmra.mxu0 %v116
    %v194 = vpop.f32.mrf.mxu0
    %v195 = vadd.f32 %v135, %v194
    %v196 = vpop.f32.mrf.mxu0
    %197 = vdwg.mxu0
    %v198 = vmul.f32 %v195, 0.5
    %v199 = vmul.f32 %v195, 0.044715
    %v200 = vmul.f32 %v199, %v195
    %v201 = vmul.f32 %v200, %v195
    %v202 = vadd.f32 %v195, %v201
    %v203 = vmul.f32 %v202, 0.7978846
    %v204 = vtanh.pop %v203
    %v205 = vadd.f32 %v204, 1.0
    %v206 = vmul.f32 %v198, %v205
    %v207 = vld [vmem:[%s5] sm:$0x1]
    %v208 = vld [vmem:[%s6] sm:$0x1]
    %209 = vadd.xlane.f32.xlu0 %v206
    %v210 = vpop.xlane.xlu0 %209
    %v211 = vrcp.pop 128.0
    %v212 = vmul.f32 128.0, %v211
    %v213 = vsub.f32 1.0, %v212
    %v214 = vmul.f32 %v211, %v213
    %v215 = vadd.f32 %v211, %v214
    %vm216 = vweird.f32 %v211
    %v217 = vsel %vm216, %v211, %v215
    %v218 = vmul.f32 %v210, %v217
    %v219 = vsub.f32 %v206, %v218
    %v220 = vmul.f32 %v219, %v219
    %221 = vadd.xlane.f32.xlu0 %v220
    %v222 = vpop.xlane.xlu0 %221
    %v223 = vmul.f32 %v222, %v217
    %v224 = vadd.f32 %v223, 1e-05
    %v225 = vrsqrt.pop %v224
    %v226 = vmul.f32 %v225, %v224
    %v227 = vmul.f32 %v226, %v225
    %v228 = vmul.f32 0.5, %v227
    %v229 = vsub.f32 1.5, %v228
    %v230 = vmul.f32 %v225, %v229
    %vm231 = vweird.f32 %v224
    %vm232 = vweird.f32 %v225
    %vm233 = vmor %vm231, %vm232
    %v234 = vsel %vm233, %v225, %v230
    %v235 = vmul.f32 %v219, %v234
    %v237 = vperm.slane %v207, 0
    %v239 = vmul.f32 %v235, %v237
    %v241 = vperm.slane %v208, 0
    %v243 = vadd.f32 %v239, %v241
    %v244 = vpack.c.bf16 %v243, %v243
    %v245 = vld [vmem:[%s7] sm:$0xf]
    %v246 = vld [vmem:[%s7 + $0x4] sm:$0xf]
    %v247 = vld [vmem:[%s7 + $0x8] sm:$0xf]
    %v248 = vld [vmem:[%s7 + $0xc] sm:$0xf]
    %v249 = vld [vmem:[%s7 + $0x10] sm:$0xf]
    %v250 = vld [vmem:[%s7 + $0x14] sm:$0xf]
    %v251 = vld [vmem:[%s7 + $0x18] sm:$0xf]
    %v252 = vld [vmem:[%s7 + $0x1c] sm:$0xf]
    %v253 = vld [vmem:[%s7 + $0x20] sm:$0xf]
    %v254 = vld [vmem:[%s7 + $0x24] sm:$0xf]
    %v255 = vld [vmem:[%s7 + $0x28] sm:$0xf]
    %v256 = vld [vmem:[%s7 + $0x2c] sm:$0xf]
    %v257 = vld [vmem:[%s7 + $0x30] sm:$0xf]
    %v258 = vld [vmem:[%s7 + $0x34] sm:$0xf]
    %v259 = vld [vmem:[%s7 + $0x38] sm:$0xf]
    %v260 = vld [vmem:[%s7 + $0x3c] sm:$0xf]
    %v261 = vld [vmem:[%s8] sm:$0x1]
    %v263 = vperm.slane %v261, 0
    %v281 = vunpack.c.l.b16 %v245
    %v282 = vunpack.c.l.b16 %v246
    %v283 = vunpack.c.l.b16 %v247
    %v284 = vunpack.c.l.b16 %v248
    %v285 = vunpack.c.l.b16 %v249
    %v286 = vunpack.c.l.b16 %v250
    %v287 = vunpack.c.l.b16 %v251
    %v288 = vunpack.c.l.b16 %v252
    %v289 = vunpack.c.l.b16 %v253
    %v290 = vunpack.c.l.b16 %v254
    %v291 = vunpack.c.l.b16 %v255
    %v292 = vunpack.c.l.b16 %v256
    %v293 = vunpack.c.l.b16 %v257
    %v294 = vunpack.c.l.b16 %v258
    %v295 = vunpack.c.l.b16 %v259
    %v296 = vunpack.c.l.b16 %v260
    %v297 = vpack.c.b16 %v282, %v281
    %v298 = vpack.c.b16 %v284, %v283
    %v299 = vpack.c.b16 %v286, %v285
    %v300 = vpack.c.b16 %v288, %v287
    %v301 = vpack.c.b16 %v290, %v289
    %v302 = vpack.c.b16 %v292, %v291
    %v303 = vpack.c.b16 %v294, %v293
    %v304 = vpack.c.b16 %v296, %v295
    %313 = vmatpush.bf16.msra.mxu0 %v304
    %314 = vmatpush.bf16.msra.mxu0 %v303
    %315 = vmatpush.bf16.msra.mxu0 %v302
    %316 = vmatpush.bf16.msra.mxu0 %v301
    %317 = vmatpush.bf16.msra.mxu0 %v300
    %318 = vmatpush.bf16.msra.mxu0 %v299
    %319 = vmatpush.bf16.msra.mxu0 %v298
    %320 = vmatpush.bf16.msra.mxu0 %v297
    %321 = vmatmul.bf16.gmra.mxu0 %v244
    %v322 = vpop.f32.mrf.mxu0
    %v323 = vadd.f32 %v263, %v322
    %v324 = vpop.f32.mrf.mxu0
    %325 = vdwg.mxu0
    %v327 = vrot.slane %v323, 1
    %v328 = vrot.slane %v323, 2
    %v329 = vrot.slane %v323, 3
    %v330 = vrot.slane %v323, 4
    %v331 = vrot.slane %v323, 5
    %v332 = vrot.slane %v323, 6
    %v333 = vrot.slane %v323, 7
    %341 = vst [vmem:[#allocation2] sm:$0x1] %v323
    %342 = vst [vmem:[#allocation2 + $0x8] sm:$0x1] %v327
    %343 = vst [vmem:[#allocation2 + $0x10] sm:$0x1] %v328
    %344 = vst [vmem:[#allocation2 + $0x18] sm:$0x1] %v329
    %345 = vst [vmem:[#allocation2 + $0x20] sm:$0x1] %v330
    %346 = vst [vmem:[#allocation2 + $0x28] sm:$0x1] %v331
    %347 = vst [vmem:[#allocation2 + $0x30] sm:$0x1] %v332
    %348 = vst [vmem:[#allocation2 + $0x38] sm:$0x1] %v333
    %v349 = vld [vmem:[%s1 + $0x4] sm:$0xf]
    %v350 = vld [vmem:[%s1 + $0x24] sm:$0xf]
    %v351 = vld [vmem:[%s1 + $0x44] sm:$0xf]
    %v352 = vld [vmem:[%s1 + $0x64] sm:$0xf]
    %v353 = vld [vmem:[%s1 + $0x84] sm:$0xf]
    %v354 = vld [vmem:[%s1 + $0xa4] sm:$0xf]
    %v355 = vld [vmem:[%s1 + $0xc4] sm:$0xf]
    %v356 = vld [vmem:[%s1 + $0xe4] sm:$0xf]
    %v357 = vld [vmem:[%s1 + $0x104] sm:$0xf]
    %v358 = vld [vmem:[%s1 + $0x124] sm:$0xf]
    %v359 = vld [vmem:[%s1 + $0x144] sm:$0xf]
    %v360 = vld [vmem:[%s1 + $0x164] sm:$0xf]
    %v361 = vld [vmem:[%s1 + $0x184] sm:$0xf]
    %v362 = vld [vmem:[%s1 + $0x1a4] sm:$0xf]
    %v363 = vld [vmem:[%s1 + $0x1c4] sm:$0xf]
    %v364 = vld [vmem:[%s1 + $0x1e4] sm:$0xf]
    %v365 = vld [vmem:[%s2 + $0x1] sm:$0x1]
    %v367 = vperm.slane %v365, 0
    %v385 = vunpack.c.l.b16 %v349
    %v386 = vunpack.c.l.b16 %v350
    %v387 = vunpack.c.l.b16 %v351
    %v388 = vunpack.c.l.b16 %v352
    %v389 = vunpack.c.l.b16 %v353
    %v390 = vunpack.c.l.b16 %v354
    %v391 = vunpack.c.l.b16 %v355
    %v392 = vunpack.c.l.b16 %v356
    %v393 = vunpack.c.l.b16 %v357
    %v394 = vunpack.c.l.b16 %v358
    %v395 = vunpack.c.l.b16 %v359
    %v396 = vunpack.c.l.b16 %v360
    %v397 = vunpack.c.l.b16 %v361
    %v398 = vunpack.c.l.b16 %v362
    %v399 = vunpack.c.l.b16 %v363
    %v400 = vunpack.c.l.b16 %v364
    %v401 = vpack.c.b16 %v386, %v385
    %v402 = vpack.c.b16 %v388, %v387
    %v403 = vpack.c.b16 %v390, %v389
    %v404 = vpack.c.b16 %v392, %v391
    %v405 = vpack.c.b16 %v394, %v393
    %v406 = vpack.c.b16 %v396, %v395
    %v407 = vpack.c.b16 %v398, %v397
    %v408 = vpack.c.b16 %v400, %v399
    %417 = vmatpush.bf16.msra.mxu0 %v408
    %418 = vmatpush.bf16.msra.mxu0 %v407
    %419 = vmatpush.bf16.msra.mxu0 %v406
    %420 = vmatpush.bf16.msra.mxu0 %v405
    %421 = vmatpush.bf16.msra.mxu0 %v404
    %422 = vmatpush.bf16.msra.mxu0 %v403
    %423 = vmatpush.bf16.msra.mxu0 %v402
    %424 = vmatpush.bf16.msra.mxu0 %v401
    %425 = vmatmul.bf16.gmra.mxu0 %v34
    %v426 = vpop.f32.mrf.mxu0
    %v427 = vadd.f32 %v367, %v426
    %v428 = vpop.f32.mrf.mxu0
    %429 = vdwg.mxu0
    %v430 = vpack.c.bf16 %v427, %v427
    %v431 = vld [vmem:[%s3] sm:$0xf]
    %v432 = vld [vmem:[%s3 + $0x4] sm:$0xf]
    %v433 = vld [vmem:[%s3 + $0x8] sm:$0xf]
    %v434 = vld [vmem:[%s3 + $0xc] sm:$0xf]
    %v435 = vld [vmem:[%s3 + $0x10] sm:$0xf]
    %v436 = vld [vmem:[%s3 + $0x14] sm:$0xf]
    %v437 = vld [vmem:[%s3 + $0x18] sm:$0xf]
    %v438 = vld [vmem:[%s3 + $0x1c] sm:$0xf]
    %v439 = vld [vmem:[%s3 + $0x20] sm:$0xf]
    %v440 = vld [vmem:[%s3 + $0x24] sm:$0xf]
    %v441 = vld [vmem:[%s3 + $0x28] sm:$0xf]
    %v442 = vld [vmem:[%s3 + $0x2c] sm:$0xf]
    %v443 = vld [vmem:[%s3 + $0x30] sm:$0xf]
    %v444 = vld [vmem:[%s3 + $0x34] sm:$0xf]
    %v445 = vld [vmem:[%s3 + $0x38] sm:$0xf]
    %v446 = vld [vmem:[%s3 + $0x3c] sm:$0xf]
    %v447 = vld [vmem:[%s4] sm:$0x1]
    %v449 = vperm.slane %v447, 0
    %v467 = vunpack.c.l.b16 %v431
    %v468 = vunpack.c.l.b16 %v432
    %v469 = vunpack.c.l.b16 %v433
    %v470 = vunpack.c.l.b16 %v434
    %v471 = vunpack.c.l.b16 %v435
    %v472 = vunpack.c.l.b16 %v436
    %v473 = vunpack.c.l.b16 %v437
    %v474 = vunpack.c.l.b16 %v438
    %v475 = vunpack.c.l.b16 %v439
    %v476 = vunpack.c.l.b16 %v440
    %v477 = vunpack.c.l.b16 %v441
    %v478 = vunpack.c.l.b16 %v442
    %v479 = vunpack.c.l.b16 %v443
    %v480 = vunpack.c.l.b16 %v444
    %v481 = vunpack.c.l.b16 %v445
    %v482 = vunpack.c.l.b16 %v446
    %v483 = vpack.c.b16 %v468, %v467
    %v484 = vpack.c.b16 %v470, %v469
    %v485 = vpack.c.b16 %v472, %v471
    %v486 = vpack.c.b16 %v474, %v473
    %v487 = vpack.c.b16 %v476, %v475
    %v488 = vpack.c.b16 %v478, %v477
    %v489 = vpack.c.b16 %v480, %v479
    %v490 = vpack.c.b16 %v482, %v481
    %499 = vmatpush.bf16.msra.mxu0 %v490
    %500 = vmatpush.bf16.msra.mxu0 %v489
    %501 = vmatpush.bf16.msra.mxu0 %v488
    %502 = vmatpush.bf16.msra.mxu0 %v487
    %503 = vmatpush.bf16.msra.mxu0 %v486
    %504 = vmatpush.bf16.msra.mxu0 %v485
    %505 = vmatpush.bf16.msra.mxu0 %v484
    %506 = vmatpush.bf16.msra.mxu0 %v483
    %507 = vmatmul.bf16.gmra.mxu0 %v430
    %v508 = vpop.f32.mrf.mxu0
    %v509 = vadd.f32 %v449, %v508
    %v510 = vpop.f32.mrf.mxu0
    %511 = vdwg.mxu0
    %v512 = vmul.f32 %v509, 0.5
    %v513 = vmul.f32 %v509, 0.044715
    %v514 = vmul.f32 %v513, %v509
    %v515 = vmul.f32 %v514, %v509
    %v516 = vadd.f32 %v509, %v515
    %v517 = vmul.f32 %v516, 0.7978846
    %v518 = vtanh.pop %v517
    %v519 = vadd.f32 %v518, 1.0
    %v520 = vmul.f32 %v512, %v519
    %v521 = vld [vmem:[%s5] sm:$0x1]
    %v522 = vld [vmem:[%s6] sm:$0x1]
    %523 = vadd.xlane.f32.xlu0 %v520
    %v524 = vpop.xlane.xlu0 %523
    %v525 = vmul.f32 %v524, %v217
    %v526 = vsub.f32 %v520, %v525
    %v527 = vmul.f32 %v526, %v526
    %528 = vadd.xlane.f32.xlu0 %v527
    %v529 = vpop.xlane.xlu0 %528
    %v530 = vmul.f32 %v529, %v217
    %v531 = vadd.f32 %v530, 1e-05
    %v532 = vrsqrt.pop %v531
    %v533 = vmul.f32 %v532, %v531
    %v534 = vmul.f32 %v533, %v532
    %v535 = vmul.f32 0.5, %v534
    %v536 = vsub.f32 1.5, %v535
    %v537 = vmul.f32 %v532, %v536
    %vm538 = vweird.f32 %v531
    %vm539 = vweird.f32 %v532
    %vm540 = vmor %vm538, %vm539
    %v541 = vsel %vm540, %v532, %v537
    %v542 = vmul.f32 %v526, %v541
    %v544 = vperm.slane %v521, 0
    %v546 = vmul.f32 %v542, %v544
    %v548 = vperm.slane %v522, 0
    %v550 = vadd.f32 %v546, %v548
    %v551 = vpack.c.bf16 %v550, %v550
    %v552 = vld [vmem:[%s7] sm:$0xf]
    %v553 = vld [vmem:[%s7 + $0x4] sm:$0xf]
    %v554 = vld [vmem:[%s7 + $0x8] sm:$0xf]
    %v555 = vld [vmem:[%s7 + $0xc] sm:$0xf]
    %v556 = vld [vmem:[%s7 + $0x10] sm:$0xf]
    %v557 = vld [vmem:[%s7 + $0x14] sm:$0xf]
    %v558 = vld [vmem:[%s7 + $0x18] sm:$0xf]
    %v559 = vld [vmem:[%s7 + $0x1c] sm:$0xf]
    %v560 = vld [vmem:[%s7 + $0x20] sm:$0xf]
    %v561 = vld [vmem:[%s7 + $0x24] sm:$0xf]
    %v562 = vld [vmem:[%s7 + $0x28] sm:$0xf]
    %v563 = vld [vmem:[%s7 + $0x2c] sm:$0xf]
    %v564 = vld [vmem:[%s7 + $0x30] sm:$0xf]
    %v565 = vld [vmem:[%s7 + $0x34] sm:$0xf]
    %v566 = vld [vmem:[%s7 + $0x38] sm:$0xf]
    %v567 = vld [vmem:[%s7 + $0x3c] sm:$0xf]
    %v568 = vld [vmem:[%s8] sm:$0x1]
    %v570 = vperm.slane %v568, 0
    %v588 = vunpack.c.l.b16 %v552
    %v589 = vunpack.c.l.b16 %v553
    %v590 = vunpack.c.l.b16 %v554
    %v591 = vunpack.c.l.b16 %v555
    %v592 = vunpack.c.l.b16 %v556
    %v593 = vunpack.c.l.b16 %v557
    %v594 = vunpack.c.l.b16 %v558
    %v595 = vunpack.c.l.b16 %v559
    %v596 = vunpack.c.l.b16 %v560
    %v597 = vunpack.c.l.b16 %v561
    %v598 = vunpack.c.l.b16 %v562
    %v599 = vunpack.c.l.b16 %v563
    %v600 = vunpack.c.l.b16 %v564
    %v601 = vunpack.c.l.b16 %v565
    %v602 = vunpack.c.l.b16 %v566
    %v603 = vunpack.c.l.b16 %v567
    %v604 = vpack.c.b16 %v589, %v588
    %v605 = vpack.c.b16 %v591, %v590
    %v606 = vpack.c.b16 %v593, %v592
    %v607 = vpack.c.b16 %v595, %v594
    %v608 = vpack.c.b16 %v597, %v596
    %v609 = vpack.c.b16 %v599, %v598
    %v610 = vpack.c.b16 %v601, %v600
    %v611 = vpack.c.b16 %v603, %v602
    %620 = vmatpush.bf16.msra.mxu0 %v611
    %621 = vmatpush.bf16.msra.mxu0 %v610
    %622 = vmatpush.bf16.msra.mxu0 %v609
    %623 = vmatpush.bf16.msra.mxu0 %v608
    %624 = vmatpush.bf16.msra.mxu0 %v607
    %625 = vmatpush.bf16.msra.mxu0 %v606
    %626 = vmatpush.bf16.msra.mxu0 %v605
    %627 = vmatpush.bf16.msra.mxu0 %v604
    %628 = vmatmul.bf16.gmra.mxu0 %v551
    %v629 = vpop.f32.mrf.mxu0
    %v630 = vadd.f32 %v570, %v629
    %v631 = vpop.f32.mrf.mxu0
    %632 = vdwg.mxu0
    %v634 = vrot.slane %v630, 1
    %v635 = vrot.slane %v630, 2
    %v636 = vrot.slane %v630, 3
    %v637 = vrot.slane %v630, 4
    %v638 = vrot.slane %v630, 5
    %v639 = vrot.slane %v630, 6
    %v640 = vrot.slane %v630, 7
    %648 = vst [vmem:[#allocation2 + $0x1] sm:$0x1] %v630
    %649 = vst [vmem:[#allocation2 + $0x9] sm:$0x1] %v634
    %650 = vst [vmem:[#allocation2 + $0x11] sm:$0x1] %v635
    %651 = vst [vmem:[#allocation2 + $0x19] sm:$0x1] %v636
    %652 = vst [vmem:[#allocation2 + $0x21] sm:$0x1] %v637
    %653 = vst [vmem:[#allocation2 + $0x29] sm:$0x1] %v638
    %654 = vst [vmem:[#allocation2 + $0x31] sm:$0x1] %v639
    %655 = vst [vmem:[#allocation2 + $0x39] sm:$0x1] %v640
    %v656 = vld [vmem:[%s1 + $0x8] sm:$0xf]
    %v657 = vld [vmem:[%s1 + $0x28] sm:$0xf]
    %v658 = vld [vmem:[%s1 + $0x48] sm:$0xf]
    %v659 = vld [vmem:[%s1 + $0x68] sm:$0xf]
    %v660 = vld [vmem:[%s1 + $0x88] sm:$0xf]
    %v661 = vld [vmem:[%s1 + $0xa8] sm:$0xf]
    %v662 = vld [vmem:[%s1 + $0xc8] sm:$0xf]
    %v663 = vld [vmem:[%s1 + $0xe8] sm:$0xf]
    %v664 = vld [vmem:[%s1 + $0x108] sm:$0xf]
    %v665 = vld [vmem:[%s1 + $0x128] sm:$0xf]
    %v666 = vld [vmem:[%s1 + $0x148] sm:$0xf]
    %v667 = vld [vmem:[%s1 + $0x168] sm:$0xf]
    %v668 = vld [vmem:[%s1 + $0x188] sm:$0xf]
    %v669 = vld [vmem:[%s1 + $0x1a8] sm:$0xf]
    %v670 = vld [vmem:[%s1 + $0x1c8] sm:$0xf]
    %v671 = vld [vmem:[%s1 + $0x1e8] sm:$0xf]
    %v672 = vld [vmem:[%s2 + $0x2] sm:$0x1]
    %v674 = vperm.slane %v672, 0
    %v692 = vunpack.c.l.b16 %v656
    %v693 = vunpack.c.l.b16 %v657
    %v694 = vunpack.c.l.b16 %v658
    %v695 = vunpack.c.l.b16 %v659
    %v696 = vunpack.c.l.b16 %v660
    %v697 = vunpack.c.l.b16 %v661
    %v698 = vunpack.c.l.b16 %v662
    %v699 = vunpack.c.l.b16 %v663
    %v700 = vunpack.c.l.b16 %v664
    %v701 = vunpack.c.l.b16 %v665
    %v702 = vunpack.c.l.b16 %v666
    %v703 = vunpack.c.l.b16 %v667
    %v704 = vunpack.c.l.b16 %v668
    %v705 = vunpack.c.l.b16 %v669
    %v706 = vunpack.c.l.b16 %v670
    %v707 = vunpack.c.l.b16 %v671
    %v708 = vpack.c.b16 %v693, %v692
    %v709 = vpack.c.b16 %v695, %v694
    %v710 = vpack.c.b16 %v697, %v696
    %v711 = vpack.c.b16 %v699, %v698
    %v712 = vpack.c.b16 %v701, %v700
    %v713 = vpack.c.b16 %v703, %v702
    %v714 = vpack.c.b16 %v705, %v704
    %v715 = vpack.c.b16 %v707, %v706
    %724 = vmatpush.bf16.msra.mxu0 %v715
    %725 = vmatpush.bf16.msra.mxu0 %v714
    %726 = vmatpush.bf16.msra.mxu0 %v713
    %727 = vmatpush.bf16.msra.mxu0 %v712
    %728 = vmatpush.bf16.msra.mxu0 %v711
    %729 = vmatpush.bf16.msra.mxu0 %v710
    %730 = vmatpush.bf16.msra.mxu0 %v709
    %731 = vmatpush.bf16.msra.mxu0 %v708
    %732 = vmatmul.bf16.gmra.mxu0 %v34
    %v733 = vpop.f32.mrf.mxu0
    %v734 = vadd.f32 %v674, %v733
    %v735 = vpop.f32.mrf.mxu0
    %736 = vdwg.mxu0
    %v737 = vpack.c.bf16 %v734, %v734
    %v738 = vld [vmem:[%s3] sm:$0xf]
    %v739 = vld [vmem:[%s3 + $0x4] sm:$0xf]
    %v740 = vld [vmem:[%s3 + $0x8] sm:$0xf]
    %v741 = vld [vmem:[%s3 + $0xc] sm:$0xf]
    %v742 = vld [vmem:[%s3 + $0x10] sm:$0xf]
    %v743 = vld [vmem:[%s3 + $0x14] sm:$0xf]
    %v744 = vld [vmem:[%s3 + $0x18] sm:$0xf]
    %v745 = vld [vmem:[%s3 + $0x1c] sm:$0xf]
    %v746 = vld [vmem:[%s3 + $0x20] sm:$0xf]
    %v747 = vld [vmem:[%s3 + $0x24] sm:$0xf]
    %v748 = vld [vmem:[%s3 + $0x28] sm:$0xf]
    %v749 = vld [vmem:[%s3 + $0x2c] sm:$0xf]
    %v750 = vld [vmem:[%s3 + $0x30] sm:$0xf]
    %v751 = vld [vmem:[%s3 + $0x34] sm:$0xf]
    %v752 = vld [vmem:[%s3 + $0x38] sm:$0xf]
    %v753 = vld [vmem:[%s3 + $0x3c] sm:$0xf]
    %v754 = vld [vmem:[%s4] sm:$0x1]
    %v756 = vperm.slane %v754, 0
    %v774 = vunpack.c.l.b16 %v738
    %v775 = vunpack.c.l.b16 %v739
    %v776 = vunpack.c.l.b16 %v740
    %v777 = vunpack.c.l.b16 %v741
    %v778 = vunpack.c.l.b16 %v742
    %v779 = vunpack.c.l.b16 %v743
    %v780 = vunpack.c.l.b16 %v744
    %v781 = vunpack.c.l.b16 %v745
    %v782 = vunpack.c.l.b16 %v746
    %v783 = vunpack.c.l.b16 %v747
    %v784 = vunpack.c.l.b16 %v748
    %v785 = vunpack.c.l.b16 %v749
    %v786 = vunpack.c.l.b16 %v750
    %v787 = vunpack.c.l.b16 %v751
    %v788 = vunpack.c.l.b16 %v752
    %v789 = vunpack.c.l.b16 %v753
    %v790 = vpack.c.b16 %v775, %v774
    %v791 = vpack.c.b16 %v777, %v776
    %v792 = vpack.c.b16 %v779, %v778
    %v793 = vpack.c.b16 %v781, %v780
    %v794 = vpack.c.b16 %v783, %v782
    %v795 = vpack.c.b16 %v785, %v784
    %v796 = vpack.c.b16 %v787, %v786
    %v797 = vpack.c.b16 %v789, %v788
    %806 = vmatpush.bf16.msra.mxu0 %v797
    %807 = vmatpush.bf16.msra.mxu0 %v796
    %808 = vmatpush.bf16.msra.mxu0 %v795
    %809 = vmatpush.bf16.msra.mxu0 %v794
    %810 = vmatpush.bf16.msra.mxu0 %v793
    %811 = vmatpush.bf16.msra.mxu0 %v792
    %812 = vmatpush.bf16.msra.mxu0 %v791
    %813 = vmatpush.bf16.msra.mxu0 %v790
    %814 = vmatmul.bf16.gmra.mxu0 %v737
    %v815 = vpop.f32.mrf.mxu0
    %v816 = vadd.f32 %v756, %v815
    %v817 = vpop.f32.mrf.mxu0
    %818 = vdwg.mxu0
    %v819 = vmul.f32 %v816, 0.5
    %v820 = vmul.f32 %v816, 0.044715
    %v821 = vmul.f32 %v820, %v816
    %v822 = vmul.f32 %v821, %v816
    %v823 = vadd.f32 %v816, %v822
    %v824 = vmul.f32 %v823, 0.7978846
    %v825 = vtanh.pop %v824
    %v826 = vadd.f32 %v825, 1.0
    %v827 = vmul.f32 %v819, %v826
    %v828 = vld [vmem:[%s5] sm:$0x1]
    %v829 = vld [vmem:[%s6] sm:$0x1]
    %830 = vadd.xlane.f32.xlu0 %v827
    %v831 = vpop.xlane.xlu0 %830
    %v832 = vmul.f32 %v831, %v217
    %v833 = vsub.f32 %v827, %v832
    %v834 = vmul.f32 %v833, %v833
    %835 = vadd.xlane.f32.xlu0 %v834
    %v836 = vpop.xlane.xlu0 %835
    %v837 = vmul.f32 %v836, %v217
    %v838 = vadd.f32 %v837, 1e-05
    %v839 = vrsqrt.pop %v838
    %v840 = vmul.f32 %v839, %v838
    %v841 = vmul.f32 %v840, %v839
    %v842 = vmul.f32 0.5, %v841
    %v843 = vsub.f32 1.5, %v842
    %v844 = vmul.f32 %v839, %v843
    %vm845 = vweird.f32 %v838
    %vm846 = vweird.f32 %v839
    %vm847 = vmor %vm845, %vm846
    %v848 = vsel %vm847, %v839, %v844
    %v849 = vmul.f32 %v833, %v848
    %v851 = vperm.slane %v828, 0
    %v853 = vmul.f32 %v849, %v851
    %v855 = vperm.slane %v829, 0
    %v857 = vadd.f32 %v853, %v855
    %v858 = vpack.c.bf16 %v857, %v857
    %v859 = vld [vmem:[%s7] sm:$0xf]
    %v860 = vld [vmem:[%s7 + $0x4] sm:$0xf]
    %v861 = vld [vmem:[%s7 + $0x8] sm:$0xf]
    %v862 = vld [vmem:[%s7 + $0xc] sm:$0xf]
    %v863 = vld [vmem:[%s7 + $0x10] sm:$0xf]
    %v864 = vld [vmem:[%s7 + $0x14] sm:$0xf]
    %v865 = vld [vmem:[%s7 + $0x18] sm:$0xf]
    %v866 = vld [vmem:[%s7 + $0x1c] sm:$0xf]
    %v867 = vld [vmem:[%s7 + $0x20] sm:$0xf]
    %v868 = vld [vmem:[%s7 + $0x24] sm:$0xf]
    %v869 = vld [vmem:[%s7 + $0x28] sm:$0xf]
    %v870 = vld [vmem:[%s7 + $0x2c] sm:$0xf]
    %v871 = vld [vmem:[%s7 + $0x30] sm:$0xf]
    %v872 = vld [vmem:[%s7 + $0x34] sm:$0xf]
    %v873 = vld [vmem:[%s7 + $0x38] sm:$0xf]
    %v874 = vld [vmem:[%s7 + $0x3c] sm:$0xf]
    %v875 = vld [vmem:[%s8] sm:$0x1]
    %v877 = vperm.slane %v875, 0
    %v895 = vunpack.c.l.b16 %v859
    %v896 = vunpack.c.l.b16 %v860
    %v897 = vunpack.c.l.b16 %v861
    %v898 = vunpack.c.l.b16 %v862
    %v899 = vunpack.c.l.b16 %v863
    %v900 = vunpack.c.l.b16 %v864
    %v901 = vunpack.c.l.b16 %v865
    %v902 = vunpack.c.l.b16 %v866
    %v903 = vunpack.c.l.b16 %v867
    %v904 = vunpack.c.l.b16 %v868
    %v905 = vunpack.c.l.b16 %v869
    %v906 = vunpack.c.l.b16 %v870
    %v907 = vunpack.c.l.b16 %v871
    %v908 = vunpack.c.l.b16 %v872
    %v909 = vunpack.c.l.b16 %v873
    %v910 = vunpack.c.l.b16 %v874
    %v911 = vpack.c.b16 %v896, %v895
    %v912 = vpack.c.b16 %v898, %v897
    %v913 = vpack.c.b16 %v900, %v899
    %v914 = vpack.c.b16 %v902, %v901
    %v915 = vpack.c.b16 %v904, %v903
    %v916 = vpack.c.b16 %v906, %v905
    %v917 = vpack.c.b16 %v908, %v907
    %v918 = vpack.c.b16 %v910, %v909
    %927 = vmatpush.bf16.msra.mxu0 %v918
    %928 = vmatpush.bf16.msra.mxu0 %v917
    %929 = vmatpush.bf16.msra.mxu0 %v916
    %930 = vmatpush.bf16.msra.mxu0 %v915
    %931 = vmatpush.bf16.msra.mxu0 %v914
    %932 = vmatpush.bf16.msra.mxu0 %v913
    %933 = vmatpush.bf16.msra.mxu0 %v912
    %934 = vmatpush.bf16.msra.mxu0 %v911
    %935 = vmatmul.bf16.gmra.mxu0 %v858
    %v936 = vpop.f32.mrf.mxu0
    %v937 = vadd.f32 %v877, %v936
    %v938 = vpop.f32.mrf.mxu0
    %939 = vdwg.mxu0
    %v941 = vrot.slane %v937, 1
    %v942 = vrot.slane %v937, 2
    %v943 = vrot.slane %v937, 3
    %v944 = vrot.slane %v937, 4
    %v945 = vrot.slane %v937, 5
    %v946 = vrot.slane %v937, 6
    %v947 = vrot.slane %v937, 7
    %955 = vst [vmem:[#allocation2 + $0x2] sm:$0x1] %v937
    %956 = vst [vmem:[#allocation2 + $0xa] sm:$0x1] %v941
    %957 = vst [vmem:[#allocation2 + $0x12] sm:$0x1] %v942
    %958 = vst [vmem:[#allocation2 + $0x1a] sm:$0x1] %v943
    %959 = vst [vmem:[#allocation2 + $0x22] sm:$0x1] %v944
    %960 = vst [vmem:[#allocation2 + $0x2a] sm:$0x1] %v945
    %961 = vst [vmem:[#allocation2 + $0x32] sm:$0x1] %v946
    %962 = vst [vmem:[#allocation2 + $0x3a] sm:$0x1] %v947
    %v963 = vld [vmem:[%s1 + $0xc] sm:$0xf]
    %v964 = vld [vmem:[%s1 + $0x2c] sm:$0xf]
    %v965 = vld [vmem:[%s1 + $0x4c] sm:$0xf]
    %v966 = vld [vmem:[%s1 + $0x6c] sm:$0xf]
    %v967 = vld [vmem:[%s1 + $0x8c] sm:$0xf]
    %v968 = vld [vmem:[%s1 + $0xac] sm:$0xf]
    %v969 = vld [vmem:[%s1 + $0xcc] sm:$0xf]
    %v970 = vld [vmem:[%s1 + $0xec] sm:$0xf]
    %v971 = vld [vmem:[%s1 + $0x10c] sm:$0xf]
    %v972 = vld [vmem:[%s1 + $0x12c] sm:$0xf]
    %v973 = vld [vmem:[%s1 + $0x14c] sm:$0xf]
    %v974 = vld [vmem:[%s1 + $0x16c] sm:$0xf]
    %v975 = vld [vmem:[%s1 + $0x18c] sm:$0xf]
    %v976 = vld [vmem:[%s1 + $0x1ac] sm:$0xf]
    %v977 = vld [vmem:[%s1 + $0x1cc] sm:$0xf]
    %v978 = vld [vmem:[%s1 + $0x1ec] sm:$0xf]
    %v979 = vld [vmem:[%s2 + $0x3] sm:$0x1]
    %v981 = vperm.slane %v979, 0
    %v999 = vunpack.c.l.b16 %v963
    %v1000 = vunpack.c.l.b16 %v964
    %v1001 = vunpack.c.l.b16 %v965
    %v1002 = vunpack.c.l.b16 %v966
    %v1003 = vunpack.c.l.b16 %v967
    %v1004 = vunpack.c.l.b16 %v968
    %v1005 = vunpack.c.l.b16 %v969
    %v1006 = vunpack.c.l.b16 %v970
    %v1007 = vunpack.c.l.b16 %v971
    %v1008 = vunpack.c.l.b16 %v972
    %v1009 = vunpack.c.l.b16 %v973
    %v1010 = vunpack.c.l.b16 %v974
    %v1011 = vunpack.c.l.b16 %v975
    %v1012 = vunpack.c.l.b16 %v976
    %v1013 = vunpack.c.l.b16 %v977
    %v1014 = vunpack.c.l.b16 %v978
    %v1015 = vpack.c.b16 %v1000, %v999
    %v1016 = vpack.c.b16 %v1002, %v1001
    %v1017 = vpack.c.b16 %v1004, %v1003
    %v1018 = vpack.c.b16 %v1006, %v1005
    %v1019 = vpack.c.b16 %v1008, %v1007
    %v1020 = vpack.c.b16 %v1010, %v1009
    %v1021 = vpack.c.b16 %v1012, %v1011
    %v1022 = vpack.c.b16 %v1014, %v1013
    %1031 = vmatpush.bf16.msra.mxu0 %v1022
    %1032 = vmatpush.bf16.msra.mxu0 %v1021
    %1033 = vmatpush.bf16.msra.mxu0 %v1020
    %1034 = vmatpush.bf16.msra.mxu0 %v1019
    %1035 = vmatpush.bf16.msra.mxu0 %v1018
    %1036 = vmatpush.bf16.msra.mxu0 %v1017
    %1037 = vmatpush.bf16.msra.mxu0 %v1016
    %1038 = vmatpush.bf16.msra.mxu0 %v1015
    %1039 = vmatmul.bf16.gmra.mxu0 %v34
    %v1040 = vpop.f32.mrf.mxu0
    %v1041 = vadd.f32 %v981, %v1040
    %v1042 = vpop.f32.mrf.mxu0
    %1043 = vdwg.mxu0
    %v1044 = vpack.c.bf16 %v1041, %v1041
    %v1045 = vld [vmem:[%s3] sm:$0xf]
    %v1046 = vld [vmem:[%s3 + $0x4] sm:$0xf]
    %v1047 = vld [vmem:[%s3 + $0x8] sm:$0xf]
    %v1048 = vld [vmem:[%s3 + $0xc] sm:$0xf]
    %v1049 = vld [vmem:[%s3 + $0x10] sm:$0xf]
    %v1050 = vld [vmem:[%s3 + $0x14] sm:$0xf]
    %v1051 = vld [vmem:[%s3 + $0x18] sm:$0xf]
    %v1052 = vld [vmem:[%s3 + $0x1c] sm:$0xf]
    %v1053 = vld [vmem:[%s3 + $0x20] sm:$0xf]
    %v1054 = vld [vmem:[%s3 + $0x24] sm:$0xf]
    %v1055 = vld [vmem:[%s3 + $0x28] sm:$0xf]
    %v1056 = vld [vmem:[%s3 + $0x2c] sm:$0xf]
    %v1057 = vld [vmem:[%s3 + $0x30] sm:$0xf]
    %v1058 = vld [vmem:[%s3 + $0x34] sm:$0xf]
    %v1059 = vld [vmem:[%s3 + $0x38] sm:$0xf]
    %v1060 = vld [vmem:[%s3 + $0x3c] sm:$0xf]
    %v1061 = vld [vmem:[%s4] sm:$0x1]
    %v1063 = vperm.slane %v1061, 0
    %v1081 = vunpack.c.l.b16 %v1045
    %v1082 = vunpack.c.l.b16 %v1046
    %v1083 = vunpack.c.l.b16 %v1047
    %v1084 = vunpack.c.l.b16 %v1048
    %v1085 = vunpack.c.l.b16 %v1049
    %v1086 = vunpack.c.l.b16 %v1050
    %v1087 = vunpack.c.l.b16 %v1051
    %v1088 = vunpack.c.l.b16 %v1052
    %v1089 = vunpack.c.l.b16 %v1053
    %v1090 = vunpack.c.l.b16 %v1054
    %v1091 = vunpack.c.l.b16 %v1055
    %v1092 = vunpack.c.l.b16 %v1056
    %v1093 = vunpack.c.l.b16 %v1057
    %v1094 = vunpack.c.l.b16 %v1058
    %v1095 = vunpack.c.l.b16 %v1059
    %v1096 = vunpack.c.l.b16 %v1060
    %v1097 = vpack.c.b16 %v1082, %v1081
    %v1098 = vpack.c.b16 %v1084, %v1083
    %v1099 = vpack.c.b16 %v1086, %v1085
    %v1100 = vpack.c.b16 %v1088, %v1087
    %v1101 = vpack.c.b16 %v1090, %v1089
    %v1102 = vpack.c.b16 %v1092, %v1091
    %v1103 = vpack.c.b16 %v1094, %v1093
    %v1104 = vpack.c.b16 %v1096, %v1095
    %1113 = vmatpush.bf16.msra.mxu0 %v1104
    %1114 = vmatpush.bf16.msra.mxu0 %v1103
    %1115 = vmatpush.bf16.msra.mxu0 %v1102
    %1116 = vmatpush.bf16.msra.mxu0 %v1101
    %1117 = vmatpush.bf16.msra.mxu0 %v1100
    %1118 = vmatpush.bf16.msra.mxu0 %v1099
    %1119 = vmatpush.bf16.msra.mxu0 %v1098
    %1120 = vmatpush.bf16.msra.mxu0 %v1097
    %1121 = vmatmul.bf16.gmra.mxu0 %v1044
    %v1122 = vpop.f32.mrf.mxu0
    %v1123 = vadd.f32 %v1063, %v1122
    %v1124 = vpop.f32.mrf.mxu0
    %1125 = vdwg.mxu0
    %v1126 = vmul.f32 %v1123, 0.5
    %v1127 = vmul.f32 %v1123, 0.044715
    %v1128 = vmul.f32 %v1127, %v1123
    %v1129 = vmul.f32 %v1128, %v1123
    %v1130 = vadd.f32 %v1123, %v1129
    %v1131 = vmul.f32 %v1130, 0.7978846
    %v1132 = vtanh.pop %v1131
    %v1133 = vadd.f32 %v1132, 1.0
    %v1134 = vmul.f32 %v1126, %v1133
    %v1135 = vld [vmem:[%s5] sm:$0x1]
    %v1136 = vld [vmem:[%s6] sm:$0x1]
    %1137 = vadd.xlane.f32.xlu0 %v1134
    %v1138 = vpop.xlane.xlu0 %1137
    %v1139 = vmul.f32 %v1138, %v217
    %v1140 = vsub.f32 %v1134, %v1139
    %v1141 = vmul.f32 %v1140, %v1140
    %1142 = vadd.xlane.f32.xlu0 %v1141
    %v1143 = vpop.xlane.xlu0 %1142
    %v1144 = vmul.f32 %v1143, %v217
    %v1145 = vadd.f32 %v1144, 1e-05
    %v1146 = vrsqrt.pop %v1145
    %v1147 = vmul.f32 %v1146, %v1145
    %v1148 = vmul.f32 %v1147, %v1146
    %v1149 = vmul.f32 0.5, %v1148
    %v1150 = vsub.f32 1.5, %v1149
    %v1151 = vmul.f32 %v1146, %v1150
    %vm1152 = vweird.f32 %v1145
    %vm1153 = vweird.f32 %v1146
    %vm1154 = vmor %vm1152, %vm1153
    %v1155 = vsel %vm1154, %v1146, %v1151
    %v1156 = vmul.f32 %v1140, %v1155
    %v1158 = vperm.slane %v1135, 0
    %v1160 = vmul.f32 %v1156, %v1158
    %v1162 = vperm.slane %v1136, 0
    %v1164 = vadd.f32 %v1160, %v1162
    %v1165 = vpack.c.bf16 %v1164, %v1164
    %v1166 = vld [vmem:[%s7] sm:$0xf]
    %v1167 = vld [vmem:[%s7 + $0x4] sm:$0xf]
    %v1168 = vld [vmem:[%s7 + $0x8] sm:$0xf]
    %v1169 = vld [vmem:[%s7 + $0xc] sm:$0xf]
    %v1170 = vld [vmem:[%s7 + $0x10] sm:$0xf]
    %v1171 = vld [vmem:[%s7 + $0x14] sm:$0xf]
    %v1172 = vld [vmem:[%s7 + $0x18] sm:$0xf]
    %v1173 = vld [vmem:[%s7 + $0x1c] sm:$0xf]
    %v1174 = vld [vmem:[%s7 + $0x20] sm:$0xf]
    %v1175 = vld [vmem:[%s7 + $0x24] sm:$0xf]
    %v1176 = vld [vmem:[%s7 + $0x28] sm:$0xf]
    %v1177 = vld [vmem:[%s7 + $0x2c] sm:$0xf]
    %v1178 = vld [vmem:[%s7 + $0x30] sm:$0xf]
    %v1179 = vld [vmem:[%s7 + $0x34] sm:$0xf]
    %v1180 = vld [vmem:[%s7 + $0x38] sm:$0xf]
    %v1181 = vld [vmem:[%s7 + $0x3c] sm:$0xf]
    %v1182 = vld [vmem:[%s8] sm:$0x1]
    %v1184 = vperm.slane %v1182, 0
    %v1202 = vunpack.c.l.b16 %v1166
    %v1203 = vunpack.c.l.b16 %v1167
    %v1204 = vunpack.c.l.b16 %v1168
    %v1205 = vunpack.c.l.b16 %v1169
    %v1206 = vunpack.c.l.b16 %v1170
    %v1207 = vunpack.c.l.b16 %v1171
    %v1208 = vunpack.c.l.b16 %v1172
    %v1209 = vunpack.c.l.b16 %v1173
    %v1210 = vunpack.c.l.b16 %v1174
    %v1211 = vunpack.c.l.b16 %v1175
    %v1212 = vunpack.c.l.b16 %v1176
    %v1213 = vunpack.c.l.b16 %v1177
    %v1214 = vunpack.c.l.b16 %v1178
    %v1215 = vunpack.c.l.b16 %v1179
    %v1216 = vunpack.c.l.b16 %v1180
    %v1217 = vunpack.c.l.b16 %v1181
    %v1218 = vpack.c.b16 %v1203, %v1202
    %v1219 = vpack.c.b16 %v1205, %v1204
    %v1220 = vpack.c.b16 %v1207, %v1206
    %v1221 = vpack.c.b16 %v1209, %v1208
    %v1222 = vpack.c.b16 %v1211, %v1210
    %v1223 = vpack.c.b16 %v1213, %v1212
    %v1224 = vpack.c.b16 %v1215, %v1214
    %v1225 = vpack.c.b16 %v1217, %v1216
    %1234 = vmatpush.bf16.msra.mxu0 %v1225
    %1235 = vmatpush.bf16.msra.mxu0 %v1224
    %1236 = vmatpush.bf16.msra.mxu0 %v1223
    %1237 = vmatpush.bf16.msra.mxu0 %v1222
    %1238 = vmatpush.bf16.msra.mxu0 %v1221
    %1239 = vmatpush.bf16.msra.mxu0 %v1220
    %1240 = vmatpush.bf16.msra.mxu0 %v1219
    %1241 = vmatpush.bf16.msra.mxu0 %v1218
    %1242 = vmatmul.bf16.gmra.mxu0 %v1165
    %v1243 = vpop.f32.mrf.mxu0
    %v1244 = vadd.f32 %v1184, %v1243
    %v1245 = vpop.f32.mrf.mxu0
    %1246 = vdwg.mxu0
    %v1248 = vrot.slane %v1244, 1
    %v1249 = vrot.slane %v1244, 2
    %v1250 = vrot.slane %v1244, 3
    %v1251 = vrot.slane %v1244, 4
    %v1252 = vrot.slane %v1244, 5
    %v1253 = vrot.slane %v1244, 6
    %v1254 = vrot.slane %v1244, 7
    %1262 = vst [vmem:[#allocation2 + $0x3] sm:$0x1] %v1244
    %1263 = vst [vmem:[#allocation2 + $0xb] sm:$0x1] %v1248
    %1264 = vst [vmem:[#allocation2 + $0x13] sm:$0x1] %v1249
    %1265 = vst [vmem:[#allocation2 + $0x1b] sm:$0x1] %v1250
    %1266 = vst [vmem:[#allocation2 + $0x23] sm:$0x1] %v1251
    %1267 = vst [vmem:[#allocation2 + $0x2b] sm:$0x1] %v1252
    %1268 = vst [vmem:[#allocation2 + $0x33] sm:$0x1] %v1253
    %1269 = vst [vmem:[#allocation2 + $0x3b] sm:$0x1] %v1254
    %v1270 = vld [vmem:[%s1 + $0x10] sm:$0xf]
    %v1271 = vld [vmem:[%s1 + $0x30] sm:$0xf]
    %v1272 = vld [vmem:[%s1 + $0x50] sm:$0xf]
    %v1273 = vld [vmem:[%s1 + $0x70] sm:$0xf]
    %v1274 = vld [vmem:[%s1 + $0x90] sm:$0xf]
    %v1275 = vld [vmem:[%s1 + $0xb0] sm:$0xf]
    %v1276 = vld [vmem:[%s1 + $0xd0] sm:$0xf]
    %v1277 = vld [vmem:[%s1 + $0xf0] sm:$0xf]
    %v1278 = vld [vmem:[%s1 + $0x110] sm:$0xf]
    %v1279 = vld [vmem:[%s1 + $0x130] sm:$0xf]
    %v1280 = vld [vmem:[%s1 + $0x150] sm:$0xf]
    %v1281 = vld [vmem:[%s1 + $0x170] sm:$0xf]
    %v1282 = vld [vmem:[%s1 + $0x190] sm:$0xf]
    %v1283 = vld [vmem:[%s1 + $0x1b0] sm:$0xf]
    %v1284 = vld [vmem:[%s1 + $0x1d0] sm:$0xf]
    %v1285 = vld [vmem:[%s1 + $0x1f0] sm:$0xf]
    %v1286 = vld [vmem:[%s2 + $0x4] sm:$0x1]
    %v1288 = vperm.slane %v1286, 0
    %v1306 = vunpack.c.l.b16 %v1270
    %v1307 = vunpack.c.l.b16 %v1271
    %v1308 = vunpack.c.l.b16 %v1272
    %v1309 = vunpack.c.l.b16 %v1273
    %v1310 = vunpack.c.l.b16 %v1274
    %v1311 = vunpack.c.l.b16 %v1275
    %v1312 = vunpack.c.l.b16 %v1276
    %v1313 = vunpack.c.l.b16 %v1277
    %v1314 = vunpack.c.l.b16 %v1278
    %v1315 = vunpack.c.l.b16 %v1279
    %v1316 = vunpack.c.l.b16 %v1280
    %v1317 = vunpack.c.l.b16 %v1281
    %v1318 = vunpack.c.l.b16 %v1282
    %v1319 = vunpack.c.l.b16 %v1283
    %v1320 = vunpack.c.l.b16 %v1284
    %v1321 = vunpack.c.l.b16 %v1285
    %v1322 = vpack.c.b16 %v1307, %v1306
    %v1323 = vpack.c.b16 %v1309, %v1308
    %v1324 = vpack.c.b16 %v1311, %v1310
    %v1325 = vpack.c.b16 %v1313, %v1312
    %v1326 = vpack.c.b16 %v1315, %v1314
    %v1327 = vpack.c.b16 %v1317, %v1316
    %v1328 = vpack.c.b16 %v1319, %v1318
    %v1329 = vpack.c.b16 %v1321, %v1320
    %1338 = vmatpush.bf16.msra.mxu0 %v1329
    %1339 = vmatpush.bf16.msra.mxu0 %v1328
    %1340 = vmatpush.bf16.msra.mxu0 %v1327
    %1341 = vmatpush.bf16.msra.mxu0 %v1326
    %1342 = vmatpush.bf16.msra.mxu0 %v1325
    %1343 = vmatpush.bf16.msra.mxu0 %v1324
    %1344 = vmatpush.bf16.msra.mxu0 %v1323
    %1345 = vmatpush.bf16.msra.mxu0 %v1322
    %1346 = vmatmul.bf16.gmra.mxu0 %v34
    %v1347 = vpop.f32.mrf.mxu0
    %v1348 = vadd.f32 %v1288, %v1347
    %v1349 = vpop.f32.mrf.mxu0
    %1350 = vdwg.mxu0
    %v1351 = vpack.c.bf16 %v1348, %v1348
    %v1352 = vld [vmem:[%s3] sm:$0xf]
    %v1353 = vld [vmem:[%s3 + $0x4] sm:$0xf]
    %v1354 = vld [vmem:[%s3 + $0x8] sm:$0xf]
    %v1355 = vld [vmem:[%s3 + $0xc] sm:$0xf]
    %v1356 = vld [vmem:[%s3 + $0x10] sm:$0xf]
    %v1357 = vld [vmem:[%s3 + $0x14] sm:$0xf]
    %v1358 = vld [vmem:[%s3 + $0x18] sm:$0xf]
    %v1359 = vld [vmem:[%s3 + $0x1c] sm:$0xf]
    %v1360 = vld [vmem:[%s3 + $0x20] sm:$0xf]
    %v1361 = vld [vmem:[%s3 + $0x24] sm:$0xf]
    %v1362 = vld [vmem:[%s3 + $0x28] sm:$0xf]
    %v1363 = vld [vmem:[%s3 + $0x2c] sm:$0xf]
    %v1364 = vld [vmem:[%s3 + $0x30] sm:$0xf]
    %v1365 = vld [vmem:[%s3 + $0x34] sm:$0xf]
    %v1366 = vld [vmem:[%s3 + $0x38] sm:$0xf]
    %v1367 = vld [vmem:[%s3 + $0x3c] sm:$0xf]
    %v1368 = vld [vmem:[%s4] sm:$0x1]
    %v1370 = vperm.slane %v1368, 0
    %v1388 = vunpack.c.l.b16 %v1352
    %v1389 = vunpack.c.l.b16 %v1353
    %v1390 = vunpack.c.l.b16 %v1354
    %v1391 = vunpack.c.l.b16 %v1355
    %v1392 = vunpack.c.l.b16 %v1356
    %v1393 = vunpack.c.l.b16 %v1357
    %v1394 = vunpack.c.l.b16 %v1358
    %v1395 = vunpack.c.l.b16 %v1359
    %v1396 = vunpack.c.l.b16 %v1360
    %v1397 = vunpack.c.l.b16 %v1361
    %v1398 = vunpack.c.l.b16 %v1362
    %v1399 = vunpack.c.l.b16 %v1363
    %v1400 = vunpack.c.l.b16 %v1364
    %v1401 = vunpack.c.l.b16 %v1365
    %v1402 = vunpack.c.l.b16 %v1366
    %v1403 = vunpack.c.l.b16 %v1367
    %v1404 = vpack.c.b16 %v1389, %v1388
    %v1405 = vpack.c.b16 %v1391, %v1390
    %v1406 = vpack.c.b16 %v1393, %v1392
    %v1407 = vpack.c.b16 %v1395, %v1394
    %v1408 = vpack.c.b16 %v1397, %v1396
    %v1409 = vpack.c.b16 %v1399, %v1398
    %v1410 = vpack.c.b16 %v1401, %v1400
    %v1411 = vpack.c.b16 %v1403, %v1402
    %1420 = vmatpush.bf16.msra.mxu0 %v1411
    %1421 = vmatpush.bf16.msra.mxu0 %v1410
    %1422 = vmatpush.bf16.msra.mxu0 %v1409
    %1423 = vmatpush.bf16.msra.mxu0 %v1408
    %1424 = vmatpush.bf16.msra.mxu0 %v1407
    %1425 = vmatpush.bf16.msra.mxu0 %v1406
    %1426 = vmatpush.bf16.msra.mxu0 %v1405
    %1427 = vmatpush.bf16.msra.mxu0 %v1404
    %1428 = vmatmul.bf16.gmra.mxu0 %v1351
    %v1429 = vpop.f32.mrf.mxu0
    %v1430 = vadd.f32 %v1370, %v1429
    %v1431 = vpop.f32.mrf.mxu0
    %1432 = vdwg.mxu0
    %v1433 = vmul.f32 %v1430, 0.5
    %v1434 = vmul.f32 %v1430, 0.044715
    %v1435 = vmul.f32 %v1434, %v1430
    %v1436 = vmul.f32 %v1435, %v1430
    %v1437 = vadd.f32 %v1430, %v1436
    %v1438 = vmul.f32 %v1437, 0.7978846
    %v1439 = vtanh.pop %v1438
    %v1440 = vadd.f32 %v1439, 1.0
    %v1441 = vmul.f32 %v1433, %v1440
    %v1442 = vld [vmem:[%s5] sm:$0x1]
    %v1443 = vld [vmem:[%s6] sm:$0x1]
    %1444 = vadd.xlane.f32.xlu0 %v1441
    %v1445 = vpop.xlane.xlu0 %1444
    %v1446 = vmul.f32 %v1445, %v217
    %v1447 = vsub.f32 %v1441, %v1446
    %v1448 = vmul.f32 %v1447, %v1447
    %1449 = vadd.xlane.f32.xlu0 %v1448
    %v1450 = vpop.xlane.xlu0 %1449
    %v1451 = vmul.f32 %v1450, %v217
    %v1452 = vadd.f32 %v1451, 1e-05
    %v1453 = vrsqrt.pop %v1452
    %v1454 = vmul.f32 %v1453, %v1452
    %v1455 = vmul.f32 %v1454, %v1453
    %v1456 = vmul.f32 0.5, %v1455
    %v1457 = vsub.f32 1.5, %v1456
    %v1458 = vmul.f32 %v1453, %v1457
    %vm1459 = vweird.f32 %v1452
    %vm1460 = vweird.f32 %v1453
    %vm1461 = vmor %vm1459, %vm1460
    %v1462 = vsel %vm1461, %v1453, %v1458
    %v1463 = vmul.f32 %v1447, %v1462
    %v1465 = vperm.slane %v1442, 0
    %v1467 = vmul.f32 %v1463, %v1465
    %v1469 = vperm.slane %v1443, 0
    %v1471 = vadd.f32 %v1467, %v1469
    %v1472 = vpack.c.bf16 %v1471, %v1471
    %v1473 = vld [vmem:[%s7] sm:$0xf]
    %v1474 = vld [vmem:[%s7 + $0x4] sm:$0xf]
    %v1475 = vld [vmem:[%s7 + $0x8] sm:$0xf]
    %v1476 = vld [vmem:[%s7 + $0xc] sm:$0xf]
    %v1477 = vld [vmem:[%s7 + $0x10] sm:$0xf]
    %v1478 = vld [vmem:[%s7 + $0x14] sm:$0xf]
    %v1479 = vld [vmem:[%s7 + $0x18] sm:$0xf]
    %v1480 = vld [vmem:[%s7 + $0x1c] sm:$0xf]
    %v1481 = vld [vmem:[%s7 + $0x20] sm:$0xf]
    %v1482 = vld [vmem:[%s7 + $0x24] sm:$0xf]
    %v1483 = vld [vmem:[%s7 + $0x28] sm:$0xf]
    %v1484 = vld [vmem:[%s7 + $0x2c] sm:$0xf]
    %v1485 = vld [vmem:[%s7 + $0x30] sm:$0xf]
    %v1486 = vld [vmem:[%s7 + $0x34] sm:$0xf]
    %v1487 = vld [vmem:[%s7 + $0x38] sm:$0xf]
    %v1488 = vld [vmem:[%s7 + $0x3c] sm:$0xf]
    %v1489 = vld [vmem:[%s8] sm:$0x1]
    %v1491 = vperm.slane %v1489, 0
    %v1509 = vunpack.c.l.b16 %v1473
    %v1510 = vunpack.c.l.b16 %v1474
    %v1511 = vunpack.c.l.b16 %v1475
    %v1512 = vunpack.c.l.b16 %v1476
    %v1513 = vunpack.c.l.b16 %v1477
    %v1514 = vunpack.c.l.b16 %v1478
    %v1515 = vunpack.c.l.b16 %v1479
    %v1516 = vunpack.c.l.b16 %v1480
    %v1517 = vunpack.c.l.b16 %v1481
    %v1518 = vunpack.c.l.b16 %v1482
    %v1519 = vunpack.c.l.b16 %v1483
    %v1520 = vunpack.c.l.b16 %v1484
    %v1521 = vunpack.c.l.b16 %v1485
    %v1522 = vunpack.c.l.b16 %v1486
    %v1523 = vunpack.c.l.b16 %v1487
    %v1524 = vunpack.c.l.b16 %v1488
    %v1525 = vpack.c.b16 %v1510, %v1509
    %v1526 = vpack.c.b16 %v1512, %v1511
    %v1527 = vpack.c.b16 %v1514, %v1513
    %v1528 = vpack.c.b16 %v1516, %v1515
    %v1529 = vpack.c.b16 %v1518, %v1517
    %v1530 = vpack.c.b16 %v1520, %v1519
    %v1531 = vpack.c.b16 %v1522, %v1521
    %v1532 = vpack.c.b16 %v1524, %v1523
    %1541 = vmatpush.bf16.msra.mxu0 %v1532
    %1542 = vmatpush.bf16.msra.mxu0 %v1531
    %1543 = vmatpush.bf16.msra.mxu0 %v1530
    %1544 = vmatpush.bf16.msra.mxu0 %v1529
    %1545 = vmatpush.bf16.msra.mxu0 %v1528
    %1546 = vmatpush.bf16.msra.mxu0 %v1527
    %1547 = vmatpush.bf16.msra.mxu0 %v1526
    %1548 = vmatpush.bf16.msra.mxu0 %v1525
    %1549 = vmatmul.bf16.gmra.mxu0 %v1472
    %v1550 = vpop.f32.mrf.mxu0
    %v1551 = vadd.f32 %v1491, %v1550
    %v1552 = vpop.f32.mrf.mxu0
    %1553 = vdwg.mxu0
    %v1555 = vrot.slane %v1551, 1
    %v1556 = vrot.slane %v1551, 2
    %v1557 = vrot.slane %v1551, 3
    %v1558 = vrot.slane %v1551, 4
    %v1559 = vrot.slane %v1551, 5
    %v1560 = vrot.slane %v1551, 6
    %v1561 = vrot.slane %v1551, 7
    %1569 = vst [vmem:[#allocation2 + $0x4] sm:$0x1] %v1551
    %1570 = vst [vmem:[#allocation2 + $0xc] sm:$0x1] %v1555
    %1571 = vst [vmem:[#allocation2 + $0x14] sm:$0x1] %v1556
    %1572 = vst [vmem:[#allocation2 + $0x1c] sm:$0x1] %v1557
    %1573 = vst [vmem:[#allocation2 + $0x24] sm:$0x1] %v1558
    %1574 = vst [vmem:[#allocation2 + $0x2c] sm:$0x1] %v1559
    %1575 = vst [vmem:[#allocation2 + $0x34] sm:$0x1] %v1560
    %1576 = vst [vmem:[#allocation2 + $0x3c] sm:$0x1] %v1561
    %v1577 = vld [vmem:[%s1 + $0x14] sm:$0xf]
    %v1578 = vld [vmem:[%s1 + $0x34] sm:$0xf]
    %v1579 = vld [vmem:[%s1 + $0x54] sm:$0xf]
    %v1580 = vld [vmem:[%s1 + $0x74] sm:$0xf]
    %v1581 = vld [vmem:[%s1 + $0x94] sm:$0xf]
    %v1582 = vld [vmem:[%s1 + $0xb4] sm:$0xf]
    %v1583 = vld [vmem:[%s1 + $0xd4] sm:$0xf]
    %v1584 = vld [vmem:[%s1 + $0xf4] sm:$0xf]
    %v1585 = vld [vmem:[%s1 + $0x114] sm:$0xf]
    %v1586 = vld [vmem:[%s1 + $0x134] sm:$0xf]
    %v1587 = vld [vmem:[%s1 + $0x154] sm:$0xf]
    %v1588 = vld [vmem:[%s1 + $0x174] sm:$0xf]
    %v1589 = vld [vmem:[%s1 + $0x194] sm:$0xf]
    %v1590 = vld [vmem:[%s1 + $0x1b4] sm:$0xf]
    %v1591 = vld [vmem:[%s1 + $0x1d4] sm:$0xf]
    %v1592 = vld [vmem:[%s1 + $0x1f4] sm:$0xf]
    %v1593 = vld [vmem:[%s2 + $0x5] sm:$0x1]
    %v1595 = vperm.slane %v1593, 0
    %v1613 = vunpack.c.l.b16 %v1577
    %v1614 = vunpack.c.l.b16 %v1578
    %v1615 = vunpack.c.l.b16 %v1579
    %v1616 = vunpack.c.l.b16 %v1580
    %v1617 = vunpack.c.l.b16 %v1581
    %v1618 = vunpack.c.l.b16 %v1582
    %v1619 = vunpack.c.l.b16 %v1583
    %v1620 = vunpack.c.l.b16 %v1584
    %v1621 = vunpack.c.l.b16 %v1585
    %v1622 = vunpack.c.l.b16 %v1586
    %v1623 = vunpack.c.l.b16 %v1587
    %v1624 = vunpack.c.l.b16 %v1588
    %v1625 = vunpack.c.l.b16 %v1589
    %v1626 = vunpack.c.l.b16 %v1590
    %v1627 = vunpack.c.l.b16 %v1591
    %v1628 = vunpack.c.l.b16 %v1592
    %v1629 = vpack.c.b16 %v1614, %v1613
    %v1630 = vpack.c.b16 %v1616, %v1615
    %v1631 = vpack.c.b16 %v1618, %v1617
    %v1632 = vpack.c.b16 %v1620, %v1619
    %v1633 = vpack.c.b16 %v1622, %v1621
    %v1634 = vpack.c.b16 %v1624, %v1623
    %v1635 = vpack.c.b16 %v1626, %v1625
    %v1636 = vpack.c.b16 %v1628, %v1627
    %1645 = vmatpush.bf16.msra.mxu0 %v1636
    %1646 = vmatpush.bf16.msra.mxu0 %v1635
    %1647 = vmatpush.bf16.msra.mxu0 %v1634
    %1648 = vmatpush.bf16.msra.mxu0 %v1633
    %1649 = vmatpush.bf16.msra.mxu0 %v1632
    %1650 = vmatpush.bf16.msra.mxu0 %v1631
    %1651 = vmatpush.bf16.msra.mxu0 %v1630
    %1652 = vmatpush.bf16.msra.mxu0 %v1629
    %1653 = vmatmul.bf16.gmra.mxu0 %v34
    %v1654 = vpop.f32.mrf.mxu0
    %v1655 = vadd.f32 %v1595, %v1654
    %v1656 = vpop.f32.mrf.mxu0
    %1657 = vdwg.mxu0
    %v1658 = vpack.c.bf16 %v1655, %v1655
    %v1659 = vld [vmem:[%s3] sm:$0xf]
    %v1660 = vld [vmem:[%s3 + $0x4] sm:$0xf]
    %v1661 = vld [vmem:[%s3 + $0x8] sm:$0xf]
    %v1662 = vld [vmem:[%s3 + $0xc] sm:$0xf]
    %v1663 = vld [vmem:[%s3 + $0x10] sm:$0xf]
    %v1664 = vld [vmem:[%s3 + $0x14] sm:$0xf]
    %v1665 = vld [vmem:[%s3 + $0x18] sm:$0xf]
    %v1666 = vld [vmem:[%s3 + $0x1c] sm:$0xf]
    %v1667 = vld [vmem:[%s3 + $0x20] sm:$0xf]
    %v1668 = vld [vmem:[%s3 + $0x24] sm:$0xf]
    %v1669 = vld [vmem:[%s3 + $0x28] sm:$0xf]
    %v1670 = vld [vmem:[%s3 + $0x2c] sm:$0xf]
    %v1671 = vld [vmem:[%s3 + $0x30] sm:$0xf]
    %v1672 = vld [vmem:[%s3 + $0x34] sm:$0xf]
    %v1673 = vld [vmem:[%s3 + $0x38] sm:$0xf]
    %v1674 = vld [vmem:[%s3 + $0x3c] sm:$0xf]
    %v1675 = vld [vmem:[%s4] sm:$0x1]
    %v1677 = vperm.slane %v1675, 0
    %v1695 = vunpack.c.l.b16 %v1659
    %v1696 = vunpack.c.l.b16 %v1660
    %v1697 = vunpack.c.l.b16 %v1661
    %v1698 = vunpack.c.l.b16 %v1662
    %v1699 = vunpack.c.l.b16 %v1663
    %v1700 = vunpack.c.l.b16 %v1664
    %v1701 = vunpack.c.l.b16 %v1665
    %v1702 = vunpack.c.l.b16 %v1666
    %v1703 = vunpack.c.l.b16 %v1667
    %v1704 = vunpack.c.l.b16 %v1668
    %v1705 = vunpack.c.l.b16 %v1669
    %v1706 = vunpack.c.l.b16 %v1670
    %v1707 = vunpack.c.l.b16 %v1671
    %v1708 = vunpack.c.l.b16 %v1672
    %v1709 = vunpack.c.l.b16 %v1673
    %v1710 = vunpack.c.l.b16 %v1674
    %v1711 = vpack.c.b16 %v1696, %v1695
    %v1712 = vpack.c.b16 %v1698, %v1697
    %v1713 = vpack.c.b16 %v1700, %v1699
    %v1714 = vpack.c.b16 %v1702, %v1701
    %v1715 = vpack.c.b16 %v1704, %v1703
    %v1716 = vpack.c.b16 %v1706, %v1705
    %v1717 = vpack.c.b16 %v1708, %v1707
    %v1718 = vpack.c.b16 %v1710, %v1709
    %1727 = vmatpush.bf16.msra.mxu0 %v1718
    %1728 = vmatpush.bf16.msra.mxu0 %v1717
    %1729 = vmatpush.bf16.msra.mxu0 %v1716
    %1730 = vmatpush.bf16.msra.mxu0 %v1715
    %1731 = vmatpush.bf16.msra.mxu0 %v1714
    %1732 = vmatpush.bf16.msra.mxu0 %v1713
    %1733 = vmatpush.bf16.msra.mxu0 %v1712
    %1734 = vmatpush.bf16.msra.mxu0 %v1711
    %1735 = vmatmul.bf16.gmra.mxu0 %v1658
    %v1736 = vpop.f32.mrf.mxu0
    %v1737 = vadd.f32 %v1677, %v1736
    %v1738 = vpop.f32.mrf.mxu0
    %1739 = vdwg.mxu0
    %v1740 = vmul.f32 %v1737, 0.5
    %v1741 = vmul.f32 %v1737, 0.044715
    %v1742 = vmul.f32 %v1741, %v1737
    %v1743 = vmul.f32 %v1742, %v1737
    %v1744 = vadd.f32 %v1737, %v1743
    %v1745 = vmul.f32 %v1744, 0.7978846
    %v1746 = vtanh.pop %v1745
    %v1747 = vadd.f32 %v1746, 1.0
    %v1748 = vmul.f32 %v1740, %v1747
    %v1749 = vld [vmem:[%s5] sm:$0x1]
    %v1750 = vld [vmem:[%s6] sm:$0x1]
    %1751 = vadd.xlane.f32.xlu0 %v1748
    %v1752 = vpop.xlane.xlu0 %1751
    %v1753 = vmul.f32 %v1752, %v217
    %v1754 = vsub.f32 %v1748, %v1753
    %v1755 = vmul.f32 %v1754, %v1754
    %1756 = vadd.xlane.f32.xlu0 %v1755
    %v1757 = vpop.xlane.xlu0 %1756
    %v1758 = vmul.f32 %v1757, %v217
    %v1759 = vadd.f32 %v1758, 1e-05
    %v1760 = vrsqrt.pop %v1759
    %v1761 = vmul.f32 %v1760, %v1759
    %v1762 = vmul.f32 %v1761, %v1760
    %v1763 = vmul.f32 0.5, %v1762
    %v1764 = vsub.f32 1.5, %v1763
    %v1765 = vmul.f32 %v1760, %v1764
    %vm1766 = vweird.f32 %v1759
    %vm1767 = vweird.f32 %v1760
    %vm1768 = vmor %vm1766, %vm1767
    %v1769 = vsel %vm1768, %v1760, %v1765
    %v1770 = vmul.f32 %v1754, %v1769
    %v1772 = vperm.slane %v1749, 0
    %v1774 = vmul.f32 %v1770, %v1772
    %v1776 = vperm.slane %v1750, 0
    %v1778 = vadd.f32 %v1774, %v1776
    %v1779 = vpack.c.bf16 %v1778, %v1778
    %v1780 = vld [vmem:[%s7] sm:$0xf]
    %v1781 = vld [vmem:[%s7 + $0x4] sm:$0xf]
    %v1782 = vld [vmem:[%s7 + $0x8] sm:$0xf]
    %v1783 = vld [vmem:[%s7 + $0xc] sm:$0xf]
    %v1784 = vld [vmem:[%s7 + $0x10] sm:$0xf]
    %v1785 = vld [vmem:[%s7 + $0x14] sm:$0xf]
    %v1786 = vld [vmem:[%s7 + $0x18] sm:$0xf]
    %v1787 = vld [vmem:[%s7 + $0x1c] sm:$0xf]
    %v1788 = vld [vmem:[%s7 + $0x20] sm:$0xf]
    %v1789 = vld [vmem:[%s7 + $0x24] sm:$0xf]
    %v1790 = vld [vmem:[%s7 + $0x28] sm:$0xf]
    %v1791 = vld [vmem:[%s7 + $0x2c] sm:$0xf]
    %v1792 = vld [vmem:[%s7 + $0x30] sm:$0xf]
    %v1793 = vld [vmem:[%s7 + $0x34] sm:$0xf]
    %v1794 = vld [vmem:[%s7 + $0x38] sm:$0xf]
    %v1795 = vld [vmem:[%s7 + $0x3c] sm:$0xf]
    %v1796 = vld [vmem:[%s8] sm:$0x1]
    %v1798 = vperm.slane %v1796, 0
    %v1816 = vunpack.c.l.b16 %v1780
    %v1817 = vunpack.c.l.b16 %v1781
    %v1818 = vunpack.c.l.b16 %v1782
    %v1819 = vunpack.c.l.b16 %v1783
    %v1820 = vunpack.c.l.b16 %v1784
    %v1821 = vunpack.c.l.b16 %v1785
    %v1822 = vunpack.c.l.b16 %v1786
    %v1823 = vunpack.c.l.b16 %v1787
    %v1824 = vunpack.c.l.b16 %v1788
    %v1825 = vunpack.c.l.b16 %v1789
    %v1826 = vunpack.c.l.b16 %v1790
    %v1827 = vunpack.c.l.b16 %v1791
    %v1828 = vunpack.c.l.b16 %v1792
    %v1829 = vunpack.c.l.b16 %v1793
    %v1830 = vunpack.c.l.b16 %v1794
    %v1831 = vunpack.c.l.b16 %v1795
    %v1832 = vpack.c.b16 %v1817, %v1816
    %v1833 = vpack.c.b16 %v1819, %v1818
    %v1834 = vpack.c.b16 %v1821, %v1820
    %v1835 = vpack.c.b16 %v1823, %v1822
    %v1836 = vpack.c.b16 %v1825, %v1824
    %v1837 = vpack.c.b16 %v1827, %v1826
    %v1838 = vpack.c.b16 %v1829, %v1828
    %v1839 = vpack.c.b16 %v1831, %v1830
    %1848 = vmatpush.bf16.msra.mxu0 %v1839
    %1849 = vmatpush.bf16.msra.mxu0 %v1838
    %1850 = vmatpush.bf16.msra.mxu0 %v1837
    %1851 = vmatpush.bf16.msra.mxu0 %v1836
    %1852 = vmatpush.bf16.msra.mxu0 %v1835
    %1853 = vmatpush.bf16.msra.mxu0 %v1834
    %1854 = vmatpush.bf16.msra.mxu0 %v1833
    %1855 = vmatpush.bf16.msra.mxu0 %v1832
    %1856 = vmatmul.bf16.gmra.mxu0 %v1779
    %v1857 = vpop.f32.mrf.mxu0
    %v1858 = vadd.f32 %v1798, %v1857
    %v1859 = vpop.f32.mrf.mxu0
    %1860 = vdwg.mxu0
    %v1862 = vrot.slane %v1858, 1
    %v1863 = vrot.slane %v1858, 2
    %v1864 = vrot.slane %v1858, 3
    %v1865 = vrot.slane %v1858, 4
    %v1866 = vrot.slane %v1858, 5
    %v1867 = vrot.slane %v1858, 6
    %v1868 = vrot.slane %v1858, 7
    %1876 = vst [vmem:[#allocation2 + $0x5] sm:$0x1] %v1858
    %1877 = vst [vmem:[#allocation2 + $0xd] sm:$0x1] %v1862
    %1878 = vst [vmem:[#allocation2 + $0x15] sm:$0x1] %v1863
    %1879 = vst [vmem:[#allocation2 + $0x1d] sm:$0x1] %v1864
    %1880 = vst [vmem:[#allocation2 + $0x25] sm:$0x1] %v1865
    %1881 = vst [vmem:[#allocation2 + $0x2d] sm:$0x1] %v1866
    %1882 = vst [vmem:[#allocation2 + $0x35] sm:$0x1] %v1867
    %1883 = vst [vmem:[#allocation2 + $0x3d] sm:$0x1] %v1868
    %v1884 = vld [vmem:[%s1 + $0x18] sm:$0xf]
    %v1885 = vld [vmem:[%s1 + $0x38] sm:$0xf]
    %v1886 = vld [vmem:[%s1 + $0x58] sm:$0xf]
    %v1887 = vld [vmem:[%s1 + $0x78] sm:$0xf]
    %v1888 = vld [vmem:[%s1 + $0x98] sm:$0xf]
    %v1889 = vld [vmem:[%s1 + $0xb8] sm:$0xf]
    %v1890 = vld [vmem:[%s1 + $0xd8] sm:$0xf]
    %v1891 = vld [vmem:[%s1 + $0xf8] sm:$0xf]
    %v1892 = vld [vmem:[%s1 + $0x118] sm:$0xf]
    %v1893 = vld [vmem:[%s1 + $0x138] sm:$0xf]
    %v1894 = vld [vmem:[%s1 + $0x158] sm:$0xf]
    %v1895 = vld [vmem:[%s1 + $0x178] sm:$0xf]
    %v1896 = vld [vmem:[%s1 + $0x198] sm:$0xf]
    %v1897 = vld [vmem:[%s1 + $0x1b8] sm:$0xf]
    %v1898 = vld [vmem:[%s1 + $0x1d8] sm:$0xf]
    %v1899 = vld [vmem:[%s1 + $0x1f8] sm:$0xf]
    %v1900 = vld [vmem:[%s2 + $0x6] sm:$0x1]
    %v1902 = vperm.slane %v1900, 0
    %v1920 = vunpack.c.l.b16 %v1884
    %v1921 = vunpack.c.l.b16 %v1885
    %v1922 = vunpack.c.l.b16 %v1886
    %v1923 = vunpack.c.l.b16 %v1887
    %v1924 = vunpack.c.l.b16 %v1888
    %v1925 = vunpack.c.l.b16 %v1889
    %v1926 = vunpack.c.l.b16 %v1890
    %v1927 = vunpack.c.l.b16 %v1891
    %v1928 = vunpack.c.l.b16 %v1892
    %v1929 = vunpack.c.l.b16 %v1893
    %v1930 = vunpack.c.l.b16 %v1894
    %v1931 = vunpack.c.l.b16 %v1895
    %v1932 = vunpack.c.l.b16 %v1896
    %v1933 = vunpack.c.l.b16 %v1897
    %v1934 = vunpack.c.l.b16 %v1898
    %v1935 = vunpack.c.l.b16 %v1899
    %v1936 = vpack.c.b16 %v1921, %v1920
    %v1937 = vpack.c.b16 %v1923, %v1922
    %v1938 = vpack.c.b16 %v1925, %v1924
    %v1939 = vpack.c.b16 %v1927, %v1926
    %v1940 = vpack.c.b16 %v1929, %v1928
    %v1941 = vpack.c.b16 %v1931, %v1930
    %v1942 = vpack.c.b16 %v1933, %v1932
    %v1943 = vpack.c.b16 %v1935, %v1934
    %1952 = vmatpush.bf16.msra.mxu0 %v1943
    %1953 = vmatpush.bf16.msra.mxu0 %v1942
    %1954 = vmatpush.bf16.msra.mxu0 %v1941
    %1955 = vmatpush.bf16.msra.mxu0 %v1940
    %1956 = vmatpush.bf16.msra.mxu0 %v1939
    %1957 = vmatpush.bf16.msra.mxu0 %v1938
    %1958 = vmatpush.bf16.msra.mxu0 %v1937
    %1959 = vmatpush.bf16.msra.mxu0 %v1936
    %1960 = vmatmul.bf16.gmra.mxu0 %v34
    %v1961 = vpop.f32.mrf.mxu0
    %v1962 = vadd.f32 %v1902, %v1961
    %v1963 = vpop.f32.mrf.mxu0
    %1964 = vdwg.mxu0
    %v1965 = vpack.c.bf16 %v1962, %v1962
    %v1966 = vld [vmem:[%s3] sm:$0xf]
    %v1967 = vld [vmem:[%s3 + $0x4] sm:$0xf]
    %v1968 = vld [vmem:[%s3 + $0x8] sm:$0xf]
    %v1969 = vld [vmem:[%s3 + $0xc] sm:$0xf]
    %v1970 = vld [vmem:[%s3 + $0x10] sm:$0xf]
    %v1971 = vld [vmem:[%s3 + $0x14] sm:$0xf]
    %v1972 = vld [vmem:[%s3 + $0x18] sm:$0xf]
    %v1973 = vld [vmem:[%s3 + $0x1c] sm:$0xf]
    %v1974 = vld [vmem:[%s3 + $0x20] sm:$0xf]
    %v1975 = vld [vmem:[%s3 + $0x24] sm:$0xf]
    %v1976 = vld [vmem:[%s3 + $0x28] sm:$0xf]
    %v1977 = vld [vmem:[%s3 + $0x2c] sm:$0xf]
    %v1978 = vld [vmem:[%s3 + $0x30] sm:$0xf]
    %v1979 = vld [vmem:[%s3 + $0x34] sm:$0xf]
    %v1980 = vld [vmem:[%s3 + $0x38] sm:$0xf]
    %v1981 = vld [vmem:[%s3 + $0x3c] sm:$0xf]
    %v1982 = vld [vmem:[%s4] sm:$0x1]
    %v1984 = vperm.slane %v1982, 0
    %v2002 = vunpack.c.l.b16 %v1966
    %v2003 = vunpack.c.l.b16 %v1967
    %v2004 = vunpack.c.l.b16 %v1968
    %v2005 = vunpack.c.l.b16 %v1969
    %v2006 = vunpack.c.l.b16 %v1970
    %v2007 = vunpack.c.l.b16 %v1971
    %v2008 = vunpack.c.l.b16 %v1972
    %v2009 = vunpack.c.l.b16 %v1973
    %v2010 = vunpack.c.l.b16 %v1974
    %v2011 = vunpack.c.l.b16 %v1975
    %v2012 = vunpack.c.l.b16 %v1976
    %v2013 = vunpack.c.l.b16 %v1977
    %v2014 = vunpack.c.l.b16 %v1978
    %v2015 = vunpack.c.l.b16 %v1979
    %v2016 = vunpack.c.l.b16 %v1980
    %v2017 = vunpack.c.l.b16 %v1981
    %v2018 = vpack.c.b16 %v2003, %v2002
    %v2019 = vpack.c.b16 %v2005, %v2004
    %v2020 = vpack.c.b16 %v2007, %v2006
    %v2021 = vpack.c.b16 %v2009, %v2008
    %v2022 = vpack.c.b16 %v2011, %v2010
    %v2023 = vpack.c.b16 %v2013, %v2012
    %v2024 = vpack.c.b16 %v2015, %v2014
    %v2025 = vpack.c.b16 %v2017, %v2016
    %2034 = vmatpush.bf16.msra.mxu0 %v2025
    %2035 = vmatpush.bf16.msra.mxu0 %v2024
    %2036 = vmatpush.bf16.msra.mxu0 %v2023
    %2037 = vmatpush.bf16.msra.mxu0 %v2022
    %2038 = vmatpush.bf16.msra.mxu0 %v2021
    %2039 = vmatpush.bf16.msra.mxu0 %v2020
    %2040 = vmatpush.bf16.msra.mxu0 %v2019
    %2041 = vmatpush.bf16.msra.mxu0 %v2018
    %2042 = vmatmul.bf16.gmra.mxu0 %v1965
    %v2043 = vpop.f32.mrf.mxu0
    %v2044 = vadd.f32 %v1984, %v2043
    %v2045 = vpop.f32.mrf.mxu0
    %2046 = vdwg.mxu0
    %v2047 = vmul.f32 %v2044, 0.5
    %v2048 = vmul.f32 %v2044, 0.044715
    %v2049 = vmul.f32 %v2048, %v2044
    %v2050 = vmul.f32 %v2049, %v2044
    %v2051 = vadd.f32 %v2044, %v2050
    %v2052 = vmul.f32 %v2051, 0.7978846
    %v2053 = vtanh.pop %v2052
    %v2054 = vadd.f32 %v2053, 1.0
    %v2055 = vmul.f32 %v2047, %v2054
    %v2056 = vld [vmem:[%s5] sm:$0x1]
    %v2057 = vld [vmem:[%s6] sm:$0x1]
    %2058 = vadd.xlane.f32.xlu0 %v2055
    %v2059 = vpop.xlane.xlu0 %2058
    %v2060 = vmul.f32 %v2059, %v217
    %v2061 = vsub.f32 %v2055, %v2060
    %v2062 = vmul.f32 %v2061, %v2061
    %2063 = vadd.xlane.f32.xlu0 %v2062
    %v2064 = vpop.xlane.xlu0 %2063
    %v2065 = vmul.f32 %v2064, %v217
    %v2066 = vadd.f32 %v2065, 1e-05
    %v2067 = vrsqrt.pop %v2066
    %v2068 = vmul.f32 %v2067, %v2066
    %v2069 = vmul.f32 %v2068, %v2067
    %v2070 = vmul.f32 0.5, %v2069
    %v2071 = vsub.f32 1.5, %v2070
    %v2072 = vmul.f32 %v2067, %v2071
    %vm2073 = vweird.f32 %v2066
    %vm2074 = vweird.f32 %v2067
    %vm2075 = vmor %vm2073, %vm2074
    %v2076 = vsel %vm2075, %v2067, %v2072
    %v2077 = vmul.f32 %v2061, %v2076
    %v2079 = vperm.slane %v2056, 0
    %v2081 = vmul.f32 %v2077, %v2079
    %v2083 = vperm.slane %v2057, 0
    %v2085 = vadd.f32 %v2081, %v2083
    %v2086 = vpack.c.bf16 %v2085, %v2085
    %v2087 = vld [vmem:[%s7] sm:$0xf]
    %v2088 = vld [vmem:[%s7 + $0x4] sm:$0xf]
    %v2089 = vld [vmem:[%s7 + $0x8] sm:$0xf]
    %v2090 = vld [vmem:[%s7 + $0xc] sm:$0xf]
    %v2091 = vld [vmem:[%s7 + $0x10] sm:$0xf]
    %v2092 = vld [vmem:[%s7 + $0x14] sm:$0xf]
    %v2093 = vld [vmem:[%s7 + $0x18] sm:$0xf]
    %v2094 = vld [vmem:[%s7 + $0x1c] sm:$0xf]
    %v2095 = vld [vmem:[%s7 + $0x20] sm:$0xf]
    %v2096 = vld [vmem:[%s7 + $0x24] sm:$0xf]
    %v2097 = vld [vmem:[%s7 + $0x28] sm:$0xf]
    %v2098 = vld [vmem:[%s7 + $0x2c] sm:$0xf]
    %v2099 = vld [vmem:[%s7 + $0x30] sm:$0xf]
    %v2100 = vld [vmem:[%s7 + $0x34] sm:$0xf]
    %v2101 = vld [vmem:[%s7 + $0x38] sm:$0xf]
    %v2102 = vld [vmem:[%s7 + $0x3c] sm:$0xf]
    %v2103 = vld [vmem:[%s8] sm:$0x1]
    %v2105 = vperm.slane %v2103, 0
    %v2123 = vunpack.c.l.b16 %v2087
    %v2124 = vunpack.c.l.b16 %v2088
    %v2125 = vunpack.c.l.b16 %v2089
    %v2126 = vunpack.c.l.b16 %v2090
    %v2127 = vunpack.c.l.b16 %v2091
    %v2128 = vunpack.c.l.b16 %v2092
    %v2129 = vunpack.c.l.b16 %v2093
    %v2130 = vunpack.c.l.b16 %v2094
    %v2131 = vunpack.c.l.b16 %v2095
    %v2132 = vunpack.c.l.b16 %v2096
    %v2133 = vunpack.c.l.b16 %v2097
    %v2134 = vunpack.c.l.b16 %v2098
    %v2135 = vunpack.c.l.b16 %v2099
    %v2136 = vunpack.c.l.b16 %v2100
    %v2137 = vunpack.c.l.b16 %v2101
    %v2138 = vunpack.c.l.b16 %v2102
    %v2139 = vpack.c.b16 %v2124, %v2123
    %v2140 = vpack.c.b16 %v2126, %v2125
    %v2141 = vpack.c.b16 %v2128, %v2127
    %v2142 = vpack.c.b16 %v2130, %v2129
    %v2143 = vpack.c.b16 %v2132, %v2131
    %v2144 = vpack.c.b16 %v2134, %v2133
    %v2145 = vpack.c.b16 %v2136, %v2135
    %v2146 = vpack.c.b16 %v2138, %v2137
    %2155 = vmatpush.bf16.msra.mxu0 %v2146
    %2156 = vmatpush.bf16.msra.mxu0 %v2145
    %2157 = vmatpush.bf16.msra.mxu0 %v2144
    %2158 = vmatpush.bf16.msra.mxu0 %v2143
    %2159 = vmatpush.bf16.msra.mxu0 %v2142
    %2160 = vmatpush.bf16.msra.mxu0 %v2141
    %2161 = vmatpush.bf16.msra.mxu0 %v2140
    %2162 = vmatpush.bf16.msra.mxu0 %v2139
    %2163 = vmatmul.bf16.gmra.mxu0 %v2086
    %v2164 = vpop.f32.mrf.mxu0
    %v2165 = vadd.f32 %v2105, %v2164
    %v2166 = vpop.f32.mrf.mxu0
    %2167 = vdwg.mxu0
    %v2169 = vrot.slane %v2165, 1
    %v2170 = vrot.slane %v2165, 2
    %v2171 = vrot.slane %v2165, 3
    %v2172 = vrot.slane %v2165, 4
    %v2173 = vrot.slane %v2165, 5
    %v2174 = vrot.slane %v2165, 6
    %v2175 = vrot.slane %v2165, 7
    %2183 = vst [vmem:[#allocation2 + $0x6] sm:$0x1] %v2165
    %2184 = vst [vmem:[#allocation2 + $0xe] sm:$0x1] %v2169
    %2185 = vst [vmem:[#allocation2 + $0x16] sm:$0x1] %v2170
    %2186 = vst [vmem:[#allocation2 + $0x1e] sm:$0x1] %v2171
    %2187 = vst [vmem:[#allocation2 + $0x26] sm:$0x1] %v2172
    %2188 = vst [vmem:[#allocation2 + $0x2e] sm:$0x1] %v2173
    %2189 = vst [vmem:[#allocation2 + $0x36] sm:$0x1] %v2174
    %2190 = vst [vmem:[#allocation2 + $0x3e] sm:$0x1] %v2175
    %v2191 = vld [vmem:[%s1 + $0x1c] sm:$0xf]
    %v2192 = vld [vmem:[%s1 + $0x3c] sm:$0xf]
    %v2193 = vld [vmem:[%s1 + $0x5c] sm:$0xf]
    %v2194 = vld [vmem:[%s1 + $0x7c] sm:$0xf]
    %v2195 = vld [vmem:[%s1 + $0x9c] sm:$0xf]
    %v2196 = vld [vmem:[%s1 + $0xbc] sm:$0xf]
    %v2197 = vld [vmem:[%s1 + $0xdc] sm:$0xf]
    %v2198 = vld [vmem:[%s1 + $0xfc] sm:$0xf]
    %v2199 = vld [vmem:[%s1 + $0x11c] sm:$0xf]
    %v2200 = vld [vmem:[%s1 + $0x13c] sm:$0xf]
    %v2201 = vld [vmem:[%s1 + $0x15c] sm:$0xf]
    %v2202 = vld [vmem:[%s1 + $0x17c] sm:$0xf]
    %v2203 = vld [vmem:[%s1 + $0x19c] sm:$0xf]
    %v2204 = vld [vmem:[%s1 + $0x1bc] sm:$0xf]
    %v2205 = vld [vmem:[%s1 + $0x1dc] sm:$0xf]
    %v2206 = vld [vmem:[%s1 + $0x1fc] sm:$0xf]
    %v2207 = vld [vmem:[%s2 + $0x7] sm:$0x1]
    %v2209 = vperm.slane %v2207, 0
    %v2227 = vunpack.c.l.b16 %v2191
    %v2228 = vunpack.c.l.b16 %v2192
    %v2229 = vunpack.c.l.b16 %v2193
    %v2230 = vunpack.c.l.b16 %v2194
    %v2231 = vunpack.c.l.b16 %v2195
    %v2232 = vunpack.c.l.b16 %v2196
    %v2233 = vunpack.c.l.b16 %v2197
    %v2234 = vunpack.c.l.b16 %v2198
    %v2235 = vunpack.c.l.b16 %v2199
    %v2236 = vunpack.c.l.b16 %v2200
    %v2237 = vunpack.c.l.b16 %v2201
    %v2238 = vunpack.c.l.b16 %v2202
    %v2239 = vunpack.c.l.b16 %v2203
    %v2240 = vunpack.c.l.b16 %v2204
    %v2241 = vunpack.c.l.b16 %v2205
    %v2242 = vunpack.c.l.b16 %v2206
    %v2243 = vpack.c.b16 %v2228, %v2227
    %v2244 = vpack.c.b16 %v2230, %v2229
    %v2245 = vpack.c.b16 %v2232, %v2231
    %v2246 = vpack.c.b16 %v2234, %v2233
    %v2247 = vpack.c.b16 %v2236, %v2235
    %v2248 = vpack.c.b16 %v2238, %v2237
    %v2249 = vpack.c.b16 %v2240, %v2239
    %v2250 = vpack.c.b16 %v2242, %v2241
    %2259 = vmatpush.bf16.msra.mxu0 %v2250
    %2260 = vmatpush.bf16.msra.mxu0 %v2249
    %2261 = vmatpush.bf16.msra.mxu0 %v2248
    %2262 = vmatpush.bf16.msra.mxu0 %v2247
    %2263 = vmatpush.bf16.msra.mxu0 %v2246
    %2264 = vmatpush.bf16.msra.mxu0 %v2245
    %2265 = vmatpush.bf16.msra.mxu0 %v2244
    %2266 = vmatpush.bf16.msra.mxu0 %v2243
    %2267 = vmatmul.bf16.gmra.mxu0 %v34
    %v2268 = vpop.f32.mrf.mxu0
    %v2269 = vadd.f32 %v2209, %v2268
    %v2270 = vpop.f32.mrf.mxu0
    %2271 = vdwg.mxu0
    %v2272 = vpack.c.bf16 %v2269, %v2269
    %v2273 = vld [vmem:[%s3] sm:$0xf]
    %v2274 = vld [vmem:[%s3 + $0x4] sm:$0xf]
    %v2275 = vld [vmem:[%s3 + $0x8] sm:$0xf]
    %v2276 = vld [vmem:[%s3 + $0xc] sm:$0xf]
    %v2277 = vld [vmem:[%s3 + $0x10] sm:$0xf]
    %v2278 = vld [vmem:[%s3 + $0x14] sm:$0xf]
    %v2279 = vld [vmem:[%s3 + $0x18] sm:$0xf]
    %v2280 = vld [vmem:[%s3 + $0x1c] sm:$0xf]
    %v2281 = vld [vmem:[%s3 + $0x20] sm:$0xf]
    %v2282 = vld [vmem:[%s3 + $0x24] sm:$0xf]
    %v2283 = vld [vmem:[%s3 + $0x28] sm:$0xf]
    %v2284 = vld [vmem:[%s3 + $0x2c] sm:$0xf]
    %v2285 = vld [vmem:[%s3 + $0x30] sm:$0xf]
    %v2286 = vld [vmem:[%s3 + $0x34] sm:$0xf]
    %v2287 = vld [vmem:[%s3 + $0x38] sm:$0xf]
    %v2288 = vld [vmem:[%s3 + $0x3c] sm:$0xf]
    %v2289 = vld [vmem:[%s4] sm:$0x1]
    %v2291 = vperm.slane %v2289, 0
    %v2309 = vunpack.c.l.b16 %v2273
    %v2310 = vunpack.c.l.b16 %v2274
    %v2311 = vunpack.c.l.b16 %v2275
    %v2312 = vunpack.c.l.b16 %v2276
    %v2313 = vunpack.c.l.b16 %v2277
    %v2314 = vunpack.c.l.b16 %v2278
    %v2315 = vunpack.c.l.b16 %v2279
    %v2316 = vunpack.c.l.b16 %v2280
    %v2317 = vunpack.c.l.b16 %v2281
    %v2318 = vunpack.c.l.b16 %v2282
    %v2319 = vunpack.c.l.b16 %v2283
    %v2320 = vunpack.c.l.b16 %v2284
    %v2321 = vunpack.c.l.b16 %v2285
    %v2322 = vunpack.c.l.b16 %v2286
    %v2323 = vunpack.c.l.b16 %v2287
    %v2324 = vunpack.c.l.b16 %v2288
    %v2325 = vpack.c.b16 %v2310, %v2309
    %v2326 = vpack.c.b16 %v2312, %v2311
    %v2327 = vpack.c.b16 %v2314, %v2313
    %v2328 = vpack.c.b16 %v2316, %v2315
    %v2329 = vpack.c.b16 %v2318, %v2317
    %v2330 = vpack.c.b16 %v2320, %v2319
    %v2331 = vpack.c.b16 %v2322, %v2321
    %v2332 = vpack.c.b16 %v2324, %v2323
    %2341 = vmatpush.bf16.msra.mxu0 %v2332
    %2342 = vmatpush.bf16.msra.mxu0 %v2331
    %2343 = vmatpush.bf16.msra.mxu0 %v2330
    %2344 = vmatpush.bf16.msra.mxu0 %v2329
    %2345 = vmatpush.bf16.msra.mxu0 %v2328
    %2346 = vmatpush.bf16.msra.mxu0 %v2327
    %2347 = vmatpush.bf16.msra.mxu0 %v2326
    %2348 = vmatpush.bf16.msra.mxu0 %v2325
    %2349 = vmatmul.bf16.gmra.mxu0 %v2272
    %v2350 = vpop.f32.mrf.mxu0
    %v2351 = vadd.f32 %v2291, %v2350
    %v2352 = vpop.f32.mrf.mxu0
    %2353 = vdwg.mxu0
    %v2354 = vmul.f32 %v2351, 0.5
    %v2355 = vmul.f32 %v2351, 0.044715
    %v2356 = vmul.f32 %v2355, %v2351
    %v2357 = vmul.f32 %v2356, %v2351
    %v2358 = vadd.f32 %v2351, %v2357
    %v2359 = vmul.f32 %v2358, 0.7978846
    %v2360 = vtanh.pop %v2359
    %v2361 = vadd.f32 %v2360, 1.0
    %v2362 = vmul.f32 %v2354, %v2361
    %v2363 = vld [vmem:[%s5] sm:$0x1]
    %v2364 = vld [vmem:[%s6] sm:$0x1]
    %2365 = vadd.xlane.f32.xlu0 %v2362
    %v2366 = vpop.xlane.xlu0 %2365
    %v2367 = vmul.f32 %v2366, %v217
    %v2368 = vsub.f32 %v2362, %v2367
    %v2369 = vmul.f32 %v2368, %v2368
    %2370 = vadd.xlane.f32.xlu0 %v2369
    %v2371 = vpop.xlane.xlu0 %2370
    %v2372 = vmul.f32 %v2371, %v217
    %v2373 = vadd.f32 %v2372, 1e-05
    %v2374 = vrsqrt.pop %v2373
    %v2375 = vmul.f32 %v2374, %v2373
    %v2376 = vmul.f32 %v2375, %v2374
    %v2377 = vmul.f32 0.5, %v2376
    %v2378 = vsub.f32 1.5, %v2377
    %v2379 = vmul.f32 %v2374, %v2378
    %vm2380 = vweird.f32 %v2373
    %vm2381 = vweird.f32 %v2374
    %vm2382 = vmor %vm2380, %vm2381
    %v2383 = vsel %vm2382, %v2374, %v2379
    %v2384 = vmul.f32 %v2368, %v2383
    %v2386 = vperm.slane %v2363, 0
    %v2388 = vmul.f32 %v2384, %v2386
    %v2390 = vperm.slane %v2364, 0
    %v2392 = vadd.f32 %v2388, %v2390
    %v2393 = vpack.c.bf16 %v2392, %v2392
    %v2394 = vld [vmem:[%s7] sm:$0xf]
    %v2395 = vld [vmem:[%s7 + $0x4] sm:$0xf]
    %v2396 = vld [vmem:[%s7 + $0x8] sm:$0xf]
    %v2397 = vld [vmem:[%s7 + $0xc] sm:$0xf]
    %v2398 = vld [vmem:[%s7 + $0x10] sm:$0xf]
    %v2399 = vld [vmem:[%s7 + $0x14] sm:$0xf]
    %v2400 = vld [vmem:[%s7 + $0x18] sm:$0xf]
    %v2401 = vld [vmem:[%s7 + $0x1c] sm:$0xf]
    %v2402 = vld [vmem:[%s7 + $0x20] sm:$0xf]
    %v2403 = vld [vmem:[%s7 + $0x24] sm:$0xf]
    %v2404 = vld [vmem:[%s7 + $0x28] sm:$0xf]
    %v2405 = vld [vmem:[%s7 + $0x2c] sm:$0xf]
    %v2406 = vld [vmem:[%s7 + $0x30] sm:$0xf]
    %v2407 = vld [vmem:[%s7 + $0x34] sm:$0xf]
    %v2408 = vld [vmem:[%s7 + $0x38] sm:$0xf]
    %v2409 = vld [vmem:[%s7 + $0x3c] sm:$0xf]
    %v2410 = vld [vmem:[%s8] sm:$0x1]
    %v2412 = vperm.slane %v2410, 0
    %v2430 = vunpack.c.l.b16 %v2394
    %v2431 = vunpack.c.l.b16 %v2395
    %v2432 = vunpack.c.l.b16 %v2396
    %v2433 = vunpack.c.l.b16 %v2397
    %v2434 = vunpack.c.l.b16 %v2398
    %v2435 = vunpack.c.l.b16 %v2399
    %v2436 = vunpack.c.l.b16 %v2400
    %v2437 = vunpack.c.l.b16 %v2401
    %v2438 = vunpack.c.l.b16 %v2402
    %v2439 = vunpack.c.l.b16 %v2403
    %v2440 = vunpack.c.l.b16 %v2404
    %v2441 = vunpack.c.l.b16 %v2405
    %v2442 = vunpack.c.l.b16 %v2406
    %v2443 = vunpack.c.l.b16 %v2407
    %v2444 = vunpack.c.l.b16 %v2408
    %v2445 = vunpack.c.l.b16 %v2409
    %v2446 = vpack.c.b16 %v2431, %v2430
    %v2447 = vpack.c.b16 %v2433, %v2432
    %v2448 = vpack.c.b16 %v2435, %v2434
    %v2449 = vpack.c.b16 %v2437, %v2436
    %v2450 = vpack.c.b16 %v2439, %v2438
    %v2451 = vpack.c.b16 %v2441, %v2440
    %v2452 = vpack.c.b16 %v2443, %v2442
    %v2453 = vpack.c.b16 %v2445, %v2444
    %2462 = vmatpush.bf16.msra.mxu0 %v2453
    %2463 = vmatpush.bf16.msra.mxu0 %v2452
    %2464 = vmatpush.bf16.msra.mxu0 %v2451
    %2465 = vmatpush.bf16.msra.mxu0 %v2450
    %2466 = vmatpush.bf16.msra.mxu0 %v2449
    %2467 = vmatpush.bf16.msra.mxu0 %v2448
    %2468 = vmatpush.bf16.msra.mxu0 %v2447
    %2469 = vmatpush.bf16.msra.mxu0 %v2446
    %2470 = vmatmul.bf16.gmra.mxu0 %v2393
    %v2471 = vpop.f32.mrf.mxu0
    %v2472 = vadd.f32 %v2412, %v2471
    %v2473 = vpop.f32.mrf.mxu0
    %2474 = vdwg.mxu0
    %v2476 = vrot.slane %v2472, 1
    %v2477 = vrot.slane %v2472, 2
    %v2478 = vrot.slane %v2472, 3
    %v2479 = vrot.slane %v2472, 4
    %v2480 = vrot.slane %v2472, 5
    %v2481 = vrot.slane %v2472, 6
    %v2482 = vrot.slane %v2472, 7
    %2490 = vst [vmem:[#allocation2 + $0x7] sm:$0x1] %v2472
    %2491 = vst [vmem:[#allocation2 + $0xf] sm:$0x1] %v2476
    %2492 = vst [vmem:[#allocation2 + $0x17] sm:$0x1] %v2477
    %2493 = vst [vmem:[#allocation2 + $0x1f] sm:$0x1] %v2478
    %2494 = vst [vmem:[#allocation2 + $0x27] sm:$0x1] %v2479
    %2495 = vst [vmem:[#allocation2 + $0x2f] sm:$0x1] %v2480
    %2496 = vst [vmem:[#allocation2 + $0x37] sm:$0x1] %v2481
    %2497 = vst [vmem:[#allocation2 + $0x3f] sm:$0x1] %v2482
    // Predicated region
    $region38: #{musicbert_forward.5} parent=1 // pred_check
      _
    $region39: #{musicbert_forward.5} parent=1 // pred_check_branch
      %2499 = sbr.rel (0) target = $region41
    $region40: #{musicbert_forward.5} parent=1 // pred_region
      %2501 = vsyncadd [#allocation3], 0
      %s2502 = sshll.u32 [#allocation2], 4
      %s2503 = int_to_ptr.vmem [resolvable:$true] %s2502
      %s2504 = sshll.u32 %s9, 4
      %s2505 = int_to_ptr.hbm [resolvable:$true] %s2504
      %2510 = dma.vmem_to_hbm [thread:$0]  %s2503, 1024, %s2505, [#allocation3], 128, 128, 8
    $region41: #{musicbert_forward.5} parent=1 // pred_fallthru
      _
    // Predicated region
    $region42: #{musicbert_forward.5} parent=1 // pred_check
      _
    $region43: #{musicbert_forward.5} parent=1 // pred_check_branch
      %2512 = sbr.rel (0) target = $region45
    $region44: #{musicbert_forward.5} parent=1 // pred_region
      %2514 = dma.done [#allocation3], 1024
    $region45: #{musicbert_forward.5} parent=1 // pred_fallthru
      _
    %2515 = vsyncpa [#allocation3], 1

</llo_original>
